<compile_context>
chip_gen: v7x
topology: tpu7x:2x2x1
jax: 0.10.0
libtpu: 0.0.40
codegen_flags: <defaults>
</compile_context>

<pallas_src>
import math

import jax
import jax.numpy as jnp
from jax.experimental import pallas as pl
from jax.experimental.pallas import tpu as pltpu


def _lissajous_kernel(x_ref, f_ref, o_ref):
    # x_ref: (tm, G+1)   folded samples, last column is 1.0 (carries the phase)
    # f_ref: (G+1, n)    [kron(I_G, frequency); tile(phase, G)],  n = G*size
    # o_ref: (tm, n)     lane-dense output tile (row-major == (tm*G, size))
    pos = jnp.dot(
        x_ref[...],
        f_ref[...],
        precision=jax.lax.Precision.HIGHEST,   # exact f32 broadcast on the MXU
        preferred_element_type=jnp.float32,
    )
    o_ref[...] = jnp.cos(pos).astype(o_ref.dtype)


def _round_up(a: int, b: int) -> int:
    return ((a + b - 1) // b) * b


def _choose_fold(size: int) -> int:
    """Fold factor G (samples per output row): smallest G >= 32 with G*size a
    multiple of 128 (dense stores + dense-ish x loads), lane width <= 4096.
    Falls back to G=1 (masked stores) if no such G exists."""
    best = 1
    for g in range(1, 129):
        n = g * size
        if n % 128 == 0 and n <= 4096:
            best = g
            if g >= 32:
                break
    return best


def _choose_row_tile(rows8: int, tm_target: int) -> int:
    """Row tile: multiple of 8, <= tm_target.  Prefers >= 8 grid steps (several
    blocks per v7x TensorCore) as long as tiles stay >= 128 rows, and always
    >= 2 steps whenever there is enough work for two tiles."""
    tm_target = max(8, (tm_target // 8) * 8)
    tm = min(tm_target, rows8)                 # rows8 is a multiple of 8
    steps = -(-rows8 // tm)
    if steps < 8 and rows8 >= 8 * 128:
        tm = min(tm, max(128, _round_up(-(-rows8 // 8), 8)))
    elif steps < 2 and rows8 >= 16:
        tm = min(tm, _round_up(-(-rows8 // 2), 8))
    return tm


def lissajous_forward(x, frequency, phase, *, tm_target=512, out_dtype=jnp.float32):
    """cos(x[..., None] * frequency + phase) -> shape x.shape + (size,).

    out_dtype=jnp.bfloat16 halves output HBM traffic (recommended on v5e/v6e if
    downstream tolerates ~4e-3 absolute error).
    """
    frequency = jnp.asarray(frequency, jnp.float32).reshape(1, -1)
    phase = jnp.asarray(phase, jnp.float32).reshape(1, -1)
    size = frequency.shape[-1]

    orig_shape = x.shape
    m = math.prod(orig_shape) if orig_shape else 1

    g = _choose_fold(size)
    n = g * size

    rows = -(-m // g)                          # cdiv(m, g)
    rows8 = _round_up(rows, 8)
    tm = _choose_row_tile(rows8, tm_target)
    rows_pad = _round_up(rows8, tm)            # pad instead of forcing tm | rows8
    m_pad = rows_pad * g

    x_flat = jnp.reshape(x, (-1,)).astype(jnp.float32)
    if m_pad != m:                             # ragged / padded row counts
        x_flat = jnp.pad(x_flat, (0, m_pad - m))
    x2 = jnp.reshape(x_flat, (rows_pad, g))
    # Ones column -> phase is accumulated inside the same MXU contraction.
    x_aug = jnp.pad(x2, ((0, 0), (0, 1)), constant_values=1.0)      # (rows_pad, g+1)

    # Tiny resident parameter matrix: block-diagonal frequency + phase row.
    f_mat = jnp.kron(jnp.eye(g, dtype=jnp.float32), frequency)      # (g, n)
    f_aug = jnp.concatenate([f_mat, jnp.tile(phase, (1, g))], axis=0)  # (g+1, n)

    grid = (rows_pad // tm,)

    # VMEM budget from the actual per-step footprint (+50% headroom for
    # compiler scratch / HIGHEST bf16 splits), clamped to v7x physical VMEM.
    out_bytes = jnp.dtype(out_dtype).itemsize
    vmem_bytes = (2 * tm * n * out_bytes       # output double-buffer
                  + tm * n * 4                 # f32 dot/cos intermediate
                  + 2 * tm * (g + 1) * 4       # x tiles (double-buffered)
                  + 2 * (g + 1) * n * 4)       # resident parameter matrix
    vmem_limit = int(min(64 * 1024 * 1024, max(16 * 1024 * 1024, int(vmem_bytes * 1.5))))

    out = pl.pallas_call(
        _lissajous_kernel,
        out_shape=jax.ShapeDtypeStruct((rows_pad, n), out_dtype),
        grid_spec=pltpu.PrefetchScalarGridSpec(
            num_scalar_prefetch=0,
            grid=grid,
            in_specs=[
                pl.BlockSpec((tm, g + 1), lambda i: (i, 0)),   # folded x (+ ones)
                pl.BlockSpec((g + 1, n), lambda i: (0, 0)),    # freq/phase (resident)
            ],
            out_specs=pl.BlockSpec((tm, n), lambda i: (i, 0)),
        ),
        compiler_params=pltpu.CompilerParams(
            dimension_semantics=("parallel",),                 # megacore sharding
            vmem_limit_bytes=vmem_limit,
        ),
    )(x_aug, f_aug)

    # (rows_pad, g*size) is bit-identical to row-major (m_pad, size).
    out_flat = jnp.reshape(out, (m_pad, size))
    if m_pad != m:                             # slice only when padding happened
        out_flat = out_flat[:m]
    return jnp.reshape(out_flat, orig_shape + (size,))


def lissajous_reference(x, frequency, phase):
    # Pure-JAX reference matching the PyTorch forward:
    #   xFat @ frequency + ones_like(xFat) @ phase == x[...,None]*freq + phase
    pos = x[..., None] * frequency[0] + phase[0]
    return jnp.cos(pos)


if __name__ == "__main__":
    key = jax.random.PRNGKey(0)
    k_x1, k_x2, k_x3, k_f, k_p = jax.random.split(key, 5)

    size = 32                                          # curve dimensionality
    frequency = jax.random.normal(k_f, (1, size), dtype=jnp.float32)
    phase = jax.random.normal(k_p, (1, size), dtype=jnp.float32)

    # Case 1: 4-D batch of sampling locations (multi-step grid, no tail pad).
    x1 = jax.random.normal(k_x1, (2, 4, 16, 16), dtype=jnp.float32)
    out1 = jax.block_until_ready(lissajous_forward(x1, frequency, phase))
    ref1 = lissajous_reference(x1, frequency, phase)
    assert out1.shape == x1.shape + (size,), out1.shape
    assert jnp.allclose(out1, ref1, atol=1e-4, rtol=1e-4), float(jnp.max(jnp.abs(out1 - ref1)))

    # Case 2: ragged element count (exercises pad + tail slice).
    x2 = jax.random.normal(k_x2, (3, 11), dtype=jnp.float32)
    out2 = jax.block_until_ready(lissajous_forward(x2, frequency, phase))
    ref2 = lissajous_reference(x2, frequency, phase)
    assert out2.shape == (3, 11, size), out2.shape
    assert jnp.allclose(out2, ref2, atol=1e-4, rtol=1e-4), float(jnp.max(jnp.abs(out2 - ref2)))

    # Case 3: bf16 output (halves HBM write traffic; the v5e-recommended path).
    x3 = jax.random.normal(k_x3, (8, 1024), dtype=jnp.float32)
    out3 = jax.block_until_ready(
        lissajous_forward(x3, frequency, phase, out_dtype=jnp.bfloat16))
    ref3 = lissajous_reference(x3, frequency, phase)
    assert out3.shape == (8, 1024, size), out3.shape
    assert jnp.allclose(out3.astype(jnp.float32), ref3, atol=1e-2, rtol=1e-2), \
        float(jnp.max(jnp.abs(out3.astype(jnp.float32) - ref3)))

    print("KERNEL_OK")
</pallas_src>

<mosaic_0001>
module attributes {stable_mosaic.version = 11 : i64} {
  func.func @_lissajous_kernel(%arg0: i32, %arg1: memref<32x33xf32, #tpu.memory_space<vmem>>, %arg2: memref<33x1024xf32, #tpu.memory_space<vmem>>, %arg3: memref<32x1024xf32, #tpu.memory_space<vmem>>) attributes {dimension_semantics = [#tpu.dimension_semantics<parallel>], iteration_bounds = array<i64: 2>, scalar_prefetch = 0 : i64, scratch_operands = 0 : i64, tpu.core_type = #tpu.core_type<tc>, window_params = [{transform_indices = @transform_0, window_bounds = array<i64: 32, 33>}, {pipeline_mode = #tpu.pipeline_mode<synchronous>, transform_indices = @transform_1, window_bounds = array<i64: 33, 1024>}, {transform_indices = @transform_2, window_bounds = array<i64: 32, 1024>}]} {
    %c0 = arith.constant 0 : index
    %c0_0 = arith.constant 0 : index
    %0 = vector.load %arg1[%c0, %c0_0] : memref<32x33xf32, #tpu.memory_space<vmem>>, vector<32x33xf32>
    %c0_1 = arith.constant 0 : index
    %c0_2 = arith.constant 0 : index
    %1 = vector.load %arg2[%c0_1, %c0_2] : memref<33x1024xf32, #tpu.memory_space<vmem>>, vector<33x1024xf32>
    %cst = arith.constant dense<0.000000e+00> : vector<32x1024xf32>
    %2 = tpu.matmul %0, %1, %cst {dimension_numbers = #tpu.dot_dimension_numbers<[1], [0], [0], [1], [0, 0, 1, 1], [], []>, precision = #tpu.contract_precision<fp32>} : vector<32x33xf32>, vector<33x1024xf32>, vector<32x1024xf32> -> vector<32x1024xf32>
    %3 = math.cos %2 : vector<32x1024xf32>
    %c0_3 = arith.constant 0 : index
    %c0_4 = arith.constant 0 : index
    %4 = vector.load %arg3[%c0_3, %c0_4] : memref<32x1024xf32, #tpu.memory_space<vmem>>, vector<32x1024xf32>
    tpu.vector_store %arg3[%c0_3, %c0_4], %3 {strides = array<i32>} : memref<32x1024xf32, #tpu.memory_space<vmem>>, vector<32x1024xf32>,
    return
  }
  func.func @transform_0(%arg0: i32) -> (i32, i32) {
    %c0_i32 = arith.constant 0 : i32
    %c0_i32_0 = arith.constant 0 : i32
    return %arg0, %c0_i32 : i32, i32
  }
  func.func @transform_1(%arg0: i32) -> (i32, i32) {
    %c0_i32 = arith.constant 0 : i32
    %c0_i32_0 = arith.constant 0 : i32
    %c0_i32_1 = arith.constant 0 : i32
    return %c0_i32, %c0_i32_0 : i32, i32
  }
  func.func @transform_2(%arg0: i32) -> (i32, i32) {
    %c0_i32 = arith.constant 0 : i32
    %c0_i32_0 = arith.constant 0 : i32
    return %arg0, %c0_i32 : i32, i32
  }
}

</mosaic_0001>

<llo_original>
// kernel: tpu_custom_call.1
$region0: #{tpu_custom_call.1}
  #allocation0 [shape = 'u32[]', space=smem, size = 0x4, offset = 0x4, fixed_abs, tag = 'smem constant byte address 0x4 - core index']
  #allocation1 [shape = 'u32[144,128]{1,0:T(1,128)}', space=vmem, size = 0x12000, scoped, tag = 'internal scratch']
  %s0 = inlined_call_operand.vmem [shape: f32[64,33], index: 0, kind: input, shape index: {}]
  %s1 = inlined_call_operand.hbm [shape: f32[33,1024], index: 1, kind: input, shape index: {}]
  %s2 = inlined_call_operand.hbm [shape: f32[64,1024], index: 2, kind: output, shape index: {}]
  %s3 = sld [smem:[#allocation0]]
  $region45: #{tpu_custom_call.1} parent=0
    _
  %s5 = ssub.s32 1, %s3
  %s6 = scalar_select 0, %s5, %s3
  $region1: #{tpu_custom_call.1} parent=0
    #allocation2 [shape = 'u8[163840]{0}', space=vmem, size = 0x28000, scoped, tag = 'input window, operand 1, single buffered']
    #allocation3 [shape = 's32[2]{0}', space=sflag, size = 0x8, scoped, tag = 'scoped memory for tpu_custom_call.1']
    #allocation4 [shape = 's32[2]{0}', space=sflag, size = 0x8, scoped, tag = 'scoped memory for tpu_custom_call.1']
    #allocation5 [shape = 'u8[262144]{0}', space=vmem, size = 0x40000, scoped, tag = 'output window, operand 0']
    %7 = vsyncpa [#allocation3], 0
    %8 = vsyncpa [#allocation4], 0
    %s9 = scalar_lea.sflag [#allocation4], 1
    %10 = vsyncpa %s9, 0
    loop: start=0, step=1, limit=4
    $region2: #{tpu_custom_call.1} parent=1 // loop_pre_header
      _
    $region3: #{tpu_custom_call.1} parent=1 // loop_header
      %s12 = sphi 0, %s16
      %p13 = scmp.ge.s32.totalorder %s12, 4
      %s22 = sphi 0, %s24
      %s25 = sphi 0, %s22
      %s26 = sphi 0, %s25
      %s42 = sphi 0, %s26
      %s46 = sphi 0, %s46
      %s48 = sphi 0, %s46
      %s49 = sphi 0, %s48
      %s63 = sphi 0, %s49
      %s69 = sphi 0, %s71
      %s72 = sphi 0, %s69
      %s73 = sphi 0, %s72
      %s89 = sphi 0, %s73
    $region4: #{tpu_custom_call.1} parent=1 // loop_header_branch
      %15 = sbr.rel (%p13) target = $region8
    $region5: #{tpu_custom_call.1} parent=1 // loop_body
      %s17 = ssub.s32 %s12, 1
      %s18 = ssub.s32 %s12, 2
      %s19 = sadd.s32 %s12, 1
      %s20 = ssub.s32 %s12, %s19
      %p21 = scmp.eq.s32.totalorder %s20, 0
      %s23 = sadd.s32 %s22, 1
      %s24 = scalar_select %p21, %s22, %s23
      %p27 = pneg %p21
      %p28 = scmp.eq.s32.totalorder %s12, 1
      %p29 = por %p27, %p28
      %p30 = scmp.ne.s32.totalorder %s22, %s25
      %p31 = scmp.eq.s32.totalorder %s12, 0
      %p32 = por %p30, %p31
      %p33 = scmp.ne.s32.totalorder %s22, %s25
      %p34 = scmp.eq.s32.totalorder %s17, 1
      %p35 = por %p33, %p34
      %p36 = scmp.ne.s32.totalorder %s25, %s26
      %p37 = scmp.eq.s32.totalorder %s17, 0
      %p38 = por %p36, %p37
      %p39 = scmp.ne.s32.totalorder %s25, %s26
      %p40 = scmp.eq.s32.totalorder %s18, 1
      %p41 = por %p39, %p40
      %p43 = scmp.ne.s32.totalorder %s26, %s42
      %p44 = scmp.eq.s32.totalorder %s18, 0
      %p45 = por %p43, %p44
      %s47 = sadd.s32 %s46, 1
      %p50 = scmp.eq.s32.totalorder %s12, 1
      %p51 = scmp.ne.s32.totalorder %s46, %s48
      %p52 = scmp.eq.s32.totalorder %s12, 0
      %p53 = por %p51, %p52
      %p54 = scmp.ne.s32.totalorder %s46, %s48
      %p55 = scmp.eq.s32.totalorder %s17, 1
      %p56 = por %p54, %p55
      %p57 = scmp.ne.s32.totalorder %s48, %s49
      %p58 = scmp.eq.s32.totalorder %s17, 0
      %p59 = por %p57, %p58
      %p60 = scmp.ne.s32.totalorder %s48, %s49
      %p61 = scmp.eq.s32.totalorder %s18, 1
      %p62 = por %p60, %p61
      %p64 = scmp.ne.s32.totalorder %s49, %s63
      %p65 = scmp.eq.s32.totalorder %s18, 0
      %p66 = por %p64, %p65
      %s67 = ssub.s32 %s12, %s19
      %p68 = scmp.eq.s32.totalorder %s67, 0
      %s70 = sadd.s32 %s69, 1
      %s71 = scalar_select %p68, %s69, %s70
      %p74 = pneg %p68
      %p75 = scmp.eq.s32.totalorder %s12, 1
      %p76 = por %p74, %p75
      %p77 = scmp.ne.s32.totalorder %s69, %s72
      %p78 = scmp.eq.s32.totalorder %s12, 0
      %p79 = por %p77, %p78
      %p80 = scmp.ne.s32.totalorder %s69, %s72
      %p81 = scmp.eq.s32.totalorder %s17, 1
      %p82 = por %p80, %p81
      %p83 = scmp.ne.s32.totalorder %s72, %s73
      %p84 = scmp.eq.s32.totalorder %s17, 0
      %p85 = por %p83, %p84
      %p86 = scmp.ne.s32.totalorder %s72, %s73
      %p87 = scmp.eq.s32.totalorder %s18, 1
      %p88 = por %p86, %p87
      %p90 = scmp.ne.s32.totalorder %s73, %s89
      %p91 = scmp.eq.s32.totalorder %s18, 0
      %p92 = por %p90, %p91
      %p93 = scmp.le.s32.totalorder 1, %s12
      %p94 = scmp.lt.s32.totalorder %s12, 3
      %p95 = pnand %p93, %p94
      %p96 = pneg %p95
      // Predicated region
      $region9: #{tpu_custom_call.1} parent=5 // pred_check
        _
      $region10: #{tpu_custom_call.1} parent=5 // pred_check_branch
        %98 = sbr.rel (%p95) target = $region12
      $region11: #{tpu_custom_call.1} parent=5 // pred_region
        %s99 = ssub.s32 %s12, 1
        // Predicated region
        $region13: #{tpu_custom_call.1} parent=11 // pred_check
          %p100 = pneg %p59
        $region14: #{tpu_custom_call.1} parent=11 // pred_check_branch
          %102 = sbr.rel (%p100) target = $region16
        $region15: #{tpu_custom_call.1} parent=11 // pred_region
          %s104 = ssub.s32 5120, 5120
          %105 = vsyncadd [#allocation3], %s104
          %s106 = sshll.u32 [#allocation2], 4
          %s107 = int_to_ptr.vmem [resolvable:$true] %s106
          %112 = dma.hbm_to_vmem [thread:$0]  %s1, 5120, %s107, [#allocation3], 1024, 1024, 64
        $region16: #{tpu_custom_call.1} parent=11 // pred_fallthru
          _
      $region12: #{tpu_custom_call.1} parent=5 // pred_fallthru
        _
      %p113 = scmp.lt.s32.totalorder %s12, 2
      // Predicated region
      $region17: #{tpu_custom_call.1} parent=5 // pred_check
        %p114 = pneg %p113
      $region18: #{tpu_custom_call.1} parent=5 // pred_check_branch
        %116 = sbr.rel (%p114) target = $region20
      $region19: #{tpu_custom_call.1} parent=5 // pred_region
        // Predicated region
        $region21: #{tpu_custom_call.1} parent=19 // pred_check
          %p117 = pneg %p32
        $region22: #{tpu_custom_call.1} parent=19 // pred_check_branch
          %119 = sbr.rel (%p117) target = $region24
        $region23: #{tpu_custom_call.1} parent=19 // pred_region
          %s120 = smul.u32 4, %s12
          %p121 = scmp.lt.s32.totalorder %s120, 7
          %s122 = scalar_select %p121, %s120, 7
          %s123 = smul.addr %s122, 8
          %s124 = scalar_lea.vmem %s0, %s123
          %s125 = smul.u32 4, %s12
        $region24: #{tpu_custom_call.1} parent=19 // pred_fallthru
          _
      $region20: #{tpu_custom_call.1} parent=5 // pred_fallthru
        _
      %p126 = scmp.le.s32.totalorder 1, %s12
      %p127 = scmp.lt.s32.totalorder %s12, 3
      %p128 = pnand %p126, %p127
      %p129 = pneg %p128
      // Predicated region
      $region25: #{tpu_custom_call.1} parent=5 // pred_check
        _
      $region26: #{tpu_custom_call.1} parent=5 // pred_check_branch
        %131 = sbr.rel (%p128) target = $region28
      $region27: #{tpu_custom_call.1} parent=5 // pred_region
        %s132 = ssub.s32 %s12, 1
        // Predicated region
        $region29: #{tpu_custom_call.1} parent=27 // pred_check
          %p133 = pneg %p59
        $region30: #{tpu_custom_call.1} parent=27 // pred_check_branch
          %135 = sbr.rel (%p133) target = $region32
        $region31: #{tpu_custom_call.1} parent=27 // pred_region
          %136 = dma.done [#allocation3], 5120
        $region32: #{tpu_custom_call.1} parent=27 // pred_fallthru
          _
        %s137 = smul.u32 4, %s17
        %p138 = scmp.lt.s32.totalorder %s137, 7
        %s139 = scalar_select %p138, %s137, 7
        %s140 = smul.addr %s139, 8
        %s141 = scalar_lea.vmem %s0, %s140
        %p142 = pneg %p38
        %p143 = pneg %p35
        %p144 = pneg %p59
        %p145 = pneg %p56
        %p146 = pneg %p85
        %p147 = pneg %p82
        %s148 = sand.u32 %s72, 1
        %s149 = scalar_lea.sflag [#allocation4], %s148
        %s150 = sand.u32 %s72, 1
        %s151 = smul.addr %s150, 256
        %s152 = scalar_lea.vmem [#allocation5], %s151
        %s153 = smul.u32 4, %s17
        %p154 = scmp.lt.s32.totalorder %s153, 7
        %s155 = scalar_select %p154, %s153, 7
        %s156 = smul.addr %s155, 8
        %s157 = scalar_lea.vmem %s0, %s156
        %s158 = smul.u32 4, %s17
        %s159 = smul.u32 4, %s17
        %v160 = vld [vmem:[%s157] sm:$0xff]
        %v161 = vld [vmem:[%s157 + $0x8] sm:$0xff]
        %v162 = vld [vmem:[%s157 + $0x10] sm:$0xff]
        %v163 = vld [vmem:[%s157 + $0x18] sm:$0xff]
        %v164 = vld [vmem:[#allocation2] sm:$0xff]
        %v165 = vld [vmem:[#allocation2 + $0x8] sm:$0xff]
        %v166 = vld [vmem:[#allocation2 + $0x10] sm:$0xff]
        %v167 = vld [vmem:[#allocation2 + $0x18] sm:$0xff]
        %v168 = vld [vmem:[#allocation2 + $0x20] sm:$0xff]
        %v169 = vld [vmem:[#allocation2 + $0x28] sm:$0xff]
        %v170 = vld [vmem:[#allocation2 + $0x30] sm:$0xff]
        %v171 = vld [vmem:[#allocation2 + $0x38] sm:$0xff]
        %v172 = vld [vmem:[#allocation2 + $0x40] sm:$0xff]
        %v173 = vld [vmem:[#allocation2 + $0x48] sm:$0xff]
        %v174 = vld [vmem:[#allocation2 + $0x50] sm:$0xff]
        %v175 = vld [vmem:[#allocation2 + $0x58] sm:$0xff]
        %v176 = vld [vmem:[#allocation2 + $0x60] sm:$0xff]
        %v177 = vld [vmem:[#allocation2 + $0x68] sm:$0xff]
        %v178 = vld [vmem:[#allocation2 + $0x70] sm:$0xff]
        %v179 = vld [vmem:[#allocation2 + $0x78] sm:$0xff]
        %v180 = vld [vmem:[#allocation2 + $0x80] sm:$0xff]
        %v181 = vld [vmem:[#allocation2 + $0x88] sm:$0xff]
        %v182 = vld [vmem:[#allocation2 + $0x90] sm:$0xff]
        %v183 = vld [vmem:[#allocation2 + $0x98] sm:$0xff]
        %v184 = vld [vmem:[#allocation2 + $0xa0] sm:$0xff]
        %v185 = vld [vmem:[#allocation2 + $0xa8] sm:$0xff]
        %v186 = vld [vmem:[#allocation2 + $0xb0] sm:$0xff]
        %v187 = vld [vmem:[#allocation2 + $0xb8] sm:$0xff]
        %v188 = vld [vmem:[#allocation2 + $0xc0] sm:$0xff]
        %v189 = vld [vmem:[#allocation2 + $0xc8] sm:$0xff]
        %v190 = vld [vmem:[#allocation2 + $0xd0] sm:$0xff]
        %v191 = vld [vmem:[#allocation2 + $0xd8] sm:$0xff]
        %v192 = vld [vmem:[#allocation2 + $0xe0] sm:$0xff]
        %v193 = vld [vmem:[#allocation2 + $0xe8] sm:$0xff]
        %v194 = vld [vmem:[#allocation2 + $0xf0] sm:$0xff]
        %v195 = vld [vmem:[#allocation2 + $0xf8] sm:$0xff]
        %v196 = vld [vmem:[#allocation2 + $0x100] sm:$0x1]
        %v197 = vld [vmem:[#allocation2 + $0x108] sm:$0x1]
        %v198 = vld [vmem:[#allocation2 + $0x110] sm:$0x1]
        %v199 = vld [vmem:[#allocation2 + $0x118] sm:$0x1]
        %v200 = vld [vmem:[#allocation2 + $0x120] sm:$0x1]
        %v201 = vld [vmem:[#allocation2 + $0x128] sm:$0x1]
        %v202 = vld [vmem:[#allocation2 + $0x130] sm:$0x1]
        %v203 = vld [vmem:[#allocation2 + $0x138] sm:$0x1]
        %vm204 = vcmask 269312
        %v206 = vsel %vm204, %v160, 0
        %v209 = vsel %vm204, %v161, 0
        %v212 = vsel %vm204, %v162, 0
        %v215 = vsel %vm204, %v163, 0
        %vm217 = vcmask 1040384
        %v219 = vsel %vm217, %v196, 0
        %v222 = vsel %vm217, %v197, 0
        %v225 = vsel %vm217, %v198, 0
        %v228 = vsel %vm217, %v199, 0
        %v231 = vsel %vm217, %v200, 0
        %v234 = vsel %vm217, %v201, 0
        %v237 = vsel %vm217, %v202, 0
        %v240 = vsel %vm217, %v203, 0
        %v242 = vand.u32 %v165, 4294901760
        %243 = vmatprep.subr.mxu0 %v242
        %v244 = vand.u32 %v164, 4294901760
        %245 = vmatpush1.msra.mxu0 %v244
        %v246 = vand.u32 %v173, 4294901760
        %247 = vmatprep.subr.mxu0 %v246
        %v248 = vand.u32 %v172, 4294901760
        %249 = vmatpush1.msra.mxu0 %v248
        %v250 = vand.u32 %v181, 4294901760
        %251 = vmatprep.subr.mxu0 %v250
        %v252 = vand.u32 %v180, 4294901760
        %253 = vmatpush1.msra.mxu0 %v252
        %v254 = vand.u32 %v189, 4294901760
        %255 = vmatprep.subr.mxu0 %v254
        %v256 = vand.u32 %v188, 4294901760
        %257 = vmatpush1.msra.mxu0 %v256
        %v258 = vand.u32 %v222, 4294901760
        %259 = vmatprep.subr.mxu0 %v258
        %v260 = vand.u32 %v219, 4294901760
        %261 = vmatpush1.msra.mxu0 %v260
        %262 = vmatprep.subr.mxu0 0.0
        %263 = vmatpush1.msra.mxu0 0.0
        %264 = vmatprep.subr.mxu0 0.0
        %265 = vmatpush1.msra.mxu0 0.0
        %266 = vmatprep.subr.mxu0 0.0
        %267 = vmatpush1.msra.mxu0 0.0
        %268 = vmatprep.subr.mxu0 0.0
        %269 = vmatpush1.msra.mxu0 0.0
        %270 = vmatprep.subr.mxu0 0.0
        %271 = vmatpush1.msra.mxu0 0.0
        %272 = vmatprep.subr.mxu0 0.0
        %273 = vmatpush1.msra.mxu0 0.0
        %274 = vmatprep.subr.mxu0 0.0
        %275 = vmatpush1.msra.mxu0 0.0
        %276 = vmatprep.subr.mxu0 0.0
        %277 = vmatpush1.msra.mxu0 0.0
        %278 = vmatprep.subr.mxu0 0.0
        %279 = vmatpush1.msra.mxu0 0.0
        %280 = vmatprep.subr.mxu0 0.0
        %281 = vmatpush1.msra.mxu0 0.0
        %282 = vmatprep.subr.mxu0 0.0
        %283 = vmatpush1.msra.mxu0 0.0
        %284 = vmatprep.subr.mxu0 0.0
        %285 = vmatpush1.msra.mxu0 0.0
        %286 = vmatprep.subr.mxu0 0.0
        %287 = vmatpush1.msra.mxu0 0.0
        %288 = vmatprep.subr.mxu0 0.0
        %289 = vmatpush1.msra.mxu0 0.0
        %290 = vmatprep.subr.mxu0 0.0
        %291 = vmatpush1.msra.mxu0 0.0
        %292 = vmatprep.subr.mxu0 0.0
        %293 = vmatpush1.msra.mxu0 0.0
        %294 = vmatprep.subr.mxu0 0.0
        %295 = vmatpush1.msra.mxu0 0.0
        %296 = vmatprep.subr.mxu0 0.0
        %297 = vmatpush1.msra.mxu0 0.0
        %298 = vmatprep.subr.mxu0 0.0
        %299 = vmatpush1.msra.mxu0 0.0
        %300 = vmatprep.subr.mxu0 0.0
        %301 = vmatpush1.msra.mxu0 0.0
        %302 = vmatprep.subr.mxu0 0.0
        %303 = vmatpush1.msra.mxu0 0.0
        %304 = vmatprep.subr.mxu0 0.0
        %305 = vmatpush1.msra.mxu0 0.0
        %306 = vmatprep.subr.mxu0 0.0
        %307 = vmatpush1.msra.mxu0 0.0
        %308 = vmatprep.subr.mxu0 0.0
        %309 = vmatpush1.msra.mxu0 0.0
        %310 = vmatprep.subr.mxu0 0.0
        %311 = vmatpush1.msra.mxu0 0.0
        %312 = vmatprep.subr.mxu0 0.0
        %313 = vmatpush1.msra.mxu0 0.0
        %314 = vmatprep.subr.mxu0 0.0
        %315 = vmatpush1.msra.mxu0 0.0
        %316 = vmatprep.mubr.f32.mxu0 0.0
        %v317 = vand.u32 %v206, 4294901760
        %v318 = vsub.f32 %v206, %v317
        %v319 = vand.u32 %v318, 4294901760
        %v320 = vsub.f32 %v318, %v319
        %v321 = vand.u32 %v320, 4294901760
        %322 = vmatmul.mubr.f32.gmra.mrb[0].mxu0 %v321
        %v323 = vpop.f32.mrb[0].mxu0
        %v324 = vadd.f32 0.0, %v323
        %v325 = vpop.f32.mrb[0].mxu0
        %v326 = vadd.f32 0.0, %v325
        %327 = vmatprep.mubr.f32.mxu0 0.0
        %v328 = vand.u32 %v209, 4294901760
        %v329 = vsub.f32 %v209, %v328
        %v330 = vand.u32 %v329, 4294901760
        %v331 = vsub.f32 %v329, %v330
        %v332 = vand.u32 %v331, 4294901760
        %333 = vmatmul.mubr.f32.gmra.mrb[0].mxu0 %v332
        %v334 = vpop.f32.mrb[0].mxu0
        %v335 = vadd.f32 0.0, %v334
        %v336 = vpop.f32.mrb[0].mxu0
        %v337 = vadd.f32 0.0, %v336
        %338 = vmatprep.mubr.f32.mxu0 0.0
        %v339 = vand.u32 %v212, 4294901760
        %v340 = vsub.f32 %v212, %v339
        %v341 = vand.u32 %v340, 4294901760
        %v342 = vsub.f32 %v340, %v341
        %v343 = vand.u32 %v342, 4294901760
        %344 = vmatmul.mubr.f32.gmra.mrb[0].mxu0 %v343
        %v345 = vpop.f32.mrb[0].mxu0
        %v346 = vadd.f32 0.0, %v345
        %v347 = vpop.f32.mrb[0].mxu0
        %v348 = vadd.f32 0.0, %v347
        %349 = vmatprep.mubr.f32.mxu0 0.0
        %v350 = vand.u32 %v215, 4294901760
        %v351 = vsub.f32 %v215, %v350
        %v352 = vand.u32 %v351, 4294901760
        %v353 = vsub.f32 %v351, %v352
        %v354 = vand.u32 %v353, 4294901760
        %355 = vmatmul.mubr.f32.gmra.mrb[0].mxu0 %v354
        %v356 = vpop.f32.mrb[0].mxu0
        %v357 = vadd.f32 0.0, %v356
        %v358 = vpop.f32.mrb[0].mxu0
        %v359 = vadd.f32 0.0, %v358
        %360 = vdwg.mxu0
        %v361 = vand.u32 %v165, 4294901760
        %v362 = vsub.f32 %v165, %v361
        %v363 = vand.u32 %v362, 4294901760
        %v364 = vsub.f32 %v362, %v363
        %v365 = vand.u32 %v364, 4294901760
        %366 = vmatprep.subr.mxu0 %v365
        %v367 = vand.u32 %v164, 4294901760
        %v368 = vsub.f32 %v164, %v367
        %v369 = vand.u32 %v368, 4294901760
        %v370 = vsub.f32 %v368, %v369
        %v371 = vand.u32 %v370, 4294901760
        %372 = vmatpush1.msra.mxu0 %v371
        %v373 = vand.u32 %v173, 4294901760
        %v374 = vsub.f32 %v173, %v373
        %v375 = vand.u32 %v374, 4294901760
        %v376 = vsub.f32 %v374, %v375
        %v377 = vand.u32 %v376, 4294901760
        %378 = vmatprep.subr.mxu0 %v377
        %v379 = vand.u32 %v172, 4294901760
        %v380 = vsub.f32 %v172, %v379
        %v381 = vand.u32 %v380, 4294901760
        %v382 = vsub.f32 %v380, %v381
        %v383 = vand.u32 %v382, 4294901760
        %384 = vmatpush1.msra.mxu0 %v383
        %v385 = vand.u32 %v181, 4294901760
        %v386 = vsub.f32 %v181, %v385
        %v387 = vand.u32 %v386, 4294901760
        %v388 = vsub.f32 %v386, %v387
        %v389 = vand.u32 %v388, 4294901760
        %390 = vmatprep.subr.mxu0 %v389
        %v391 = vand.u32 %v180, 4294901760
        %v392 = vsub.f32 %v180, %v391
        %v393 = vand.u32 %v392, 4294901760
        %v394 = vsub.f32 %v392, %v393
        %v395 = vand.u32 %v394, 4294901760
        %396 = vmatpush1.msra.mxu0 %v395
        %v397 = vand.u32 %v189, 4294901760
        %v398 = vsub.f32 %v189, %v397
        %v399 = vand.u32 %v398, 4294901760
        %v400 = vsub.f32 %v398, %v399
        %v401 = vand.u32 %v400, 4294901760
        %402 = vmatprep.subr.mxu0 %v401
        %v403 = vand.u32 %v188, 4294901760
        %v404 = vsub.f32 %v188, %v403
        %v405 = vand.u32 %v404, 4294901760
        %v406 = vsub.f32 %v404, %v405
        %v407 = vand.u32 %v406, 4294901760
        %408 = vmatpush1.msra.mxu0 %v407
        %v409 = vand.u32 %v222, 4294901760
        %v410 = vsub.f32 %v222, %v409
        %v411 = vand.u32 %v410, 4294901760
        %v412 = vsub.f32 %v410, %v411
        %v413 = vand.u32 %v412, 4294901760
        %414 = vmatprep.subr.mxu0 %v413
        %v415 = vand.u32 %v219, 4294901760
        %v416 = vsub.f32 %v219, %v415
        %v417 = vand.u32 %v416, 4294901760
        %v418 = vsub.f32 %v416, %v417
        %v419 = vand.u32 %v418, 4294901760
        %420 = vmatpush1.msra.mxu0 %v419
        %421 = vmatprep.subr.mxu0 0.0
        %422 = vmatpush1.msra.mxu0 0.0
        %423 = vmatprep.subr.mxu0 0.0
        %424 = vmatpush1.msra.mxu0 0.0
        %425 = vmatprep.subr.mxu0 0.0
        %426 = vmatpush1.msra.mxu0 0.0
        %427 = vmatprep.subr.mxu0 0.0
        %428 = vmatpush1.msra.mxu0 0.0
        %429 = vmatprep.subr.mxu0 0.0
        %430 = vmatpush1.msra.mxu0 0.0
        %431 = vmatprep.subr.mxu0 0.0
        %432 = vmatpush1.msra.mxu0 0.0
        %433 = vmatprep.subr.mxu0 0.0
        %434 = vmatpush1.msra.mxu0 0.0
        %435 = vmatprep.subr.mxu0 0.0
        %436 = vmatpush1.msra.mxu0 0.0
        %437 = vmatprep.subr.mxu0 0.0
        %438 = vmatpush1.msra.mxu0 0.0
        %439 = vmatprep.subr.mxu0 0.0
        %440 = vmatpush1.msra.mxu0 0.0
        %441 = vmatprep.subr.mxu0 0.0
        %442 = vmatpush1.msra.mxu0 0.0
        %443 = vmatprep.subr.mxu0 0.0
        %444 = vmatpush1.msra.mxu0 0.0
        %445 = vmatprep.subr.mxu0 0.0
        %446 = vmatpush1.msra.mxu0 0.0
        %447 = vmatprep.subr.mxu0 0.0
        %448 = vmatpush1.msra.mxu0 0.0
        %449 = vmatprep.subr.mxu0 0.0
        %450 = vmatpush1.msra.mxu0 0.0
        %451 = vmatprep.subr.mxu0 0.0
        %452 = vmatpush1.msra.mxu0 0.0
        %453 = vmatprep.subr.mxu0 0.0
        %454 = vmatpush1.msra.mxu0 0.0
        %455 = vmatprep.subr.mxu0 0.0
        %456 = vmatpush1.msra.mxu0 0.0
        %457 = vmatprep.subr.mxu0 0.0
        %458 = vmatpush1.msra.mxu0 0.0
        %459 = vmatprep.subr.mxu0 0.0
        %460 = vmatpush1.msra.mxu0 0.0
        %461 = vmatprep.subr.mxu0 0.0
        %462 = vmatpush1.msra.mxu0 0.0
        %463 = vmatprep.subr.mxu0 0.0
        %464 = vmatpush1.msra.mxu0 0.0
        %465 = vmatprep.subr.mxu0 0.0
        %466 = vmatpush1.msra.mxu0 0.0
        %467 = vmatprep.subr.mxu0 0.0
        %468 = vmatpush1.msra.mxu0 0.0
        %469 = vmatprep.subr.mxu0 0.0
        %470 = vmatpush1.msra.mxu0 0.0
        %471 = vmatprep.subr.mxu0 0.0
        %472 = vmatpush1.msra.mxu0 0.0
        %473 = vmatprep.subr.mxu0 0.0
        %474 = vmatpush1.msra.mxu0 0.0
        %475 = vmatprep.mubr.f32.mxu0 0.0
        %v476 = vand.u32 %v206, 4294901760
        %477 = vmatmul.mubr.f32.gmra.mrb[0].mxu0 %v476
        %v478 = vpop.f32.mrb[0].mxu0
        %v479 = vadd.f32 %v324, %v478
        %v480 = vpop.f32.mrb[0].mxu0
        %v481 = vadd.f32 %v326, %v480
        %482 = vmatprep.mubr.f32.mxu0 0.0
        %v483 = vand.u32 %v209, 4294901760
        %484 = vmatmul.mubr.f32.gmra.mrb[0].mxu0 %v483
        %v485 = vpop.f32.mrb[0].mxu0
        %v486 = vadd.f32 %v335, %v485
        %v487 = vpop.f32.mrb[0].mxu0
        %v488 = vadd.f32 %v337, %v487
        %489 = vmatprep.mubr.f32.mxu0 0.0
        %v490 = vand.u32 %v212, 4294901760
        %491 = vmatmul.mubr.f32.gmra.mrb[0].mxu0 %v490
        %v492 = vpop.f32.mrb[0].mxu0
        %v493 = vadd.f32 %v346, %v492
        %v494 = vpop.f32.mrb[0].mxu0
        %v495 = vadd.f32 %v348, %v494
        %496 = vmatprep.mubr.f32.mxu0 0.0
        %v497 = vand.u32 %v215, 4294901760
        %498 = vmatmul.mubr.f32.gmra.mrb[0].mxu0 %v497
        %v499 = vpop.f32.mrb[0].mxu0
        %v500 = vadd.f32 %v357, %v499
        %v501 = vpop.f32.mrb[0].mxu0
        %v502 = vadd.f32 %v359, %v501
        %503 = vdwg.mxu0
        %v504 = vand.u32 %v165, 4294901760
        %v505 = vsub.f32 %v165, %v504
        %506 = vmatprep.subr.mxu0 %v505
        %v507 = vand.u32 %v164, 4294901760
        %v508 = vsub.f32 %v164, %v507
        %509 = vmatpush1.msra.mxu0 %v508
        %v510 = vand.u32 %v173, 4294901760
        %v511 = vsub.f32 %v173, %v510
        %512 = vmatprep.subr.mxu0 %v511
        %v513 = vand.u32 %v172, 4294901760
        %v514 = vsub.f32 %v172, %v513
        %515 = vmatpush1.msra.mxu0 %v514
        %v516 = vand.u32 %v181, 4294901760
        %v517 = vsub.f32 %v181, %v516
        %518 = vmatprep.subr.mxu0 %v517
        %v519 = vand.u32 %v180, 4294901760
        %v520 = vsub.f32 %v180, %v519
        %521 = vmatpush1.msra.mxu0 %v520
        %v522 = vand.u32 %v189, 4294901760
        %v523 = vsub.f32 %v189, %v522
        %524 = vmatprep.subr.mxu0 %v523
        %v525 = vand.u32 %v188, 4294901760
        %v526 = vsub.f32 %v188, %v525
        %527 = vmatpush1.msra.mxu0 %v526
        %v528 = vand.u32 %v222, 4294901760
        %v529 = vsub.f32 %v222, %v528
        %530 = vmatprep.subr.mxu0 %v529
        %v531 = vand.u32 %v219, 4294901760
        %v532 = vsub.f32 %v219, %v531
        %533 = vmatpush1.msra.mxu0 %v532
        %534 = vmatprep.subr.mxu0 0.0
        %535 = vmatpush1.msra.mxu0 0.0
        %536 = vmatprep.subr.mxu0 0.0
        %537 = vmatpush1.msra.mxu0 0.0
        %538 = vmatprep.subr.mxu0 0.0
        %539 = vmatpush1.msra.mxu0 0.0
        %540 = vmatprep.subr.mxu0 0.0
        %541 = vmatpush1.msra.mxu0 0.0
        %542 = vmatprep.subr.mxu0 0.0
        %543 = vmatpush1.msra.mxu0 0.0
        %544 = vmatprep.subr.mxu0 0.0
        %545 = vmatpush1.msra.mxu0 0.0
        %546 = vmatprep.subr.mxu0 0.0
        %547 = vmatpush1.msra.mxu0 0.0
        %548 = vmatprep.subr.mxu0 0.0
        %549 = vmatpush1.msra.mxu0 0.0
        %550 = vmatprep.subr.mxu0 0.0
        %551 = vmatpush1.msra.mxu0 0.0
        %552 = vmatprep.subr.mxu0 0.0
        %553 = vmatpush1.msra.mxu0 0.0
        %554 = vmatprep.subr.mxu0 0.0
        %555 = vmatpush1.msra.mxu0 0.0
        %556 = vmatprep.subr.mxu0 0.0
        %557 = vmatpush1.msra.mxu0 0.0
        %558 = vmatprep.subr.mxu0 0.0
        %559 = vmatpush1.msra.mxu0 0.0
        %560 = vmatprep.subr.mxu0 0.0
        %561 = vmatpush1.msra.mxu0 0.0
        %562 = vmatprep.subr.mxu0 0.0
        %563 = vmatpush1.msra.mxu0 0.0
        %564 = vmatprep.subr.mxu0 0.0
        %565 = vmatpush1.msra.mxu0 0.0
        %566 = vmatprep.subr.mxu0 0.0
        %567 = vmatpush1.msra.mxu0 0.0
        %568 = vmatprep.subr.mxu0 0.0
        %569 = vmatpush1.msra.mxu0 0.0
        %570 = vmatprep.subr.mxu0 0.0
        %571 = vmatpush1.msra.mxu0 0.0
        %572 = vmatprep.subr.mxu0 0.0
        %573 = vmatpush1.msra.mxu0 0.0
        %574 = vmatprep.subr.mxu0 0.0
        %575 = vmatpush1.msra.mxu0 0.0
        %576 = vmatprep.subr.mxu0 0.0
        %577 = vmatpush1.msra.mxu0 0.0
        %578 = vmatprep.subr.mxu0 0.0
        %579 = vmatpush1.msra.mxu0 0.0
        %580 = vmatprep.subr.mxu0 0.0
        %581 = vmatpush1.msra.mxu0 0.0
        %582 = vmatprep.subr.mxu0 0.0
        %583 = vmatpush1.msra.mxu0 0.0
        %584 = vmatprep.subr.mxu0 0.0
        %585 = vmatpush1.msra.mxu0 0.0
        %586 = vmatprep.subr.mxu0 0.0
        %587 = vmatpush1.msra.mxu0 0.0
        %588 = vmatprep.mubr.f32.mxu0 0.0
        %v589 = vand.u32 %v206, 4294901760
        %v590 = vsub.f32 %v206, %v589
        %591 = vmatmul.mubr.f32.gmra.mrb[0].mxu0 %v590
        %v592 = vpop.f32.mrb[0].mxu0
        %v593 = vadd.f32 %v479, %v592
        %v594 = vpop.f32.mrb[0].mxu0
        %v595 = vadd.f32 %v481, %v594
        %596 = vmatprep.mubr.f32.mxu0 0.0
        %v597 = vand.u32 %v209, 4294901760
        %v598 = vsub.f32 %v209, %v597
        %599 = vmatmul.mubr.f32.gmra.mrb[0].mxu0 %v598
        %v600 = vpop.f32.mrb[0].mxu0
        %v601 = vadd.f32 %v486, %v600
        %v602 = vpop.f32.mrb[0].mxu0
        %v603 = vadd.f32 %v488, %v602
        %604 = vmatprep.mubr.f32.mxu0 0.0
        %v605 = vand.u32 %v212, 4294901760
        %v606 = vsub.f32 %v212, %v605
        %607 = vmatmul.mubr.f32.gmra.mrb[0].mxu0 %v606
        %v608 = vpop.f32.mrb[0].mxu0
        %v609 = vadd.f32 %v493, %v608
        %v610 = vpop.f32.mrb[0].mxu0
        %v611 = vadd.f32 %v495, %v610
        %612 = vmatprep.mubr.f32.mxu0 0.0
        %v613 = vand.u32 %v215, 4294901760
        %v614 = vsub.f32 %v215, %v613
        %615 = vmatmul.mubr.f32.gmra.mrb[0].mxu0 %v614
        %v616 = vpop.f32.mrb[0].mxu0
        %v617 = vadd.f32 %v500, %v616
        %v618 = vpop.f32.mrb[0].mxu0
        %v619 = vadd.f32 %v502, %v618
        %620 = vdwg.mxu0
        %v621 = vand.u32 %v165, 4294901760
        %622 = vmatprep.subr.mxu0 %v621
        %v623 = vand.u32 %v164, 4294901760
        %624 = vmatpush1.msra.mxu0 %v623
        %v625 = vand.u32 %v173, 4294901760
        %626 = vmatprep.subr.mxu0 %v625
        %v627 = vand.u32 %v172, 4294901760
        %628 = vmatpush1.msra.mxu0 %v627
        %v629 = vand.u32 %v181, 4294901760
        %630 = vmatprep.subr.mxu0 %v629
        %v631 = vand.u32 %v180, 4294901760
        %632 = vmatpush1.msra.mxu0 %v631
        %v633 = vand.u32 %v189, 4294901760
        %634 = vmatprep.subr.mxu0 %v633
        %v635 = vand.u32 %v188, 4294901760
        %636 = vmatpush1.msra.mxu0 %v635
        %v637 = vand.u32 %v222, 4294901760
        %638 = vmatprep.subr.mxu0 %v637
        %v639 = vand.u32 %v219, 4294901760
        %640 = vmatpush1.msra.mxu0 %v639
        %641 = vmatprep.subr.mxu0 0.0
        %642 = vmatpush1.msra.mxu0 0.0
        %643 = vmatprep.subr.mxu0 0.0
        %644 = vmatpush1.msra.mxu0 0.0
        %645 = vmatprep.subr.mxu0 0.0
        %646 = vmatpush1.msra.mxu0 0.0
        %647 = vmatprep.subr.mxu0 0.0
        %648 = vmatpush1.msra.mxu0 0.0
        %649 = vmatprep.subr.mxu0 0.0
        %650 = vmatpush1.msra.mxu0 0.0
        %651 = vmatprep.subr.mxu0 0.0
        %652 = vmatpush1.msra.mxu0 0.0
        %653 = vmatprep.subr.mxu0 0.0
        %654 = vmatpush1.msra.mxu0 0.0
        %655 = vmatprep.subr.mxu0 0.0
        %656 = vmatpush1.msra.mxu0 0.0
        %657 = vmatprep.subr.mxu0 0.0
        %658 = vmatpush1.msra.mxu0 0.0
        %659 = vmatprep.subr.mxu0 0.0
        %660 = vmatpush1.msra.mxu0 0.0
        %661 = vmatprep.subr.mxu0 0.0
        %662 = vmatpush1.msra.mxu0 0.0
        %663 = vmatprep.subr.mxu0 0.0
        %664 = vmatpush1.msra.mxu0 0.0
        %665 = vmatprep.subr.mxu0 0.0
        %666 = vmatpush1.msra.mxu0 0.0
        %667 = vmatprep.subr.mxu0 0.0
        %668 = vmatpush1.msra.mxu0 0.0
        %669 = vmatprep.subr.mxu0 0.0
        %670 = vmatpush1.msra.mxu0 0.0
        %671 = vmatprep.subr.mxu0 0.0
        %672 = vmatpush1.msra.mxu0 0.0
        %673 = vmatprep.subr.mxu0 0.0
        %674 = vmatpush1.msra.mxu0 0.0
        %675 = vmatprep.subr.mxu0 0.0
        %676 = vmatpush1.msra.mxu0 0.0
        %677 = vmatprep.subr.mxu0 0.0
        %678 = vmatpush1.msra.mxu0 0.0
        %679 = vmatprep.subr.mxu0 0.0
        %680 = vmatpush1.msra.mxu0 0.0
        %681 = vmatprep.subr.mxu0 0.0
        %682 = vmatpush1.msra.mxu0 0.0
        %683 = vmatprep.subr.mxu0 0.0
        %684 = vmatpush1.msra.mxu0 0.0
        %685 = vmatprep.subr.mxu0 0.0
        %686 = vmatpush1.msra.mxu0 0.0
        %687 = vmatprep.subr.mxu0 0.0
        %688 = vmatpush1.msra.mxu0 0.0
        %689 = vmatprep.subr.mxu0 0.0
        %690 = vmatpush1.msra.mxu0 0.0
        %691 = vmatprep.subr.mxu0 0.0
        %692 = vmatpush1.msra.mxu0 0.0
        %693 = vmatprep.subr.mxu0 0.0
        %694 = vmatpush1.msra.mxu0 0.0
        %695 = vmatprep.mubr.f32.mxu0 0.0
        %v696 = vand.u32 %v206, 4294901760
        %v697 = vsub.f32 %v206, %v696
        %v698 = vand.u32 %v697, 4294901760
        %699 = vmatmul.mubr.f32.gmra.mrb[0].mxu0 %v698
        %v700 = vpop.f32.mrb[0].mxu0
        %v701 = vadd.f32 %v593, %v700
        %v702 = vpop.f32.mrb[0].mxu0
        %v703 = vadd.f32 %v595, %v702
        %704 = vmatprep.mubr.f32.mxu0 0.0
        %v705 = vand.u32 %v209, 4294901760
        %v706 = vsub.f32 %v209, %v705
        %v707 = vand.u32 %v706, 4294901760
        %708 = vmatmul.mubr.f32.gmra.mrb[0].mxu0 %v707
        %v709 = vpop.f32.mrb[0].mxu0
        %v710 = vadd.f32 %v601, %v709
        %v711 = vpop.f32.mrb[0].mxu0
        %v712 = vadd.f32 %v603, %v711
        %713 = vmatprep.mubr.f32.mxu0 0.0
        %v714 = vand.u32 %v212, 4294901760
        %v715 = vsub.f32 %v212, %v714
        %v716 = vand.u32 %v715, 4294901760
        %717 = vmatmul.mubr.f32.gmra.mrb[0].mxu0 %v716
        %v718 = vpop.f32.mrb[0].mxu0
        %v719 = vadd.f32 %v609, %v718
        %v720 = vpop.f32.mrb[0].mxu0
        %v721 = vadd.f32 %v611, %v720
        %722 = vmatprep.mubr.f32.mxu0 0.0
        %v723 = vand.u32 %v215, 4294901760
        %v724 = vsub.f32 %v215, %v723
        %v725 = vand.u32 %v724, 4294901760
        %726 = vmatmul.mubr.f32.gmra.mrb[0].mxu0 %v725
        %v727 = vpop.f32.mrb[0].mxu0
        %v728 = vadd.f32 %v617, %v727
        %v729 = vpop.f32.mrb[0].mxu0
        %v730 = vadd.f32 %v619, %v729
        %731 = vdwg.mxu0
        %v732 = vand.u32 %v165, 4294901760
        %v733 = vsub.f32 %v165, %v732
        %v734 = vand.u32 %v733, 4294901760
        %735 = vmatprep.subr.mxu0 %v734
        %v736 = vand.u32 %v164, 4294901760
        %v737 = vsub.f32 %v164, %v736
        %v738 = vand.u32 %v737, 4294901760
        %739 = vmatpush1.msra.mxu0 %v738
        %v740 = vand.u32 %v173, 4294901760
        %v741 = vsub.f32 %v173, %v740
        %v742 = vand.u32 %v741, 4294901760
        %743 = vmatprep.subr.mxu0 %v742
        %v744 = vand.u32 %v172, 4294901760
        %v745 = vsub.f32 %v172, %v744
        %v746 = vand.u32 %v745, 4294901760
        %747 = vmatpush1.msra.mxu0 %v746
        %v748 = vand.u32 %v181, 4294901760
        %v749 = vsub.f32 %v181, %v748
        %v750 = vand.u32 %v749, 4294901760
        %751 = vmatprep.subr.mxu0 %v750
        %v752 = vand.u32 %v180, 4294901760
        %v753 = vsub.f32 %v180, %v752
        %v754 = vand.u32 %v753, 4294901760
        %755 = vmatpush1.msra.mxu0 %v754
        %v756 = vand.u32 %v189, 4294901760
        %v757 = vsub.f32 %v189, %v756
        %v758 = vand.u32 %v757, 4294901760
        %759 = vmatprep.subr.mxu0 %v758
        %v760 = vand.u32 %v188, 4294901760
        %v761 = vsub.f32 %v188, %v760
        %v762 = vand.u32 %v761, 4294901760
        %763 = vmatpush1.msra.mxu0 %v762
        %v764 = vand.u32 %v222, 4294901760
        %v765 = vsub.f32 %v222, %v764
        %v766 = vand.u32 %v765, 4294901760
        %767 = vmatprep.subr.mxu0 %v766
        %v768 = vand.u32 %v219, 4294901760
        %v769 = vsub.f32 %v219, %v768
        %v770 = vand.u32 %v769, 4294901760
        %771 = vmatpush1.msra.mxu0 %v770
        %772 = vmatprep.subr.mxu0 0.0
        %773 = vmatpush1.msra.mxu0 0.0
        %774 = vmatprep.subr.mxu0 0.0
        %775 = vmatpush1.msra.mxu0 0.0
        %776 = vmatprep.subr.mxu0 0.0
        %777 = vmatpush1.msra.mxu0 0.0
        %778 = vmatprep.subr.mxu0 0.0
        %779 = vmatpush1.msra.mxu0 0.0
        %780 = vmatprep.subr.mxu0 0.0
        %781 = vmatpush1.msra.mxu0 0.0
        %782 = vmatprep.subr.mxu0 0.0
        %783 = vmatpush1.msra.mxu0 0.0
        %784 = vmatprep.subr.mxu0 0.0
        %785 = vmatpush1.msra.mxu0 0.0
        %786 = vmatprep.subr.mxu0 0.0
        %787 = vmatpush1.msra.mxu0 0.0
        %788 = vmatprep.subr.mxu0 0.0
        %789 = vmatpush1.msra.mxu0 0.0
        %790 = vmatprep.subr.mxu0 0.0
        %791 = vmatpush1.msra.mxu0 0.0
        %792 = vmatprep.subr.mxu0 0.0
        %793 = vmatpush1.msra.mxu0 0.0
        %794 = vmatprep.subr.mxu0 0.0
        %795 = vmatpush1.msra.mxu0 0.0
        %796 = vmatprep.subr.mxu0 0.0
        %797 = vmatpush1.msra.mxu0 0.0
        %798 = vmatprep.subr.mxu0 0.0
        %799 = vmatpush1.msra.mxu0 0.0
        %800 = vmatprep.subr.mxu0 0.0
        %801 = vmatpush1.msra.mxu0 0.0
        %802 = vmatprep.subr.mxu0 0.0
        %803 = vmatpush1.msra.mxu0 0.0
        %804 = vmatprep.subr.mxu0 0.0
        %805 = vmatpush1.msra.mxu0 0.0
        %806 = vmatprep.subr.mxu0 0.0
        %807 = vmatpush1.msra.mxu0 0.0
        %808 = vmatprep.subr.mxu0 0.0
        %809 = vmatpush1.msra.mxu0 0.0
        %810 = vmatprep.subr.mxu0 0.0
        %811 = vmatpush1.msra.mxu0 0.0
        %812 = vmatprep.subr.mxu0 0.0
        %813 = vmatpush1.msra.mxu0 0.0
        %814 = vmatprep.subr.mxu0 0.0
        %815 = vmatpush1.msra.mxu0 0.0
        %816 = vmatprep.subr.mxu0 0.0
        %817 = vmatpush1.msra.mxu0 0.0
        %818 = vmatprep.subr.mxu0 0.0
        %819 = vmatpush1.msra.mxu0 0.0
        %820 = vmatprep.subr.mxu0 0.0
        %821 = vmatpush1.msra.mxu0 0.0
        %822 = vmatprep.subr.mxu0 0.0
        %823 = vmatpush1.msra.mxu0 0.0
        %824 = vmatprep.subr.mxu0 0.0
        %825 = vmatpush1.msra.mxu0 0.0
        %826 = vmatprep.mubr.f32.mxu0 0.0
        %v827 = vand.u32 %v206, 4294901760
        %828 = vmatmul.mubr.f32.gmra.mrb[0].mxu0 %v827
        %v829 = vpop.f32.mrb[0].mxu0
        %v830 = vadd.f32 %v701, %v829
        %v831 = vpop.f32.mrb[0].mxu0
        %v832 = vadd.f32 %v703, %v831
        %833 = vmatprep.mubr.f32.mxu0 0.0
        %v834 = vand.u32 %v209, 4294901760
        %835 = vmatmul.mubr.f32.gmra.mrb[0].mxu0 %v834
        %v836 = vpop.f32.mrb[0].mxu0
        %v837 = vadd.f32 %v710, %v836
        %v838 = vpop.f32.mrb[0].mxu0
        %v839 = vadd.f32 %v712, %v838
        %840 = vmatprep.mubr.f32.mxu0 0.0
        %v841 = vand.u32 %v212, 4294901760
        %842 = vmatmul.mubr.f32.gmra.mrb[0].mxu0 %v841
        %v843 = vpop.f32.mrb[0].mxu0
        %v844 = vadd.f32 %v719, %v843
        %v845 = vpop.f32.mrb[0].mxu0
        %v846 = vadd.f32 %v721, %v845
        %847 = vmatprep.mubr.f32.mxu0 0.0
        %v848 = vand.u32 %v215, 4294901760
        %849 = vmatmul.mubr.f32.gmra.mrb[0].mxu0 %v848
        %v850 = vpop.f32.mrb[0].mxu0
        %v851 = vadd.f32 %v728, %v850
        %v852 = vpop.f32.mrb[0].mxu0
        %v853 = vadd.f32 %v730, %v852
        %854 = vdwg.mxu0
        %v855 = vand.u32 %v165, 4294901760
        %856 = vmatprep.subr.mxu0 %v855
        %v857 = vand.u32 %v164, 4294901760
        %858 = vmatpush1.msra.mxu0 %v857
        %v859 = vand.u32 %v173, 4294901760
        %860 = vmatprep.subr.mxu0 %v859
        %v861 = vand.u32 %v172, 4294901760
        %862 = vmatpush1.msra.mxu0 %v861
        %v863 = vand.u32 %v181, 4294901760
        %864 = vmatprep.subr.mxu0 %v863
        %v865 = vand.u32 %v180, 4294901760
        %866 = vmatpush1.msra.mxu0 %v865
        %v867 = vand.u32 %v189, 4294901760
        %868 = vmatprep.subr.mxu0 %v867
        %v869 = vand.u32 %v188, 4294901760
        %870 = vmatpush1.msra.mxu0 %v869
        %v871 = vand.u32 %v222, 4294901760
        %872 = vmatprep.subr.mxu0 %v871
        %v873 = vand.u32 %v219, 4294901760
        %874 = vmatpush1.msra.mxu0 %v873
        %875 = vmatprep.subr.mxu0 0.0
        %876 = vmatpush1.msra.mxu0 0.0
        %877 = vmatprep.subr.mxu0 0.0
        %878 = vmatpush1.msra.mxu0 0.0
        %879 = vmatprep.subr.mxu0 0.0
        %880 = vmatpush1.msra.mxu0 0.0
        %881 = vmatprep.subr.mxu0 0.0
        %882 = vmatpush1.msra.mxu0 0.0
        %883 = vmatprep.subr.mxu0 0.0
        %884 = vmatpush1.msra.mxu0 0.0
        %885 = vmatprep.subr.mxu0 0.0
        %886 = vmatpush1.msra.mxu0 0.0
        %887 = vmatprep.subr.mxu0 0.0
        %888 = vmatpush1.msra.mxu0 0.0
        %889 = vmatprep.subr.mxu0 0.0
        %890 = vmatpush1.msra.mxu0 0.0
        %891 = vmatprep.subr.mxu0 0.0
        %892 = vmatpush1.msra.mxu0 0.0
        %893 = vmatprep.subr.mxu0 0.0
        %894 = vmatpush1.msra.mxu0 0.0
        %895 = vmatprep.subr.mxu0 0.0
        %896 = vmatpush1.msra.mxu0 0.0
        %897 = vmatprep.subr.mxu0 0.0
        %898 = vmatpush1.msra.mxu0 0.0
        %899 = vmatprep.subr.mxu0 0.0
        %900 = vmatpush1.msra.mxu0 0.0
        %901 = vmatprep.subr.mxu0 0.0
        %902 = vmatpush1.msra.mxu0 0.0
        %903 = vmatprep.subr.mxu0 0.0
        %904 = vmatpush1.msra.mxu0 0.0
        %905 = vmatprep.subr.mxu0 0.0
        %906 = vmatpush1.msra.mxu0 0.0
        %907 = vmatprep.subr.mxu0 0.0
        %908 = vmatpush1.msra.mxu0 0.0
        %909 = vmatprep.subr.mxu0 0.0
        %910 = vmatpush1.msra.mxu0 0.0
        %911 = vmatprep.subr.mxu0 0.0
        %912 = vmatpush1.msra.mxu0 0.0
        %913 = vmatprep.subr.mxu0 0.0
        %914 = vmatpush1.msra.mxu0 0.0
        %915 = vmatprep.subr.mxu0 0.0
        %916 = vmatpush1.msra.mxu0 0.0
        %917 = vmatprep.subr.mxu0 0.0
        %918 = vmatpush1.msra.mxu0 0.0
        %919 = vmatprep.subr.mxu0 0.0
        %920 = vmatpush1.msra.mxu0 0.0
        %921 = vmatprep.subr.mxu0 0.0
        %922 = vmatpush1.msra.mxu0 0.0
        %923 = vmatprep.subr.mxu0 0.0
        %924 = vmatpush1.msra.mxu0 0.0
        %925 = vmatprep.subr.mxu0 0.0
        %926 = vmatpush1.msra.mxu0 0.0
        %927 = vmatprep.subr.mxu0 0.0
        %928 = vmatpush1.msra.mxu0 0.0
        %929 = vmatprep.mubr.f32.mxu0 0.0
        %v930 = vand.u32 %v206, 4294901760
        %931 = vmatmul.mubr.f32.gmra.mrb[0].mxu0 %v930
        %v932 = vpop.f32.mrb[0].mxu0
        %v933 = vadd.f32 %v830, %v932
        %v934 = vpop.f32.mrb[0].mxu0
        %v935 = vadd.f32 %v832, %v934
        %936 = vmatprep.mubr.f32.mxu0 0.0
        %v937 = vand.u32 %v209, 4294901760
        %938 = vmatmul.mubr.f32.gmra.mrb[0].mxu0 %v937
        %v939 = vpop.f32.mrb[0].mxu0
        %v940 = vadd.f32 %v837, %v939
        %v941 = vpop.f32.mrb[0].mxu0
        %v942 = vadd.f32 %v839, %v941
        %943 = vmatprep.mubr.f32.mxu0 0.0
        %v944 = vand.u32 %v212, 4294901760
        %945 = vmatmul.mubr.f32.gmra.mrb[0].mxu0 %v944
        %v946 = vpop.f32.mrb[0].mxu0
        %v947 = vadd.f32 %v844, %v946
        %v948 = vpop.f32.mrb[0].mxu0
        %v949 = vadd.f32 %v846, %v948
        %950 = vmatprep.mubr.f32.mxu0 0.0
        %v951 = vand.u32 %v215, 4294901760
        %952 = vmatmul.mubr.f32.gmra.mrb[0].mxu0 %v951
        %v953 = vpop.f32.mrb[0].mxu0
        %v954 = vadd.f32 %v851, %v953
        %v955 = vpop.f32.mrb[0].mxu0
        %v956 = vadd.f32 %v853, %v955
        %957 = vdwg.mxu0
        %v958 = vand.u32 %v167, 4294901760
        %959 = vmatprep.subr.mxu0 %v958
        %v960 = vand.u32 %v166, 4294901760
        %961 = vmatpush1.msra.mxu0 %v960
        %v962 = vand.u32 %v175, 4294901760
        %963 = vmatprep.subr.mxu0 %v962
        %v964 = vand.u32 %v174, 4294901760
        %965 = vmatpush1.msra.mxu0 %v964
        %v966 = vand.u32 %v183, 4294901760
        %967 = vmatprep.subr.mxu0 %v966
        %v968 = vand.u32 %v182, 4294901760
        %969 = vmatpush1.msra.mxu0 %v968
        %v970 = vand.u32 %v191, 4294901760
        %971 = vmatprep.subr.mxu0 %v970
        %v972 = vand.u32 %v190, 4294901760
        %973 = vmatpush1.msra.mxu0 %v972
        %v974 = vand.u32 %v228, 4294901760
        %975 = vmatprep.subr.mxu0 %v974
        %v976 = vand.u32 %v225, 4294901760
        %977 = vmatpush1.msra.mxu0 %v976
        %978 = vmatprep.subr.mxu0 0.0
        %979 = vmatpush1.msra.mxu0 0.0
        %980 = vmatprep.subr.mxu0 0.0
        %981 = vmatpush1.msra.mxu0 0.0
        %982 = vmatprep.subr.mxu0 0.0
        %983 = vmatpush1.msra.mxu0 0.0
        %984 = vmatprep.subr.mxu0 0.0
        %985 = vmatpush1.msra.mxu0 0.0
        %986 = vmatprep.subr.mxu0 0.0
        %987 = vmatpush1.msra.mxu0 0.0
        %988 = vmatprep.subr.mxu0 0.0
        %989 = vmatpush1.msra.mxu0 0.0
        %990 = vmatprep.subr.mxu0 0.0
        %991 = vmatpush1.msra.mxu0 0.0
        %992 = vmatprep.subr.mxu0 0.0
        %993 = vmatpush1.msra.mxu0 0.0
        %994 = vmatprep.subr.mxu0 0.0
        %995 = vmatpush1.msra.mxu0 0.0
        %996 = vmatprep.subr.mxu0 0.0
        %997 = vmatpush1.msra.mxu0 0.0
        %998 = vmatprep.subr.mxu0 0.0
        %999 = vmatpush1.msra.mxu0 0.0
        %1000 = vmatprep.subr.mxu0 0.0
        %1001 = vmatpush1.msra.mxu0 0.0
        %1002 = vmatprep.subr.mxu0 0.0
        %1003 = vmatpush1.msra.mxu0 0.0
        %1004 = vmatprep.subr.mxu0 0.0
        %1005 = vmatpush1.msra.mxu0 0.0
        %1006 = vmatprep.subr.mxu0 0.0
        %1007 = vmatpush1.msra.mxu0 0.0
        %1008 = vmatprep.subr.mxu0 0.0
        %1009 = vmatpush1.msra.mxu0 0.0
        %1010 = vmatprep.subr.mxu0 0.0
        %1011 = vmatpush1.msra.mxu0 0.0
        %1012 = vmatprep.subr.mxu0 0.0
        %1013 = vmatpush1.msra.mxu0 0.0
        %1014 = vmatprep.subr.mxu0 0.0
        %1015 = vmatpush1.msra.mxu0 0.0
        %1016 = vmatprep.subr.mxu0 0.0
        %1017 = vmatpush1.msra.mxu0 0.0
        %1018 = vmatprep.subr.mxu0 0.0
        %1019 = vmatpush1.msra.mxu0 0.0
        %1020 = vmatprep.subr.mxu0 0.0
        %1021 = vmatpush1.msra.mxu0 0.0
        %1022 = vmatprep.subr.mxu0 0.0
        %1023 = vmatpush1.msra.mxu0 0.0
        %1024 = vmatprep.subr.mxu0 0.0
        %1025 = vmatpush1.msra.mxu0 0.0
        %1026 = vmatprep.subr.mxu0 0.0
        %1027 = vmatpush1.msra.mxu0 0.0
        %1028 = vmatprep.subr.mxu0 0.0
        %1029 = vmatpush1.msra.mxu0 0.0
        %1030 = vmatprep.subr.mxu0 0.0
        %1031 = vmatpush1.msra.mxu0 0.0
        %1032 = vmatprep.mubr.f32.mxu0 0.0
        %v1033 = vand.u32 %v206, 4294901760
        %v1034 = vsub.f32 %v206, %v1033
        %v1035 = vand.u32 %v1034, 4294901760
        %v1036 = vsub.f32 %v1034, %v1035
        %v1037 = vand.u32 %v1036, 4294901760
        %1038 = vmatmul.mubr.f32.gmra.mrb[0].mxu0 %v1037
        %v1039 = vpop.f32.mrb[0].mxu0
        %v1040 = vadd.f32 0.0, %v1039
        %v1041 = vpop.f32.mrb[0].mxu0
        %v1042 = vadd.f32 0.0, %v1041
        %1043 = vmatprep.mubr.f32.mxu0 0.0
        %v1044 = vand.u32 %v209, 4294901760
        %v1045 = vsub.f32 %v209, %v1044
        %v1046 = vand.u32 %v1045, 4294901760
        %v1047 = vsub.f32 %v1045, %v1046
        %v1048 = vand.u32 %v1047, 4294901760
        %1049 = vmatmul.mubr.f32.gmra.mrb[0].mxu0 %v1048
        %v1050 = vpop.f32.mrb[0].mxu0
        %v1051 = vadd.f32 0.0, %v1050
        %v1052 = vpop.f32.mrb[0].mxu0
        %v1053 = vadd.f32 0.0, %v1052
        %1054 = vmatprep.mubr.f32.mxu0 0.0
        %v1055 = vand.u32 %v212, 4294901760
        %v1056 = vsub.f32 %v212, %v1055
        %v1057 = vand.u32 %v1056, 4294901760
        %v1058 = vsub.f32 %v1056, %v1057
        %v1059 = vand.u32 %v1058, 4294901760
        %1060 = vmatmul.mubr.f32.gmra.mrb[0].mxu0 %v1059
        %v1061 = vpop.f32.mrb[0].mxu0
        %v1062 = vadd.f32 0.0, %v1061
        %v1063 = vpop.f32.mrb[0].mxu0
        %v1064 = vadd.f32 0.0, %v1063
        %1065 = vmatprep.mubr.f32.mxu0 0.0
        %v1066 = vand.u32 %v215, 4294901760
        %v1067 = vsub.f32 %v215, %v1066
        %v1068 = vand.u32 %v1067, 4294901760
        %v1069 = vsub.f32 %v1067, %v1068
        %v1070 = vand.u32 %v1069, 4294901760
        %1071 = vmatmul.mubr.f32.gmra.mrb[0].mxu0 %v1070
        %v1072 = vpop.f32.mrb[0].mxu0
        %v1073 = vadd.f32 0.0, %v1072
        %v1074 = vpop.f32.mrb[0].mxu0
        %v1075 = vadd.f32 0.0, %v1074
        %1076 = vdwg.mxu0
        %v1077 = vand.u32 %v167, 4294901760
        %v1078 = vsub.f32 %v167, %v1077
        %v1079 = vand.u32 %v1078, 4294901760
        %v1080 = vsub.f32 %v1078, %v1079
        %v1081 = vand.u32 %v1080, 4294901760
        %1082 = vmatprep.subr.mxu0 %v1081
        %v1083 = vand.u32 %v166, 4294901760
        %v1084 = vsub.f32 %v166, %v1083
        %v1085 = vand.u32 %v1084, 4294901760
        %v1086 = vsub.f32 %v1084, %v1085
        %v1087 = vand.u32 %v1086, 4294901760
        %1088 = vmatpush1.msra.mxu0 %v1087
        %v1089 = vand.u32 %v175, 4294901760
        %v1090 = vsub.f32 %v175, %v1089
        %v1091 = vand.u32 %v1090, 4294901760
        %v1092 = vsub.f32 %v1090, %v1091
        %v1093 = vand.u32 %v1092, 4294901760
        %1094 = vmatprep.subr.mxu0 %v1093
        %v1095 = vand.u32 %v174, 4294901760
        %v1096 = vsub.f32 %v174, %v1095
        %v1097 = vand.u32 %v1096, 4294901760
        %v1098 = vsub.f32 %v1096, %v1097
        %v1099 = vand.u32 %v1098, 4294901760
        %1100 = vmatpush1.msra.mxu0 %v1099
        %v1101 = vand.u32 %v183, 4294901760
        %v1102 = vsub.f32 %v183, %v1101
        %v1103 = vand.u32 %v1102, 4294901760
        %v1104 = vsub.f32 %v1102, %v1103
        %v1105 = vand.u32 %v1104, 4294901760
        %1106 = vmatprep.subr.mxu0 %v1105
        %v1107 = vand.u32 %v182, 4294901760
        %v1108 = vsub.f32 %v182, %v1107
        %v1109 = vand.u32 %v1108, 4294901760
        %v1110 = vsub.f32 %v1108, %v1109
        %v1111 = vand.u32 %v1110, 4294901760
        %1112 = vmatpush1.msra.mxu0 %v1111
        %v1113 = vand.u32 %v191, 4294901760
        %v1114 = vsub.f32 %v191, %v1113
        %v1115 = vand.u32 %v1114, 4294901760
        %v1116 = vsub.f32 %v1114, %v1115
        %v1117 = vand.u32 %v1116, 4294901760
        %1118 = vmatprep.subr.mxu0 %v1117
        %v1119 = vand.u32 %v190, 4294901760
        %v1120 = vsub.f32 %v190, %v1119
        %v1121 = vand.u32 %v1120, 4294901760
        %v1122 = vsub.f32 %v1120, %v1121
        %v1123 = vand.u32 %v1122, 4294901760
        %1124 = vmatpush1.msra.mxu0 %v1123
        %v1125 = vand.u32 %v228, 4294901760
        %v1126 = vsub.f32 %v228, %v1125
        %v1127 = vand.u32 %v1126, 4294901760
        %v1128 = vsub.f32 %v1126, %v1127
        %v1129 = vand.u32 %v1128, 4294901760
        %1130 = vmatprep.subr.mxu0 %v1129
        %v1131 = vand.u32 %v225, 4294901760
        %v1132 = vsub.f32 %v225, %v1131
        %v1133 = vand.u32 %v1132, 4294901760
        %v1134 = vsub.f32 %v1132, %v1133
        %v1135 = vand.u32 %v1134, 4294901760
        %1136 = vmatpush1.msra.mxu0 %v1135
        %1137 = vmatprep.subr.mxu0 0.0
        %1138 = vmatpush1.msra.mxu0 0.0
        %1139 = vmatprep.subr.mxu0 0.0
        %1140 = vmatpush1.msra.mxu0 0.0
        %1141 = vmatprep.subr.mxu0 0.0
        %1142 = vmatpush1.msra.mxu0 0.0
        %1143 = vmatprep.subr.mxu0 0.0
        %1144 = vmatpush1.msra.mxu0 0.0
        %1145 = vmatprep.subr.mxu0 0.0
        %1146 = vmatpush1.msra.mxu0 0.0
        %1147 = vmatprep.subr.mxu0 0.0
        %1148 = vmatpush1.msra.mxu0 0.0
        %1149 = vmatprep.subr.mxu0 0.0
        %1150 = vmatpush1.msra.mxu0 0.0
        %1151 = vmatprep.subr.mxu0 0.0
        %1152 = vmatpush1.msra.mxu0 0.0
        %1153 = vmatprep.subr.mxu0 0.0
        %1154 = vmatpush1.msra.mxu0 0.0
        %1155 = vmatprep.subr.mxu0 0.0
        %1156 = vmatpush1.msra.mxu0 0.0
        %1157 = vmatprep.subr.mxu0 0.0
        %1158 = vmatpush1.msra.mxu0 0.0
        %1159 = vmatprep.subr.mxu0 0.0
        %1160 = vmatpush1.msra.mxu0 0.0
        %1161 = vmatprep.subr.mxu0 0.0
        %1162 = vmatpush1.msra.mxu0 0.0
        %1163 = vmatprep.subr.mxu0 0.0
        %1164 = vmatpush1.msra.mxu0 0.0
        %1165 = vmatprep.subr.mxu0 0.0
        %1166 = vmatpush1.msra.mxu0 0.0
        %1167 = vmatprep.subr.mxu0 0.0
        %1168 = vmatpush1.msra.mxu0 0.0
        %1169 = vmatprep.subr.mxu0 0.0
        %1170 = vmatpush1.msra.mxu0 0.0
        %1171 = vmatprep.subr.mxu0 0.0
        %1172 = vmatpush1.msra.mxu0 0.0
        %1173 = vmatprep.subr.mxu0 0.0
        %1174 = vmatpush1.msra.mxu0 0.0
        %1175 = vmatprep.subr.mxu0 0.0
        %1176 = vmatpush1.msra.mxu0 0.0
        %1177 = vmatprep.subr.mxu0 0.0
        %1178 = vmatpush1.msra.mxu0 0.0
        %1179 = vmatprep.subr.mxu0 0.0
        %1180 = vmatpush1.msra.mxu0 0.0
        %1181 = vmatprep.subr.mxu0 0.0
        %1182 = vmatpush1.msra.mxu0 0.0
        %1183 = vmatprep.subr.mxu0 0.0
        %1184 = vmatpush1.msra.mxu0 0.0
        %1185 = vmatprep.subr.mxu0 0.0
        %1186 = vmatpush1.msra.mxu0 0.0
        %1187 = vmatprep.subr.mxu0 0.0
        %1188 = vmatpush1.msra.mxu0 0.0
        %1189 = vmatprep.subr.mxu0 0.0
        %1190 = vmatpush1.msra.mxu0 0.0
        %1191 = vmatprep.mubr.f32.mxu0 0.0
        %v1192 = vand.u32 %v206, 4294901760
        %1193 = vmatmul.mubr.f32.gmra.mrb[0].mxu0 %v1192
        %v1194 = vpop.f32.mrb[0].mxu0
        %v1195 = vadd.f32 %v1040, %v1194
        %v1196 = vpop.f32.mrb[0].mxu0
        %v1197 = vadd.f32 %v1042, %v1196
        %1198 = vmatprep.mubr.f32.mxu0 0.0
        %v1199 = vand.u32 %v209, 4294901760
        %1200 = vmatmul.mubr.f32.gmra.mrb[0].mxu0 %v1199
        %v1201 = vpop.f32.mrb[0].mxu0
        %v1202 = vadd.f32 %v1051, %v1201
        %v1203 = vpop.f32.mrb[0].mxu0
        %v1204 = vadd.f32 %v1053, %v1203
        %1205 = vmatprep.mubr.f32.mxu0 0.0
        %v1206 = vand.u32 %v212, 4294901760
        %1207 = vmatmul.mubr.f32.gmra.mrb[0].mxu0 %v1206
        %v1208 = vpop.f32.mrb[0].mxu0
        %v1209 = vadd.f32 %v1062, %v1208
        %v1210 = vpop.f32.mrb[0].mxu0
        %v1211 = vadd.f32 %v1064, %v1210
        %1212 = vmatprep.mubr.f32.mxu0 0.0
        %v1213 = vand.u32 %v215, 4294901760
        %1214 = vmatmul.mubr.f32.gmra.mrb[0].mxu0 %v1213
        %v1215 = vpop.f32.mrb[0].mxu0
        %v1216 = vadd.f32 %v1073, %v1215
        %v1217 = vpop.f32.mrb[0].mxu0
        %v1218 = vadd.f32 %v1075, %v1217
        %1219 = vdwg.mxu0
        %v1220 = vand.u32 %v167, 4294901760
        %v1221 = vsub.f32 %v167, %v1220
        %1222 = vmatprep.subr.mxu0 %v1221
        %v1223 = vand.u32 %v166, 4294901760
        %v1224 = vsub.f32 %v166, %v1223
        %1225 = vmatpush1.msra.mxu0 %v1224
        %v1226 = vand.u32 %v175, 4294901760
        %v1227 = vsub.f32 %v175, %v1226
        %1228 = vmatprep.subr.mxu0 %v1227
        %v1229 = vand.u32 %v174, 4294901760
        %v1230 = vsub.f32 %v174, %v1229
        %1231 = vmatpush1.msra.mxu0 %v1230
        %v1232 = vand.u32 %v183, 4294901760
        %v1233 = vsub.f32 %v183, %v1232
        %1234 = vmatprep.subr.mxu0 %v1233
        %v1235 = vand.u32 %v182, 4294901760
        %v1236 = vsub.f32 %v182, %v1235
        %1237 = vmatpush1.msra.mxu0 %v1236
        %v1238 = vand.u32 %v191, 4294901760
        %v1239 = vsub.f32 %v191, %v1238
        %1240 = vmatprep.subr.mxu0 %v1239
        %v1241 = vand.u32 %v190, 4294901760
        %v1242 = vsub.f32 %v190, %v1241
        %1243 = vmatpush1.msra.mxu0 %v1242
        %v1244 = vand.u32 %v228, 4294901760
        %v1245 = vsub.f32 %v228, %v1244
        %1246 = vmatprep.subr.mxu0 %v1245
        %v1247 = vand.u32 %v225, 4294901760
        %v1248 = vsub.f32 %v225, %v1247
        %1249 = vmatpush1.msra.mxu0 %v1248
        %1250 = vmatprep.subr.mxu0 0.0
        %1251 = vmatpush1.msra.mxu0 0.0
        %1252 = vmatprep.subr.mxu0 0.0
        %1253 = vmatpush1.msra.mxu0 0.0
        %1254 = vmatprep.subr.mxu0 0.0
        %1255 = vmatpush1.msra.mxu0 0.0
        %1256 = vmatprep.subr.mxu0 0.0
        %1257 = vmatpush1.msra.mxu0 0.0
        %1258 = vmatprep.subr.mxu0 0.0
        %1259 = vmatpush1.msra.mxu0 0.0
        %1260 = vmatprep.subr.mxu0 0.0
        %1261 = vmatpush1.msra.mxu0 0.0
        %1262 = vmatprep.subr.mxu0 0.0
        %1263 = vmatpush1.msra.mxu0 0.0
        %1264 = vmatprep.subr.mxu0 0.0
        %1265 = vmatpush1.msra.mxu0 0.0
        %1266 = vmatprep.subr.mxu0 0.0
        %1267 = vmatpush1.msra.mxu0 0.0
        %1268 = vmatprep.subr.mxu0 0.0
        %1269 = vmatpush1.msra.mxu0 0.0
        %1270 = vmatprep.subr.mxu0 0.0
        %1271 = vmatpush1.msra.mxu0 0.0
        %1272 = vmatprep.subr.mxu0 0.0
        %1273 = vmatpush1.msra.mxu0 0.0
        %1274 = vmatprep.subr.mxu0 0.0
        %1275 = vmatpush1.msra.mxu0 0.0
        %1276 = vmatprep.subr.mxu0 0.0
        %1277 = vmatpush1.msra.mxu0 0.0
        %1278 = vmatprep.subr.mxu0 0.0
        %1279 = vmatpush1.msra.mxu0 0.0
        %1280 = vmatprep.subr.mxu0 0.0
        %1281 = vmatpush1.msra.mxu0 0.0
        %1282 = vmatprep.subr.mxu0 0.0
        %1283 = vmatpush1.msra.mxu0 0.0
        %1284 = vmatprep.subr.mxu0 0.0
        %1285 = vmatpush1.msra.mxu0 0.0
        %1286 = vmatprep.subr.mxu0 0.0
        %1287 = vmatpush1.msra.mxu0 0.0
        %1288 = vmatprep.subr.mxu0 0.0
        %1289 = vmatpush1.msra.mxu0 0.0
        %1290 = vmatprep.subr.mxu0 0.0
        %1291 = vmatpush1.msra.mxu0 0.0
        %1292 = vmatprep.subr.mxu0 0.0
        %1293 = vmatpush1.msra.mxu0 0.0
        %1294 = vmatprep.subr.mxu0 0.0
        %1295 = vmatpush1.msra.mxu0 0.0
        %1296 = vmatprep.subr.mxu0 0.0
        %1297 = vmatpush1.msra.mxu0 0.0
        %1298 = vmatprep.subr.mxu0 0.0
        %1299 = vmatpush1.msra.mxu0 0.0
        %1300 = vmatprep.subr.mxu0 0.0
        %1301 = vmatpush1.msra.mxu0 0.0
        %1302 = vmatprep.subr.mxu0 0.0
        %1303 = vmatpush1.msra.mxu0 0.0
        %1304 = vmatprep.mubr.f32.mxu0 0.0
        %v1305 = vand.u32 %v206, 4294901760
        %v1306 = vsub.f32 %v206, %v1305
        %1307 = vmatmul.mubr.f32.gmra.mrb[0].mxu0 %v1306
        %v1308 = vpop.f32.mrb[0].mxu0
        %v1309 = vadd.f32 %v1195, %v1308
        %v1310 = vpop.f32.mrb[0].mxu0
        %v1311 = vadd.f32 %v1197, %v1310
        %1312 = vmatprep.mubr.f32.mxu0 0.0
        %v1313 = vand.u32 %v209, 4294901760
        %v1314 = vsub.f32 %v209, %v1313
        %1315 = vmatmul.mubr.f32.gmra.mrb[0].mxu0 %v1314
        %v1316 = vpop.f32.mrb[0].mxu0
        %v1317 = vadd.f32 %v1202, %v1316
        %v1318 = vpop.f32.mrb[0].mxu0
        %v1319 = vadd.f32 %v1204, %v1318
        %1320 = vmatprep.mubr.f32.mxu0 0.0
        %v1321 = vand.u32 %v212, 4294901760
        %v1322 = vsub.f32 %v212, %v1321
        %1323 = vmatmul.mubr.f32.gmra.mrb[0].mxu0 %v1322
        %v1324 = vpop.f32.mrb[0].mxu0
        %v1325 = vadd.f32 %v1209, %v1324
        %v1326 = vpop.f32.mrb[0].mxu0
        %v1327 = vadd.f32 %v1211, %v1326
        %1328 = vmatprep.mubr.f32.mxu0 0.0
        %v1329 = vand.u32 %v215, 4294901760
        %v1330 = vsub.f32 %v215, %v1329
        %1331 = vmatmul.mubr.f32.gmra.mrb[0].mxu0 %v1330
        %v1332 = vpop.f32.mrb[0].mxu0
        %v1333 = vadd.f32 %v1216, %v1332
        %v1334 = vpop.f32.mrb[0].mxu0
        %v1335 = vadd.f32 %v1218, %v1334
        %1336 = vdwg.mxu0
        %v1337 = vand.u32 %v167, 4294901760
        %1338 = vmatprep.subr.mxu0 %v1337
        %v1339 = vand.u32 %v166, 4294901760
        %1340 = vmatpush1.msra.mxu0 %v1339
        %v1341 = vand.u32 %v175, 4294901760
        %1342 = vmatprep.subr.mxu0 %v1341
        %v1343 = vand.u32 %v174, 4294901760
        %1344 = vmatpush1.msra.mxu0 %v1343
        %v1345 = vand.u32 %v183, 4294901760
        %1346 = vmatprep.subr.mxu0 %v1345
        %v1347 = vand.u32 %v182, 4294901760
        %1348 = vmatpush1.msra.mxu0 %v1347
        %v1349 = vand.u32 %v191, 4294901760
        %1350 = vmatprep.subr.mxu0 %v1349
        %v1351 = vand.u32 %v190, 4294901760
        %1352 = vmatpush1.msra.mxu0 %v1351
        %v1353 = vand.u32 %v228, 4294901760
        %1354 = vmatprep.subr.mxu0 %v1353
        %v1355 = vand.u32 %v225, 4294901760
        %1356 = vmatpush1.msra.mxu0 %v1355
        %1357 = vmatprep.subr.mxu0 0.0
        %1358 = vmatpush1.msra.mxu0 0.0
        %1359 = vmatprep.subr.mxu0 0.0
        %1360 = vmatpush1.msra.mxu0 0.0
        %1361 = vmatprep.subr.mxu0 0.0
        %1362 = vmatpush1.msra.mxu0 0.0
        %1363 = vmatprep.subr.mxu0 0.0
        %1364 = vmatpush1.msra.mxu0 0.0
        %1365 = vmatprep.subr.mxu0 0.0
        %1366 = vmatpush1.msra.mxu0 0.0
        %1367 = vmatprep.subr.mxu0 0.0
        %1368 = vmatpush1.msra.mxu0 0.0
        %1369 = vmatprep.subr.mxu0 0.0
        %1370 = vmatpush1.msra.mxu0 0.0
        %1371 = vmatprep.subr.mxu0 0.0
        %1372 = vmatpush1.msra.mxu0 0.0
        %1373 = vmatprep.subr.mxu0 0.0
        %1374 = vmatpush1.msra.mxu0 0.0
        %1375 = vmatprep.subr.mxu0 0.0
        %1376 = vmatpush1.msra.mxu0 0.0
        %1377 = vmatprep.subr.mxu0 0.0
        %1378 = vmatpush1.msra.mxu0 0.0
        %1379 = vmatprep.subr.mxu0 0.0
        %1380 = vmatpush1.msra.mxu0 0.0
        %1381 = vmatprep.subr.mxu0 0.0
        %1382 = vmatpush1.msra.mxu0 0.0
        %1383 = vmatprep.subr.mxu0 0.0
        %1384 = vmatpush1.msra.mxu0 0.0
        %1385 = vmatprep.subr.mxu0 0.0
        %1386 = vmatpush1.msra.mxu0 0.0
        %1387 = vmatprep.subr.mxu0 0.0
        %1388 = vmatpush1.msra.mxu0 0.0
        %1389 = vmatprep.subr.mxu0 0.0
        %1390 = vmatpush1.msra.mxu0 0.0
        %1391 = vmatprep.subr.mxu0 0.0
        %1392 = vmatpush1.msra.mxu0 0.0
        %1393 = vmatprep.subr.mxu0 0.0
        %1394 = vmatpush1.msra.mxu0 0.0
        %1395 = vmatprep.subr.mxu0 0.0
        %1396 = vmatpush1.msra.mxu0 0.0
        %1397 = vmatprep.subr.mxu0 0.0
        %1398 = vmatpush1.msra.mxu0 0.0
        %1399 = vmatprep.subr.mxu0 0.0
        %1400 = vmatpush1.msra.mxu0 0.0
        %1401 = vmatprep.subr.mxu0 0.0
        %1402 = vmatpush1.msra.mxu0 0.0
        %1403 = vmatprep.subr.mxu0 0.0
        %1404 = vmatpush1.msra.mxu0 0.0
        %1405 = vmatprep.subr.mxu0 0.0
        %1406 = vmatpush1.msra.mxu0 0.0
        %1407 = vmatprep.subr.mxu0 0.0
        %1408 = vmatpush1.msra.mxu0 0.0
        %1409 = vmatprep.subr.mxu0 0.0
        %1410 = vmatpush1.msra.mxu0 0.0
        %1411 = vmatprep.mubr.f32.mxu0 0.0
        %v1412 = vand.u32 %v206, 4294901760
        %v1413 = vsub.f32 %v206, %v1412
        %v1414 = vand.u32 %v1413, 4294901760
        %1415 = vmatmul.mubr.f32.gmra.mrb[0].mxu0 %v1414
        %v1416 = vpop.f32.mrb[0].mxu0
        %v1417 = vadd.f32 %v1309, %v1416
        %v1418 = vpop.f32.mrb[0].mxu0
        %v1419 = vadd.f32 %v1311, %v1418
        %1420 = vmatprep.mubr.f32.mxu0 0.0
        %v1421 = vand.u32 %v209, 4294901760
        %v1422 = vsub.f32 %v209, %v1421
        %v1423 = vand.u32 %v1422, 4294901760
        %1424 = vmatmul.mubr.f32.gmra.mrb[0].mxu0 %v1423
        %v1425 = vpop.f32.mrb[0].mxu0
        %v1426 = vadd.f32 %v1317, %v1425
        %v1427 = vpop.f32.mrb[0].mxu0
        %v1428 = vadd.f32 %v1319, %v1427
        %1429 = vmatprep.mubr.f32.mxu0 0.0
        %v1430 = vand.u32 %v212, 4294901760
        %v1431 = vsub.f32 %v212, %v1430
        %v1432 = vand.u32 %v1431, 4294901760
        %1433 = vmatmul.mubr.f32.gmra.mrb[0].mxu0 %v1432
        %v1434 = vpop.f32.mrb[0].mxu0
        %v1435 = vadd.f32 %v1325, %v1434
        %v1436 = vpop.f32.mrb[0].mxu0
        %v1437 = vadd.f32 %v1327, %v1436
        %1438 = vmatprep.mubr.f32.mxu0 0.0
        %v1439 = vand.u32 %v215, 4294901760
        %v1440 = vsub.f32 %v215, %v1439
        %v1441 = vand.u32 %v1440, 4294901760
        %1442 = vmatmul.mubr.f32.gmra.mrb[0].mxu0 %v1441
        %v1443 = vpop.f32.mrb[0].mxu0
        %v1444 = vadd.f32 %v1333, %v1443
        %v1445 = vpop.f32.mrb[0].mxu0
        %v1446 = vadd.f32 %v1335, %v1445
        %1447 = vdwg.mxu0
        %v1448 = vand.u32 %v167, 4294901760
        %v1449 = vsub.f32 %v167, %v1448
        %v1450 = vand.u32 %v1449, 4294901760
        %1451 = vmatprep.subr.mxu0 %v1450
        %v1452 = vand.u32 %v166, 4294901760
        %v1453 = vsub.f32 %v166, %v1452
        %v1454 = vand.u32 %v1453, 4294901760
        %1455 = vmatpush1.msra.mxu0 %v1454
        %v1456 = vand.u32 %v175, 4294901760
        %v1457 = vsub.f32 %v175, %v1456
        %v1458 = vand.u32 %v1457, 4294901760
        %1459 = vmatprep.subr.mxu0 %v1458
        %v1460 = vand.u32 %v174, 4294901760
        %v1461 = vsub.f32 %v174, %v1460
        %v1462 = vand.u32 %v1461, 4294901760
        %1463 = vmatpush1.msra.mxu0 %v1462
        %v1464 = vand.u32 %v183, 4294901760
        %v1465 = vsub.f32 %v183, %v1464
        %v1466 = vand.u32 %v1465, 4294901760
        %1467 = vmatprep.subr.mxu0 %v1466
        %v1468 = vand.u32 %v182, 4294901760
        %v1469 = vsub.f32 %v182, %v1468
        %v1470 = vand.u32 %v1469, 4294901760
        %1471 = vmatpush1.msra.mxu0 %v1470
        %v1472 = vand.u32 %v191, 4294901760
        %v1473 = vsub.f32 %v191, %v1472
        %v1474 = vand.u32 %v1473, 4294901760
        %1475 = vmatprep.subr.mxu0 %v1474
        %v1476 = vand.u32 %v190, 4294901760
        %v1477 = vsub.f32 %v190, %v1476
        %v1478 = vand.u32 %v1477, 4294901760
        %1479 = vmatpush1.msra.mxu0 %v1478
        %v1480 = vand.u32 %v228, 4294901760
        %v1481 = vsub.f32 %v228, %v1480
        %v1482 = vand.u32 %v1481, 4294901760
        %1483 = vmatprep.subr.mxu0 %v1482
        %v1484 = vand.u32 %v225, 4294901760
        %v1485 = vsub.f32 %v225, %v1484
        %v1486 = vand.u32 %v1485, 4294901760
        %1487 = vmatpush1.msra.mxu0 %v1486
        %1488 = vmatprep.subr.mxu0 0.0
        %1489 = vmatpush1.msra.mxu0 0.0
        %1490 = vmatprep.subr.mxu0 0.0
        %1491 = vmatpush1.msra.mxu0 0.0
        %1492 = vmatprep.subr.mxu0 0.0
        %1493 = vmatpush1.msra.mxu0 0.0
        %1494 = vmatprep.subr.mxu0 0.0
        %1495 = vmatpush1.msra.mxu0 0.0
        %1496 = vmatprep.subr.mxu0 0.0
        %1497 = vmatpush1.msra.mxu0 0.0
        %1498 = vmatprep.subr.mxu0 0.0
        %1499 = vmatpush1.msra.mxu0 0.0
        %1500 = vmatprep.subr.mxu0 0.0
        %1501 = vmatpush1.msra.mxu0 0.0
        %1502 = vmatprep.subr.mxu0 0.0
        %1503 = vmatpush1.msra.mxu0 0.0
        %1504 = vmatprep.subr.mxu0 0.0
        %1505 = vmatpush1.msra.mxu0 0.0
        %1506 = vmatprep.subr.mxu0 0.0
        %1507 = vmatpush1.msra.mxu0 0.0
        %1508 = vmatprep.subr.mxu0 0.0
        %1509 = vmatpush1.msra.mxu0 0.0
        %1510 = vmatprep.subr.mxu0 0.0
        %1511 = vmatpush1.msra.mxu0 0.0
        %1512 = vmatprep.subr.mxu0 0.0
        %1513 = vmatpush1.msra.mxu0 0.0
        %1514 = vmatprep.subr.mxu0 0.0
        %1515 = vmatpush1.msra.mxu0 0.0
        %1516 = vmatprep.subr.mxu0 0.0
        %1517 = vmatpush1.msra.mxu0 0.0
        %1518 = vmatprep.subr.mxu0 0.0
        %1519 = vmatpush1.msra.mxu0 0.0
        %1520 = vmatprep.subr.mxu0 0.0
        %1521 = vmatpush1.msra.mxu0 0.0
        %1522 = vmatprep.subr.mxu0 0.0
        %1523 = vmatpush1.msra.mxu0 0.0
        %1524 = vmatprep.subr.mxu0 0.0
        %1525 = vmatpush1.msra.mxu0 0.0
        %1526 = vmatprep.subr.mxu0 0.0
        %1527 = vmatpush1.msra.mxu0 0.0
        %1528 = vmatprep.subr.mxu0 0.0
        %1529 = vmatpush1.msra.mxu0 0.0
        %1530 = vmatprep.subr.mxu0 0.0
        %1531 = vmatpush1.msra.mxu0 0.0
        %1532 = vmatprep.subr.mxu0 0.0
        %1533 = vmatpush1.msra.mxu0 0.0
        %1534 = vmatprep.subr.mxu0 0.0
        %1535 = vmatpush1.msra.mxu0 0.0
        %1536 = vmatprep.subr.mxu0 0.0
        %1537 = vmatpush1.msra.mxu0 0.0
        %1538 = vmatprep.subr.mxu0 0.0
        %1539 = vmatpush1.msra.mxu0 0.0
        %1540 = vmatprep.subr.mxu0 0.0
        %1541 = vmatpush1.msra.mxu0 0.0
        %1542 = vmatprep.mubr.f32.mxu0 0.0
        %v1543 = vand.u32 %v206, 4294901760
        %1544 = vmatmul.mubr.f32.gmra.mrb[0].mxu0 %v1543
        %v1545 = vpop.f32.mrb[0].mxu0
        %v1546 = vadd.f32 %v1417, %v1545
        %v1547 = vpop.f32.mrb[0].mxu0
        %v1548 = vadd.f32 %v1419, %v1547
        %1549 = vmatprep.mubr.f32.mxu0 0.0
        %v1550 = vand.u32 %v209, 4294901760
        %1551 = vmatmul.mubr.f32.gmra.mrb[0].mxu0 %v1550
        %v1552 = vpop.f32.mrb[0].mxu0
        %v1553 = vadd.f32 %v1426, %v1552
        %v1554 = vpop.f32.mrb[0].mxu0
        %v1555 = vadd.f32 %v1428, %v1554
        %1556 = vmatprep.mubr.f32.mxu0 0.0
        %v1557 = vand.u32 %v212, 4294901760
        %1558 = vmatmul.mubr.f32.gmra.mrb[0].mxu0 %v1557
        %v1559 = vpop.f32.mrb[0].mxu0
        %v1560 = vadd.f32 %v1435, %v1559
        %v1561 = vpop.f32.mrb[0].mxu0
        %v1562 = vadd.f32 %v1437, %v1561
        %1563 = vmatprep.mubr.f32.mxu0 0.0
        %v1564 = vand.u32 %v215, 4294901760
        %1565 = vmatmul.mubr.f32.gmra.mrb[0].mxu0 %v1564
        %v1566 = vpop.f32.mrb[0].mxu0
        %v1567 = vadd.f32 %v1444, %v1566
        %v1568 = vpop.f32.mrb[0].mxu0
        %v1569 = vadd.f32 %v1446, %v1568
        %1570 = vdwg.mxu0
        %v1571 = vand.u32 %v167, 4294901760
        %1572 = vmatprep.subr.mxu0 %v1571
        %v1573 = vand.u32 %v166, 4294901760
        %1574 = vmatpush1.msra.mxu0 %v1573
        %v1575 = vand.u32 %v175, 4294901760
        %1576 = vmatprep.subr.mxu0 %v1575
        %v1577 = vand.u32 %v174, 4294901760
        %1578 = vmatpush1.msra.mxu0 %v1577
        %v1579 = vand.u32 %v183, 4294901760
        %1580 = vmatprep.subr.mxu0 %v1579
        %v1581 = vand.u32 %v182, 4294901760
        %1582 = vmatpush1.msra.mxu0 %v1581
        %v1583 = vand.u32 %v191, 4294901760
        %1584 = vmatprep.subr.mxu0 %v1583
        %v1585 = vand.u32 %v190, 4294901760
        %1586 = vmatpush1.msra.mxu0 %v1585
        %v1587 = vand.u32 %v228, 4294901760
        %1588 = vmatprep.subr.mxu0 %v1587
        %v1589 = vand.u32 %v225, 4294901760
        %1590 = vmatpush1.msra.mxu0 %v1589
        %1591 = vmatprep.subr.mxu0 0.0
        %1592 = vmatpush1.msra.mxu0 0.0
        %1593 = vmatprep.subr.mxu0 0.0
        %1594 = vmatpush1.msra.mxu0 0.0
        %1595 = vmatprep.subr.mxu0 0.0
        %1596 = vmatpush1.msra.mxu0 0.0
        %1597 = vmatprep.subr.mxu0 0.0
        %1598 = vmatpush1.msra.mxu0 0.0
        %1599 = vmatprep.subr.mxu0 0.0
        %1600 = vmatpush1.msra.mxu0 0.0
        %1601 = vmatprep.subr.mxu0 0.0
        %1602 = vmatpush1.msra.mxu0 0.0
        %1603 = vmatprep.subr.mxu0 0.0
        %1604 = vmatpush1.msra.mxu0 0.0
        %1605 = vmatprep.subr.mxu0 0.0
        %1606 = vmatpush1.msra.mxu0 0.0
        %1607 = vmatprep.subr.mxu0 0.0
        %1608 = vmatpush1.msra.mxu0 0.0
        %1609 = vmatprep.subr.mxu0 0.0
        %1610 = vmatpush1.msra.mxu0 0.0
        %1611 = vmatprep.subr.mxu0 0.0
        %1612 = vmatpush1.msra.mxu0 0.0
        %1613 = vmatprep.subr.mxu0 0.0
        %1614 = vmatpush1.msra.mxu0 0.0
        %1615 = vmatprep.subr.mxu0 0.0
        %1616 = vmatpush1.msra.mxu0 0.0
        %1617 = vmatprep.subr.mxu0 0.0
        %1618 = vmatpush1.msra.mxu0 0.0
        %1619 = vmatprep.subr.mxu0 0.0
        %1620 = vmatpush1.msra.mxu0 0.0
        %1621 = vmatprep.subr.mxu0 0.0
        %1622 = vmatpush1.msra.mxu0 0.0
        %1623 = vmatprep.subr.mxu0 0.0
        %1624 = vmatpush1.msra.mxu0 0.0
        %1625 = vmatprep.subr.mxu0 0.0
        %1626 = vmatpush1.msra.mxu0 0.0
        %1627 = vmatprep.subr.mxu0 0.0
        %1628 = vmatpush1.msra.mxu0 0.0
        %1629 = vmatprep.subr.mxu0 0.0
        %1630 = vmatpush1.msra.mxu0 0.0
        %1631 = vmatprep.subr.mxu0 0.0
        %1632 = vmatpush1.msra.mxu0 0.0
        %1633 = vmatprep.subr.mxu0 0.0
        %1634 = vmatpush1.msra.mxu0 0.0
        %1635 = vmatprep.subr.mxu0 0.0
        %1636 = vmatpush1.msra.mxu0 0.0
        %1637 = vmatprep.subr.mxu0 0.0
        %1638 = vmatpush1.msra.mxu0 0.0
        %1639 = vmatprep.subr.mxu0 0.0
        %1640 = vmatpush1.msra.mxu0 0.0
        %1641 = vmatprep.subr.mxu0 0.0
        %1642 = vmatpush1.msra.mxu0 0.0
        %1643 = vmatprep.subr.mxu0 0.0
        %1644 = vmatpush1.msra.mxu0 0.0
        %1645 = vmatprep.mubr.f32.mxu0 0.0
        %v1646 = vand.u32 %v206, 4294901760
        %1647 = vmatmul.mubr.f32.gmra.mrb[0].mxu0 %v1646
        %v1648 = vpop.f32.mrb[0].mxu0
        %v1649 = vadd.f32 %v1546, %v1648
        %v1650 = vpop.f32.mrb[0].mxu0
        %v1651 = vadd.f32 %v1548, %v1650
        %1652 = vmatprep.mubr.f32.mxu0 0.0
        %v1653 = vand.u32 %v209, 4294901760
        %1654 = vmatmul.mubr.f32.gmra.mrb[0].mxu0 %v1653
        %v1655 = vpop.f32.mrb[0].mxu0
        %v1656 = vadd.f32 %v1553, %v1655
        %v1657 = vpop.f32.mrb[0].mxu0
        %v1658 = vadd.f32 %v1555, %v1657
        %1659 = vmatprep.mubr.f32.mxu0 0.0
        %v1660 = vand.u32 %v212, 4294901760
        %1661 = vmatmul.mubr.f32.gmra.mrb[0].mxu0 %v1660
        %v1662 = vpop.f32.mrb[0].mxu0
        %v1663 = vadd.f32 %v1560, %v1662
        %v1664 = vpop.f32.mrb[0].mxu0
        %v1665 = vadd.f32 %v1562, %v1664
        %1666 = vmatprep.mubr.f32.mxu0 0.0
        %v1667 = vand.u32 %v215, 4294901760
        %1668 = vmatmul.mubr.f32.gmra.mrb[0].mxu0 %v1667
        %v1669 = vpop.f32.mrb[0].mxu0
        %v1670 = vadd.f32 %v1567, %v1669
        %v1671 = vpop.f32.mrb[0].mxu0
        %v1672 = vadd.f32 %v1569, %v1671
        %1673 = vdwg.mxu0
        %v1674 = vand.u32 %v169, 4294901760
        %1675 = vmatprep.subr.mxu0 %v1674
        %v1676 = vand.u32 %v168, 4294901760
        %1677 = vmatpush1.msra.mxu0 %v1676
        %v1678 = vand.u32 %v177, 4294901760
        %1679 = vmatprep.subr.mxu0 %v1678
        %v1680 = vand.u32 %v176, 4294901760
        %1681 = vmatpush1.msra.mxu0 %v1680
        %v1682 = vand.u32 %v185, 4294901760
        %1683 = vmatprep.subr.mxu0 %v1682
        %v1684 = vand.u32 %v184, 4294901760
        %1685 = vmatpush1.msra.mxu0 %v1684
        %v1686 = vand.u32 %v193, 4294901760
        %1687 = vmatprep.subr.mxu0 %v1686
        %v1688 = vand.u32 %v192, 4294901760
        %1689 = vmatpush1.msra.mxu0 %v1688
        %v1690 = vand.u32 %v234, 4294901760
        %1691 = vmatprep.subr.mxu0 %v1690
        %v1692 = vand.u32 %v231, 4294901760
        %1693 = vmatpush1.msra.mxu0 %v1692
        %1694 = vmatprep.subr.mxu0 0.0
        %1695 = vmatpush1.msra.mxu0 0.0
        %1696 = vmatprep.subr.mxu0 0.0
        %1697 = vmatpush1.msra.mxu0 0.0
        %1698 = vmatprep.subr.mxu0 0.0
        %1699 = vmatpush1.msra.mxu0 0.0
        %1700 = vmatprep.subr.mxu0 0.0
        %1701 = vmatpush1.msra.mxu0 0.0
        %1702 = vmatprep.subr.mxu0 0.0
        %1703 = vmatpush1.msra.mxu0 0.0
        %1704 = vmatprep.subr.mxu0 0.0
        %1705 = vmatpush1.msra.mxu0 0.0
        %1706 = vmatprep.subr.mxu0 0.0
        %1707 = vmatpush1.msra.mxu0 0.0
        %1708 = vmatprep.subr.mxu0 0.0
        %1709 = vmatpush1.msra.mxu0 0.0
        %1710 = vmatprep.subr.mxu0 0.0
        %1711 = vmatpush1.msra.mxu0 0.0
        %1712 = vmatprep.subr.mxu0 0.0
        %1713 = vmatpush1.msra.mxu0 0.0
        %1714 = vmatprep.subr.mxu0 0.0
        %1715 = vmatpush1.msra.mxu0 0.0
        %1716 = vmatprep.subr.mxu0 0.0
        %1717 = vmatpush1.msra.mxu0 0.0
        %1718 = vmatprep.subr.mxu0 0.0
        %1719 = vmatpush1.msra.mxu0 0.0
        %1720 = vmatprep.subr.mxu0 0.0
        %1721 = vmatpush1.msra.mxu0 0.0
        %1722 = vmatprep.subr.mxu0 0.0
        %1723 = vmatpush1.msra.mxu0 0.0
        %1724 = vmatprep.subr.mxu0 0.0
        %1725 = vmatpush1.msra.mxu0 0.0
        %1726 = vmatprep.subr.mxu0 0.0
        %1727 = vmatpush1.msra.mxu0 0.0
        %1728 = vmatprep.subr.mxu0 0.0
        %1729 = vmatpush1.msra.mxu0 0.0
        %1730 = vmatprep.subr.mxu0 0.0
        %1731 = vmatpush1.msra.mxu0 0.0
        %1732 = vmatprep.subr.mxu0 0.0
        %1733 = vmatpush1.msra.mxu0 0.0
        %1734 = vmatprep.subr.mxu0 0.0
        %1735 = vmatpush1.msra.mxu0 0.0
        %1736 = vmatprep.subr.mxu0 0.0
        %1737 = vmatpush1.msra.mxu0 0.0
        %1738 = vmatprep.subr.mxu0 0.0
        %1739 = vmatpush1.msra.mxu0 0.0
        %1740 = vmatprep.subr.mxu0 0.0
        %1741 = vmatpush1.msra.mxu0 0.0
        %1742 = vmatprep.subr.mxu0 0.0
        %1743 = vmatpush1.msra.mxu0 0.0
        %1744 = vmatprep.subr.mxu0 0.0
        %1745 = vmatpush1.msra.mxu0 0.0
        %1746 = vmatprep.subr.mxu0 0.0
        %1747 = vmatpush1.msra.mxu0 0.0
        %1748 = vmatprep.mubr.f32.mxu0 0.0
        %v1749 = vand.u32 %v206, 4294901760
        %v1750 = vsub.f32 %v206, %v1749
        %v1751 = vand.u32 %v1750, 4294901760
        %v1752 = vsub.f32 %v1750, %v1751
        %v1753 = vand.u32 %v1752, 4294901760
        %1754 = vmatmul.mubr.f32.gmra.mrb[0].mxu0 %v1753
        %v1755 = vpop.f32.mrb[0].mxu0
        %v1756 = vadd.f32 0.0, %v1755
        %v1757 = vpop.f32.mrb[0].mxu0
        %v1758 = vadd.f32 0.0, %v1757
        %1759 = vmatprep.mubr.f32.mxu0 0.0
        %v1760 = vand.u32 %v209, 4294901760
        %v1761 = vsub.f32 %v209, %v1760
        %v1762 = vand.u32 %v1761, 4294901760
        %v1763 = vsub.f32 %v1761, %v1762
        %v1764 = vand.u32 %v1763, 4294901760
        %1765 = vmatmul.mubr.f32.gmra.mrb[0].mxu0 %v1764
        %v1766 = vpop.f32.mrb[0].mxu0
        %v1767 = vadd.f32 0.0, %v1766
        %v1768 = vpop.f32.mrb[0].mxu0
        %v1769 = vadd.f32 0.0, %v1768
        %1770 = vmatprep.mubr.f32.mxu0 0.0
        %v1771 = vand.u32 %v212, 4294901760
        %v1772 = vsub.f32 %v212, %v1771
        %v1773 = vand.u32 %v1772, 4294901760
        %v1774 = vsub.f32 %v1772, %v1773
        %v1775 = vand.u32 %v1774, 4294901760
        %1776 = vmatmul.mubr.f32.gmra.mrb[0].mxu0 %v1775
        %v1777 = vpop.f32.mrb[0].mxu0
        %v1778 = vadd.f32 0.0, %v1777
        %v1779 = vpop.f32.mrb[0].mxu0
        %v1780 = vadd.f32 0.0, %v1779
        %1781 = vmatprep.mubr.f32.mxu0 0.0
        %v1782 = vand.u32 %v215, 4294901760
        %v1783 = vsub.f32 %v215, %v1782
        %v1784 = vand.u32 %v1783, 4294901760
        %v1785 = vsub.f32 %v1783, %v1784
        %v1786 = vand.u32 %v1785, 4294901760
        %1787 = vmatmul.mubr.f32.gmra.mrb[0].mxu0 %v1786
        %v1788 = vpop.f32.mrb[0].mxu0
        %v1789 = vadd.f32 0.0, %v1788
        %v1790 = vpop.f32.mrb[0].mxu0
        %v1791 = vadd.f32 0.0, %v1790
        %1792 = vdwg.mxu0
        %v1793 = vand.u32 %v169, 4294901760
        %v1794 = vsub.f32 %v169, %v1793
        %v1795 = vand.u32 %v1794, 4294901760
        %v1796 = vsub.f32 %v1794, %v1795
        %v1797 = vand.u32 %v1796, 4294901760
        %1798 = vmatprep.subr.mxu0 %v1797
        %v1799 = vand.u32 %v168, 4294901760
        %v1800 = vsub.f32 %v168, %v1799
        %v1801 = vand.u32 %v1800, 4294901760
        %v1802 = vsub.f32 %v1800, %v1801
        %v1803 = vand.u32 %v1802, 4294901760
        %1804 = vmatpush1.msra.mxu0 %v1803
        %v1805 = vand.u32 %v177, 4294901760
        %v1806 = vsub.f32 %v177, %v1805
        %v1807 = vand.u32 %v1806, 4294901760
        %v1808 = vsub.f32 %v1806, %v1807
        %v1809 = vand.u32 %v1808, 4294901760
        %1810 = vmatprep.subr.mxu0 %v1809
        %v1811 = vand.u32 %v176, 4294901760
        %v1812 = vsub.f32 %v176, %v1811
        %v1813 = vand.u32 %v1812, 4294901760
        %v1814 = vsub.f32 %v1812, %v1813
        %v1815 = vand.u32 %v1814, 4294901760
        %1816 = vmatpush1.msra.mxu0 %v1815
        %v1817 = vand.u32 %v185, 4294901760
        %v1818 = vsub.f32 %v185, %v1817
        %v1819 = vand.u32 %v1818, 4294901760
        %v1820 = vsub.f32 %v1818, %v1819
        %v1821 = vand.u32 %v1820, 4294901760
        %1822 = vmatprep.subr.mxu0 %v1821
        %v1823 = vand.u32 %v184, 4294901760
        %v1824 = vsub.f32 %v184, %v1823
        %v1825 = vand.u32 %v1824, 4294901760
        %v1826 = vsub.f32 %v1824, %v1825
        %v1827 = vand.u32 %v1826, 4294901760
        %1828 = vmatpush1.msra.mxu0 %v1827
        %v1829 = vand.u32 %v193, 4294901760
        %v1830 = vsub.f32 %v193, %v1829
        %v1831 = vand.u32 %v1830, 4294901760
        %v1832 = vsub.f32 %v1830, %v1831
        %v1833 = vand.u32 %v1832, 4294901760
        %1834 = vmatprep.subr.mxu0 %v1833
        %v1835 = vand.u32 %v192, 4294901760
        %v1836 = vsub.f32 %v192, %v1835
        %v1837 = vand.u32 %v1836, 4294901760
        %v1838 = vsub.f32 %v1836, %v1837
        %v1839 = vand.u32 %v1838, 4294901760
        %1840 = vmatpush1.msra.mxu0 %v1839
        %v1841 = vand.u32 %v234, 4294901760
        %v1842 = vsub.f32 %v234, %v1841
        %v1843 = vand.u32 %v1842, 4294901760
        %v1844 = vsub.f32 %v1842, %v1843
        %v1845 = vand.u32 %v1844, 4294901760
        %1846 = vmatprep.subr.mxu0 %v1845
        %v1847 = vand.u32 %v231, 4294901760
        %v1848 = vsub.f32 %v231, %v1847
        %v1849 = vand.u32 %v1848, 4294901760
        %v1850 = vsub.f32 %v1848, %v1849
        %v1851 = vand.u32 %v1850, 4294901760
        %1852 = vmatpush1.msra.mxu0 %v1851
        %1853 = vmatprep.subr.mxu0 0.0
        %1854 = vmatpush1.msra.mxu0 0.0
        %1855 = vmatprep.subr.mxu0 0.0
        %1856 = vmatpush1.msra.mxu0 0.0
        %1857 = vmatprep.subr.mxu0 0.0
        %1858 = vmatpush1.msra.mxu0 0.0
        %1859 = vmatprep.subr.mxu0 0.0
        %1860 = vmatpush1.msra.mxu0 0.0
        %1861 = vmatprep.subr.mxu0 0.0
        %1862 = vmatpush1.msra.mxu0 0.0
        %1863 = vmatprep.subr.mxu0 0.0
        %1864 = vmatpush1.msra.mxu0 0.0
        %1865 = vmatprep.subr.mxu0 0.0
        %1866 = vmatpush1.msra.mxu0 0.0
        %1867 = vmatprep.subr.mxu0 0.0
        %1868 = vmatpush1.msra.mxu0 0.0
        %1869 = vmatprep.subr.mxu0 0.0
        %1870 = vmatpush1.msra.mxu0 0.0
        %1871 = vmatprep.subr.mxu0 0.0
        %1872 = vmatpush1.msra.mxu0 0.0
        %1873 = vmatprep.subr.mxu0 0.0
        %1874 = vmatpush1.msra.mxu0 0.0
        %1875 = vmatprep.subr.mxu0 0.0
        %1876 = vmatpush1.msra.mxu0 0.0
        %1877 = vmatprep.subr.mxu0 0.0
        %1878 = vmatpush1.msra.mxu0 0.0
        %1879 = vmatprep.subr.mxu0 0.0
        %1880 = vmatpush1.msra.mxu0 0.0
        %1881 = vmatprep.subr.mxu0 0.0
        %1882 = vmatpush1.msra.mxu0 0.0
        %1883 = vmatprep.subr.mxu0 0.0
        %1884 = vmatpush1.msra.mxu0 0.0
        %1885 = vmatprep.subr.mxu0 0.0
        %1886 = vmatpush1.msra.mxu0 0.0
        %1887 = vmatprep.subr.mxu0 0.0
        %1888 = vmatpush1.msra.mxu0 0.0
        %1889 = vmatprep.subr.mxu0 0.0
        %1890 = vmatpush1.msra.mxu0 0.0
        %1891 = vmatprep.subr.mxu0 0.0
        %1892 = vmatpush1.msra.mxu0 0.0
        %1893 = vmatprep.subr.mxu0 0.0
        %1894 = vmatpush1.msra.mxu0 0.0
        %1895 = vmatprep.subr.mxu0 0.0
        %1896 = vmatpush1.msra.mxu0 0.0
        %1897 = vmatprep.subr.mxu0 0.0
        %1898 = vmatpush1.msra.mxu0 0.0
        %1899 = vmatprep.subr.mxu0 0.0
        %1900 = vmatpush1.msra.mxu0 0.0
        %1901 = vmatprep.subr.mxu0 0.0
        %1902 = vmatpush1.msra.mxu0 0.0
        %1903 = vmatprep.subr.mxu0 0.0
        %1904 = vmatpush1.msra.mxu0 0.0
        %1905 = vmatprep.subr.mxu0 0.0
        %1906 = vmatpush1.msra.mxu0 0.0
        %1907 = vmatprep.mubr.f32.mxu0 0.0
        %v1908 = vand.u32 %v206, 4294901760
        %1909 = vmatmul.mubr.f32.gmra.mrb[0].mxu0 %v1908
        %v1910 = vpop.f32.mrb[0].mxu0
        %v1911 = vadd.f32 %v1756, %v1910
        %v1912 = vpop.f32.mrb[0].mxu0
        %v1913 = vadd.f32 %v1758, %v1912
        %1914 = vmatprep.mubr.f32.mxu0 0.0
        %v1915 = vand.u32 %v209, 4294901760
        %1916 = vmatmul.mubr.f32.gmra.mrb[0].mxu0 %v1915
        %v1917 = vpop.f32.mrb[0].mxu0
        %v1918 = vadd.f32 %v1767, %v1917
        %v1919 = vpop.f32.mrb[0].mxu0
        %v1920 = vadd.f32 %v1769, %v1919
        %1921 = vmatprep.mubr.f32.mxu0 0.0
        %v1922 = vand.u32 %v212, 4294901760
        %1923 = vmatmul.mubr.f32.gmra.mrb[0].mxu0 %v1922
        %v1924 = vpop.f32.mrb[0].mxu0
        %v1925 = vadd.f32 %v1778, %v1924
        %v1926 = vpop.f32.mrb[0].mxu0
        %v1927 = vadd.f32 %v1780, %v1926
        %1928 = vmatprep.mubr.f32.mxu0 0.0
        %v1929 = vand.u32 %v215, 4294901760
        %1930 = vmatmul.mubr.f32.gmra.mrb[0].mxu0 %v1929
        %v1931 = vpop.f32.mrb[0].mxu0
        %v1932 = vadd.f32 %v1789, %v1931
        %v1933 = vpop.f32.mrb[0].mxu0
        %v1934 = vadd.f32 %v1791, %v1933
        %1935 = vdwg.mxu0
        %v1936 = vand.u32 %v169, 4294901760
        %v1937 = vsub.f32 %v169, %v1936
        %1938 = vmatprep.subr.mxu0 %v1937
        %v1939 = vand.u32 %v168, 4294901760
        %v1940 = vsub.f32 %v168, %v1939
        %1941 = vmatpush1.msra.mxu0 %v1940
        %v1942 = vand.u32 %v177, 4294901760
        %v1943 = vsub.f32 %v177, %v1942
        %1944 = vmatprep.subr.mxu0 %v1943
        %v1945 = vand.u32 %v176, 4294901760
        %v1946 = vsub.f32 %v176, %v1945
        %1947 = vmatpush1.msra.mxu0 %v1946
        %v1948 = vand.u32 %v185, 4294901760
        %v1949 = vsub.f32 %v185, %v1948
        %1950 = vmatprep.subr.mxu0 %v1949
        %v1951 = vand.u32 %v184, 4294901760
        %v1952 = vsub.f32 %v184, %v1951
        %1953 = vmatpush1.msra.mxu0 %v1952
        %v1954 = vand.u32 %v193, 4294901760
        %v1955 = vsub.f32 %v193, %v1954
        %1956 = vmatprep.subr.mxu0 %v1955
        %v1957 = vand.u32 %v192, 4294901760
        %v1958 = vsub.f32 %v192, %v1957
        %1959 = vmatpush1.msra.mxu0 %v1958
        %v1960 = vand.u32 %v234, 4294901760
        %v1961 = vsub.f32 %v234, %v1960
        %1962 = vmatprep.subr.mxu0 %v1961
        %v1963 = vand.u32 %v231, 4294901760
        %v1964 = vsub.f32 %v231, %v1963
        %1965 = vmatpush1.msra.mxu0 %v1964
        %1966 = vmatprep.subr.mxu0 0.0
        %1967 = vmatpush1.msra.mxu0 0.0
        %1968 = vmatprep.subr.mxu0 0.0
        %1969 = vmatpush1.msra.mxu0 0.0
        %1970 = vmatprep.subr.mxu0 0.0
        %1971 = vmatpush1.msra.mxu0 0.0
        %1972 = vmatprep.subr.mxu0 0.0
        %1973 = vmatpush1.msra.mxu0 0.0
        %1974 = vmatprep.subr.mxu0 0.0
        %1975 = vmatpush1.msra.mxu0 0.0
        %1976 = vmatprep.subr.mxu0 0.0
        %1977 = vmatpush1.msra.mxu0 0.0
        %1978 = vmatprep.subr.mxu0 0.0
        %1979 = vmatpush1.msra.mxu0 0.0
        %1980 = vmatprep.subr.mxu0 0.0
        %1981 = vmatpush1.msra.mxu0 0.0
        %1982 = vmatprep.subr.mxu0 0.0
        %1983 = vmatpush1.msra.mxu0 0.0
        %1984 = vmatprep.subr.mxu0 0.0
        %1985 = vmatpush1.msra.mxu0 0.0
        %1986 = vmatprep.subr.mxu0 0.0
        %1987 = vmatpush1.msra.mxu0 0.0
        %1988 = vmatprep.subr.mxu0 0.0
        %1989 = vmatpush1.msra.mxu0 0.0
        %1990 = vmatprep.subr.mxu0 0.0
        %1991 = vmatpush1.msra.mxu0 0.0
        %1992 = vmatprep.subr.mxu0 0.0
        %1993 = vmatpush1.msra.mxu0 0.0
        %1994 = vmatprep.subr.mxu0 0.0
        %1995 = vmatpush1.msra.mxu0 0.0
        %1996 = vmatprep.subr.mxu0 0.0
        %1997 = vmatpush1.msra.mxu0 0.0
        %1998 = vmatprep.subr.mxu0 0.0
        %1999 = vmatpush1.msra.mxu0 0.0
        %2000 = vmatprep.subr.mxu0 0.0
        %2001 = vmatpush1.msra.mxu0 0.0
        %2002 = vmatprep.subr.mxu0 0.0
        %2003 = vmatpush1.msra.mxu0 0.0
        %2004 = vmatprep.subr.mxu0 0.0
        %2005 = vmatpush1.msra.mxu0 0.0
        %2006 = vmatprep.subr.mxu0 0.0
        %2007 = vmatpush1.msra.mxu0 0.0
        %2008 = vmatprep.subr.mxu0 0.0
        %2009 = vmatpush1.msra.mxu0 0.0
        %2010 = vmatprep.subr.mxu0 0.0
        %2011 = vmatpush1.msra.mxu0 0.0
        %2012 = vmatprep.subr.mxu0 0.0
        %2013 = vmatpush1.msra.mxu0 0.0
        %2014 = vmatprep.subr.mxu0 0.0
        %2015 = vmatpush1.msra.mxu0 0.0
        %2016 = vmatprep.subr.mxu0 0.0
        %2017 = vmatpush1.msra.mxu0 0.0
        %2018 = vmatprep.subr.mxu0 0.0
        %2019 = vmatpush1.msra.mxu0 0.0
        %2020 = vmatprep.mubr.f32.mxu0 0.0
        %v2021 = vand.u32 %v206, 4294901760
        %v2022 = vsub.f32 %v206, %v2021
        %2023 = vmatmul.mubr.f32.gmra.mrb[0].mxu0 %v2022
        %v2024 = vpop.f32.mrb[0].mxu0
        %v2025 = vadd.f32 %v1911, %v2024
        %v2026 = vpop.f32.mrb[0].mxu0
        %v2027 = vadd.f32 %v1913, %v2026
        %2028 = vmatprep.mubr.f32.mxu0 0.0
        %v2029 = vand.u32 %v209, 4294901760
        %v2030 = vsub.f32 %v209, %v2029
        %2031 = vmatmul.mubr.f32.gmra.mrb[0].mxu0 %v2030
        %v2032 = vpop.f32.mrb[0].mxu0
        %v2033 = vadd.f32 %v1918, %v2032
        %v2034 = vpop.f32.mrb[0].mxu0
        %v2035 = vadd.f32 %v1920, %v2034
        %2036 = vmatprep.mubr.f32.mxu0 0.0
        %v2037 = vand.u32 %v212, 4294901760
        %v2038 = vsub.f32 %v212, %v2037
        %2039 = vmatmul.mubr.f32.gmra.mrb[0].mxu0 %v2038
        %v2040 = vpop.f32.mrb[0].mxu0
        %v2041 = vadd.f32 %v1925, %v2040
        %v2042 = vpop.f32.mrb[0].mxu0
        %v2043 = vadd.f32 %v1927, %v2042
        %2044 = vmatprep.mubr.f32.mxu0 0.0
        %v2045 = vand.u32 %v215, 4294901760
        %v2046 = vsub.f32 %v215, %v2045
        %2047 = vmatmul.mubr.f32.gmra.mrb[0].mxu0 %v2046
        %v2048 = vpop.f32.mrb[0].mxu0
        %v2049 = vadd.f32 %v1932, %v2048
        %v2050 = vpop.f32.mrb[0].mxu0
        %v2051 = vadd.f32 %v1934, %v2050
        %2052 = vdwg.mxu0
        %v2053 = vand.u32 %v169, 4294901760
        %2054 = vmatprep.subr.mxu0 %v2053
        %v2055 = vand.u32 %v168, 4294901760
        %2056 = vmatpush1.msra.mxu0 %v2055
        %v2057 = vand.u32 %v177, 4294901760
        %2058 = vmatprep.subr.mxu0 %v2057
        %v2059 = vand.u32 %v176, 4294901760
        %2060 = vmatpush1.msra.mxu0 %v2059
        %v2061 = vand.u32 %v185, 4294901760
        %2062 = vmatprep.subr.mxu0 %v2061
        %v2063 = vand.u32 %v184, 4294901760
        %2064 = vmatpush1.msra.mxu0 %v2063
        %v2065 = vand.u32 %v193, 4294901760
        %2066 = vmatprep.subr.mxu0 %v2065
        %v2067 = vand.u32 %v192, 4294901760
        %2068 = vmatpush1.msra.mxu0 %v2067
        %v2069 = vand.u32 %v234, 4294901760
        %2070 = vmatprep.subr.mxu0 %v2069
        %v2071 = vand.u32 %v231, 4294901760
        %2072 = vmatpush1.msra.mxu0 %v2071
        %2073 = vmatprep.subr.mxu0 0.0
        %2074 = vmatpush1.msra.mxu0 0.0
        %2075 = vmatprep.subr.mxu0 0.0
        %2076 = vmatpush1.msra.mxu0 0.0
        %2077 = vmatprep.subr.mxu0 0.0
        %2078 = vmatpush1.msra.mxu0 0.0
        %2079 = vmatprep.subr.mxu0 0.0
        %2080 = vmatpush1.msra.mxu0 0.0
        %2081 = vmatprep.subr.mxu0 0.0
        %2082 = vmatpush1.msra.mxu0 0.0
        %2083 = vmatprep.subr.mxu0 0.0
        %2084 = vmatpush1.msra.mxu0 0.0
        %2085 = vmatprep.subr.mxu0 0.0
        %2086 = vmatpush1.msra.mxu0 0.0
        %2087 = vmatprep.subr.mxu0 0.0
        %2088 = vmatpush1.msra.mxu0 0.0
        %2089 = vmatprep.subr.mxu0 0.0
        %2090 = vmatpush1.msra.mxu0 0.0
        %2091 = vmatprep.subr.mxu0 0.0
        %2092 = vmatpush1.msra.mxu0 0.0
        %2093 = vmatprep.subr.mxu0 0.0
        %2094 = vmatpush1.msra.mxu0 0.0
        %2095 = vmatprep.subr.mxu0 0.0
        %2096 = vmatpush1.msra.mxu0 0.0
        %2097 = vmatprep.subr.mxu0 0.0
        %2098 = vmatpush1.msra.mxu0 0.0
        %2099 = vmatprep.subr.mxu0 0.0
        %2100 = vmatpush1.msra.mxu0 0.0
        %2101 = vmatprep.subr.mxu0 0.0
        %2102 = vmatpush1.msra.mxu0 0.0
        %2103 = vmatprep.subr.mxu0 0.0
        %2104 = vmatpush1.msra.mxu0 0.0
        %2105 = vmatprep.subr.mxu0 0.0
        %2106 = vmatpush1.msra.mxu0 0.0
        %2107 = vmatprep.subr.mxu0 0.0
        %2108 = vmatpush1.msra.mxu0 0.0
        %2109 = vmatprep.subr.mxu0 0.0
        %2110 = vmatpush1.msra.mxu0 0.0
        %2111 = vmatprep.subr.mxu0 0.0
        %2112 = vmatpush1.msra.mxu0 0.0
        %2113 = vmatprep.subr.mxu0 0.0
        %2114 = vmatpush1.msra.mxu0 0.0
        %2115 = vmatprep.subr.mxu0 0.0
        %2116 = vmatpush1.msra.mxu0 0.0
        %2117 = vmatprep.subr.mxu0 0.0
        %2118 = vmatpush1.msra.mxu0 0.0
        %2119 = vmatprep.subr.mxu0 0.0
        %2120 = vmatpush1.msra.mxu0 0.0
        %2121 = vmatprep.subr.mxu0 0.0
        %2122 = vmatpush1.msra.mxu0 0.0
        %2123 = vmatprep.subr.mxu0 0.0
        %2124 = vmatpush1.msra.mxu0 0.0
        %2125 = vmatprep.subr.mxu0 0.0
        %2126 = vmatpush1.msra.mxu0 0.0
        %2127 = vmatprep.mubr.f32.mxu0 0.0
        %v2128 = vand.u32 %v206, 4294901760
        %v2129 = vsub.f32 %v206, %v2128
        %v2130 = vand.u32 %v2129, 4294901760
        %2131 = vmatmul.mubr.f32.gmra.mrb[0].mxu0 %v2130
        %v2132 = vpop.f32.mrb[0].mxu0
        %v2133 = vadd.f32 %v2025, %v2132
        %v2134 = vpop.f32.mrb[0].mxu0
        %v2135 = vadd.f32 %v2027, %v2134
        %2136 = vmatprep.mubr.f32.mxu0 0.0
        %v2137 = vand.u32 %v209, 4294901760
        %v2138 = vsub.f32 %v209, %v2137
        %v2139 = vand.u32 %v2138, 4294901760
        %2140 = vmatmul.mubr.f32.gmra.mrb[0].mxu0 %v2139
        %v2141 = vpop.f32.mrb[0].mxu0
        %v2142 = vadd.f32 %v2033, %v2141
        %v2143 = vpop.f32.mrb[0].mxu0
        %v2144 = vadd.f32 %v2035, %v2143
        %2145 = vmatprep.mubr.f32.mxu0 0.0
        %v2146 = vand.u32 %v212, 4294901760
        %v2147 = vsub.f32 %v212, %v2146
        %v2148 = vand.u32 %v2147, 4294901760
        %2149 = vmatmul.mubr.f32.gmra.mrb[0].mxu0 %v2148
        %v2150 = vpop.f32.mrb[0].mxu0
        %v2151 = vadd.f32 %v2041, %v2150
        %v2152 = vpop.f32.mrb[0].mxu0
        %v2153 = vadd.f32 %v2043, %v2152
        %2154 = vmatprep.mubr.f32.mxu0 0.0
        %v2155 = vand.u32 %v215, 4294901760
        %v2156 = vsub.f32 %v215, %v2155
        %v2157 = vand.u32 %v2156, 4294901760
        %2158 = vmatmul.mubr.f32.gmra.mrb[0].mxu0 %v2157
        %v2159 = vpop.f32.mrb[0].mxu0
        %v2160 = vadd.f32 %v2049, %v2159
        %v2161 = vpop.f32.mrb[0].mxu0
        %v2162 = vadd.f32 %v2051, %v2161
        %2163 = vdwg.mxu0
        %v2164 = vand.u32 %v169, 4294901760
        %v2165 = vsub.f32 %v169, %v2164
        %v2166 = vand.u32 %v2165, 4294901760
        %2167 = vmatprep.subr.mxu0 %v2166
        %v2168 = vand.u32 %v168, 4294901760
        %v2169 = vsub.f32 %v168, %v2168
        %v2170 = vand.u32 %v2169, 4294901760
        %2171 = vmatpush1.msra.mxu0 %v2170
        %v2172 = vand.u32 %v177, 4294901760
        %v2173 = vsub.f32 %v177, %v2172
        %v2174 = vand.u32 %v2173, 4294901760
        %2175 = vmatprep.subr.mxu0 %v2174
        %v2176 = vand.u32 %v176, 4294901760
        %v2177 = vsub.f32 %v176, %v2176
        %v2178 = vand.u32 %v2177, 4294901760
        %2179 = vmatpush1.msra.mxu0 %v2178
        %v2180 = vand.u32 %v185, 4294901760
        %v2181 = vsub.f32 %v185, %v2180
        %v2182 = vand.u32 %v2181, 4294901760
        %2183 = vmatprep.subr.mxu0 %v2182
        %v2184 = vand.u32 %v184, 4294901760
        %v2185 = vsub.f32 %v184, %v2184
        %v2186 = vand.u32 %v2185, 4294901760
        %2187 = vmatpush1.msra.mxu0 %v2186
        %v2188 = vand.u32 %v193, 4294901760
        %v2189 = vsub.f32 %v193, %v2188
        %v2190 = vand.u32 %v2189, 4294901760
        %2191 = vmatprep.subr.mxu0 %v2190
        %v2192 = vand.u32 %v192, 4294901760
        %v2193 = vsub.f32 %v192, %v2192
        %v2194 = vand.u32 %v2193, 4294901760
        %2195 = vmatpush1.msra.mxu0 %v2194
        %v2196 = vand.u32 %v234, 4294901760
        %v2197 = vsub.f32 %v234, %v2196
        %v2198 = vand.u32 %v2197, 4294901760
        %2199 = vmatprep.subr.mxu0 %v2198
        %v2200 = vand.u32 %v231, 4294901760
        %v2201 = vsub.f32 %v231, %v2200
        %v2202 = vand.u32 %v2201, 4294901760
        %2203 = vmatpush1.msra.mxu0 %v2202
        %2204 = vmatprep.subr.mxu0 0.0
        %2205 = vmatpush1.msra.mxu0 0.0
        %2206 = vmatprep.subr.mxu0 0.0
        %2207 = vmatpush1.msra.mxu0 0.0
        %2208 = vmatprep.subr.mxu0 0.0
        %2209 = vmatpush1.msra.mxu0 0.0
        %2210 = vmatprep.subr.mxu0 0.0
        %2211 = vmatpush1.msra.mxu0 0.0
        %2212 = vmatprep.subr.mxu0 0.0
        %2213 = vmatpush1.msra.mxu0 0.0
        %2214 = vmatprep.subr.mxu0 0.0
        %2215 = vmatpush1.msra.mxu0 0.0
        %2216 = vmatprep.subr.mxu0 0.0
        %2217 = vmatpush1.msra.mxu0 0.0
        %2218 = vmatprep.subr.mxu0 0.0
        %2219 = vmatpush1.msra.mxu0 0.0
        %2220 = vmatprep.subr.mxu0 0.0
        %2221 = vmatpush1.msra.mxu0 0.0
        %2222 = vmatprep.subr.mxu0 0.0
        %2223 = vmatpush1.msra.mxu0 0.0
        %2224 = vmatprep.subr.mxu0 0.0
        %2225 = vmatpush1.msra.mxu0 0.0
        %2226 = vmatprep.subr.mxu0 0.0
        %2227 = vmatpush1.msra.mxu0 0.0
        %2228 = vmatprep.subr.mxu0 0.0
        %2229 = vmatpush1.msra.mxu0 0.0
        %2230 = vmatprep.subr.mxu0 0.0
        %2231 = vmatpush1.msra.mxu0 0.0
        %2232 = vmatprep.subr.mxu0 0.0
        %2233 = vmatpush1.msra.mxu0 0.0
        %2234 = vmatprep.subr.mxu0 0.0
        %2235 = vmatpush1.msra.mxu0 0.0
        %2236 = vmatprep.subr.mxu0 0.0
        %2237 = vmatpush1.msra.mxu0 0.0
        %2238 = vmatprep.subr.mxu0 0.0
        %2239 = vmatpush1.msra.mxu0 0.0
        %2240 = vmatprep.subr.mxu0 0.0
        %2241 = vmatpush1.msra.mxu0 0.0
        %2242 = vmatprep.subr.mxu0 0.0
        %2243 = vmatpush1.msra.mxu0 0.0
        %2244 = vmatprep.subr.mxu0 0.0
        %2245 = vmatpush1.msra.mxu0 0.0
        %2246 = vmatprep.subr.mxu0 0.0
        %2247 = vmatpush1.msra.mxu0 0.0
        %2248 = vmatprep.subr.mxu0 0.0
        %2249 = vmatpush1.msra.mxu0 0.0
        %2250 = vmatprep.subr.mxu0 0.0
        %2251 = vmatpush1.msra.mxu0 0.0
        %2252 = vmatprep.subr.mxu0 0.0
        %2253 = vmatpush1.msra.mxu0 0.0
        %2254 = vmatprep.subr.mxu0 0.0
        %2255 = vmatpush1.msra.mxu0 0.0
        %2256 = vmatprep.subr.mxu0 0.0
        %2257 = vmatpush1.msra.mxu0 0.0
        %2258 = vmatprep.mubr.f32.mxu0 0.0
        %v2259 = vand.u32 %v206, 4294901760
        %2260 = vmatmul.mubr.f32.gmra.mrb[0].mxu0 %v2259
        %v2261 = vpop.f32.mrb[0].mxu0
        %v2262 = vadd.f32 %v2133, %v2261
        %v2263 = vpop.f32.mrb[0].mxu0
        %v2264 = vadd.f32 %v2135, %v2263
        %2265 = vmatprep.mubr.f32.mxu0 0.0
        %v2266 = vand.u32 %v209, 4294901760
        %2267 = vmatmul.mubr.f32.gmra.mrb[0].mxu0 %v2266
        %v2268 = vpop.f32.mrb[0].mxu0
        %v2269 = vadd.f32 %v2142, %v2268
        %v2270 = vpop.f32.mrb[0].mxu0
        %v2271 = vadd.f32 %v2144, %v2270
        %2272 = vmatprep.mubr.f32.mxu0 0.0
        %v2273 = vand.u32 %v212, 4294901760
        %2274 = vmatmul.mubr.f32.gmra.mrb[0].mxu0 %v2273
        %v2275 = vpop.f32.mrb[0].mxu0
        %v2276 = vadd.f32 %v2151, %v2275
        %v2277 = vpop.f32.mrb[0].mxu0
        %v2278 = vadd.f32 %v2153, %v2277
        %2279 = vmatprep.mubr.f32.mxu0 0.0
        %v2280 = vand.u32 %v215, 4294901760
        %2281 = vmatmul.mubr.f32.gmra.mrb[0].mxu0 %v2280
        %v2282 = vpop.f32.mrb[0].mxu0
        %v2283 = vadd.f32 %v2160, %v2282
        %v2284 = vpop.f32.mrb[0].mxu0
        %v2285 = vadd.f32 %v2162, %v2284
        %2286 = vdwg.mxu0
        %v2287 = vand.u32 %v169, 4294901760
        %2288 = vmatprep.subr.mxu0 %v2287
        %v2289 = vand.u32 %v168, 4294901760
        %2290 = vmatpush1.msra.mxu0 %v2289
        %v2291 = vand.u32 %v177, 4294901760
        %2292 = vmatprep.subr.mxu0 %v2291
        %v2293 = vand.u32 %v176, 4294901760
        %2294 = vmatpush1.msra.mxu0 %v2293
        %v2295 = vand.u32 %v185, 4294901760
        %2296 = vmatprep.subr.mxu0 %v2295
        %v2297 = vand.u32 %v184, 4294901760
        %2298 = vmatpush1.msra.mxu0 %v2297
        %v2299 = vand.u32 %v193, 4294901760
        %2300 = vmatprep.subr.mxu0 %v2299
        %v2301 = vand.u32 %v192, 4294901760
        %2302 = vmatpush1.msra.mxu0 %v2301
        %v2303 = vand.u32 %v234, 4294901760
        %2304 = vmatprep.subr.mxu0 %v2303
        %v2305 = vand.u32 %v231, 4294901760
        %2306 = vmatpush1.msra.mxu0 %v2305
        %2307 = vmatprep.subr.mxu0 0.0
        %2308 = vmatpush1.msra.mxu0 0.0
        %2309 = vmatprep.subr.mxu0 0.0
        %2310 = vmatpush1.msra.mxu0 0.0
        %2311 = vmatprep.subr.mxu0 0.0
        %2312 = vmatpush1.msra.mxu0 0.0
        %2313 = vmatprep.subr.mxu0 0.0
        %2314 = vmatpush1.msra.mxu0 0.0
        %2315 = vmatprep.subr.mxu0 0.0
        %2316 = vmatpush1.msra.mxu0 0.0
        %2317 = vmatprep.subr.mxu0 0.0
        %2318 = vmatpush1.msra.mxu0 0.0
        %2319 = vmatprep.subr.mxu0 0.0
        %2320 = vmatpush1.msra.mxu0 0.0
        %2321 = vmatprep.subr.mxu0 0.0
        %2322 = vmatpush1.msra.mxu0 0.0
        %2323 = vmatprep.subr.mxu0 0.0
        %2324 = vmatpush1.msra.mxu0 0.0
        %2325 = vmatprep.subr.mxu0 0.0
        %2326 = vmatpush1.msra.mxu0 0.0
        %2327 = vmatprep.subr.mxu0 0.0
        %2328 = vmatpush1.msra.mxu0 0.0
        %2329 = vmatprep.subr.mxu0 0.0
        %2330 = vmatpush1.msra.mxu0 0.0
        %2331 = vmatprep.subr.mxu0 0.0
        %2332 = vmatpush1.msra.mxu0 0.0
        %2333 = vmatprep.subr.mxu0 0.0
        %2334 = vmatpush1.msra.mxu0 0.0
        %2335 = vmatprep.subr.mxu0 0.0
        %2336 = vmatpush1.msra.mxu0 0.0
        %2337 = vmatprep.subr.mxu0 0.0
        %2338 = vmatpush1.msra.mxu0 0.0
        %2339 = vmatprep.subr.mxu0 0.0
        %2340 = vmatpush1.msra.mxu0 0.0
        %2341 = vmatprep.subr.mxu0 0.0
        %2342 = vmatpush1.msra.mxu0 0.0
        %2343 = vmatprep.subr.mxu0 0.0
        %2344 = vmatpush1.msra.mxu0 0.0
        %2345 = vmatprep.subr.mxu0 0.0
        %2346 = vmatpush1.msra.mxu0 0.0
        %2347 = vmatprep.subr.mxu0 0.0
        %2348 = vmatpush1.msra.mxu0 0.0
        %2349 = vmatprep.subr.mxu0 0.0
        %2350 = vmatpush1.msra.mxu0 0.0
        %2351 = vmatprep.subr.mxu0 0.0
        %2352 = vmatpush1.msra.mxu0 0.0
        %2353 = vmatprep.subr.mxu0 0.0
        %2354 = vmatpush1.msra.mxu0 0.0
        %2355 = vmatprep.subr.mxu0 0.0
        %2356 = vmatpush1.msra.mxu0 0.0
        %2357 = vmatprep.subr.mxu0 0.0
        %2358 = vmatpush1.msra.mxu0 0.0
        %2359 = vmatprep.subr.mxu0 0.0
        %2360 = vmatpush1.msra.mxu0 0.0
        %2361 = vmatprep.mubr.f32.mxu0 0.0
        %v2362 = vand.u32 %v206, 4294901760
        %2363 = vmatmul.mubr.f32.gmra.mrb[0].mxu0 %v2362
        %v2364 = vpop.f32.mrb[0].mxu0
        %v2365 = vadd.f32 %v2262, %v2364
        %v2366 = vpop.f32.mrb[0].mxu0
        %v2367 = vadd.f32 %v2264, %v2366
        %2368 = vmatprep.mubr.f32.mxu0 0.0
        %v2369 = vand.u32 %v209, 4294901760
        %2370 = vmatmul.mubr.f32.gmra.mrb[0].mxu0 %v2369
        %v2371 = vpop.f32.mrb[0].mxu0
        %v2372 = vadd.f32 %v2269, %v2371
        %v2373 = vpop.f32.mrb[0].mxu0
        %v2374 = vadd.f32 %v2271, %v2373
        %2375 = vmatprep.mubr.f32.mxu0 0.0
        %v2376 = vand.u32 %v212, 4294901760
        %2377 = vmatmul.mubr.f32.gmra.mrb[0].mxu0 %v2376
        %v2378 = vpop.f32.mrb[0].mxu0
        %v2379 = vadd.f32 %v2276, %v2378
        %v2380 = vpop.f32.mrb[0].mxu0
        %v2381 = vadd.f32 %v2278, %v2380
        %2382 = vmatprep.mubr.f32.mxu0 0.0
        %v2383 = vand.u32 %v215, 4294901760
        %2384 = vmatmul.mubr.f32.gmra.mrb[0].mxu0 %v2383
        %v2385 = vpop.f32.mrb[0].mxu0
        %v2386 = vadd.f32 %v2283, %v2385
        %v2387 = vpop.f32.mrb[0].mxu0
        %v2388 = vadd.f32 %v2285, %v2387
        %2389 = vdwg.mxu0
        %v2390 = vand.u32 %v171, 4294901760
        %2391 = vmatprep.subr.mxu0 %v2390
        %v2392 = vand.u32 %v170, 4294901760
        %2393 = vmatpush1.msra.mxu0 %v2392
        %v2394 = vand.u32 %v179, 4294901760
        %2395 = vmatprep.subr.mxu0 %v2394
        %v2396 = vand.u32 %v178, 4294901760
        %2397 = vmatpush1.msra.mxu0 %v2396
        %v2398 = vand.u32 %v187, 4294901760
        %2399 = vmatprep.subr.mxu0 %v2398
        %v2400 = vand.u32 %v186, 4294901760
        %2401 = vmatpush1.msra.mxu0 %v2400
        %v2402 = vand.u32 %v195, 4294901760
        %2403 = vmatprep.subr.mxu0 %v2402
        %v2404 = vand.u32 %v194, 4294901760
        %2405 = vmatpush1.msra.mxu0 %v2404
        %v2406 = vand.u32 %v240, 4294901760
        %2407 = vmatprep.subr.mxu0 %v2406
        %v2408 = vand.u32 %v237, 4294901760
        %2409 = vmatpush1.msra.mxu0 %v2408
        %2410 = vmatprep.subr.mxu0 0.0
        %2411 = vmatpush1.msra.mxu0 0.0
        %2412 = vmatprep.subr.mxu0 0.0
        %2413 = vmatpush1.msra.mxu0 0.0
        %2414 = vmatprep.subr.mxu0 0.0
        %2415 = vmatpush1.msra.mxu0 0.0
        %2416 = vmatprep.subr.mxu0 0.0
        %2417 = vmatpush1.msra.mxu0 0.0
        %2418 = vmatprep.subr.mxu0 0.0
        %2419 = vmatpush1.msra.mxu0 0.0
        %2420 = vmatprep.subr.mxu0 0.0
        %2421 = vmatpush1.msra.mxu0 0.0
        %2422 = vmatprep.subr.mxu0 0.0
        %2423 = vmatpush1.msra.mxu0 0.0
        %2424 = vmatprep.subr.mxu0 0.0
        %2425 = vmatpush1.msra.mxu0 0.0
        %2426 = vmatprep.subr.mxu0 0.0
        %2427 = vmatpush1.msra.mxu0 0.0
        %2428 = vmatprep.subr.mxu0 0.0
        %2429 = vmatpush1.msra.mxu0 0.0
        %2430 = vmatprep.subr.mxu0 0.0
        %2431 = vmatpush1.msra.mxu0 0.0
        %2432 = vmatprep.subr.mxu0 0.0
        %2433 = vmatpush1.msra.mxu0 0.0
        %2434 = vmatprep.subr.mxu0 0.0
        %2435 = vmatpush1.msra.mxu0 0.0
        %2436 = vmatprep.subr.mxu0 0.0
        %2437 = vmatpush1.msra.mxu0 0.0
        %2438 = vmatprep.subr.mxu0 0.0
        %2439 = vmatpush1.msra.mxu0 0.0
        %2440 = vmatprep.subr.mxu0 0.0
        %2441 = vmatpush1.msra.mxu0 0.0
        %2442 = vmatprep.subr.mxu0 0.0
        %2443 = vmatpush1.msra.mxu0 0.0
        %2444 = vmatprep.subr.mxu0 0.0
        %2445 = vmatpush1.msra.mxu0 0.0
        %2446 = vmatprep.subr.mxu0 0.0
        %2447 = vmatpush1.msra.mxu0 0.0
        %2448 = vmatprep.subr.mxu0 0.0
        %2449 = vmatpush1.msra.mxu0 0.0
        %2450 = vmatprep.subr.mxu0 0.0
        %2451 = vmatpush1.msra.mxu0 0.0
        %2452 = vmatprep.subr.mxu0 0.0
        %2453 = vmatpush1.msra.mxu0 0.0
        %2454 = vmatprep.subr.mxu0 0.0
        %2455 = vmatpush1.msra.mxu0 0.0
        %2456 = vmatprep.subr.mxu0 0.0
        %2457 = vmatpush1.msra.mxu0 0.0
        %2458 = vmatprep.subr.mxu0 0.0
        %2459 = vmatpush1.msra.mxu0 0.0
        %2460 = vmatprep.subr.mxu0 0.0
        %2461 = vmatpush1.msra.mxu0 0.0
        %2462 = vmatprep.subr.mxu0 0.0
        %2463 = vmatpush1.msra.mxu0 0.0
        %2464 = vmatprep.mubr.f32.mxu0 0.0
        %v2465 = vand.u32 %v206, 4294901760
        %v2466 = vsub.f32 %v206, %v2465
        %v2467 = vand.u32 %v2466, 4294901760
        %v2468 = vsub.f32 %v2466, %v2467
        %v2469 = vand.u32 %v2468, 4294901760
        %2470 = vmatmul.mubr.f32.gmra.mrb[0].mxu0 %v2469
        %v2471 = vpop.f32.mrb[0].mxu0
        %v2472 = vadd.f32 0.0, %v2471
        %v2473 = vpop.f32.mrb[0].mxu0
        %v2474 = vadd.f32 0.0, %v2473
        %2475 = vmatprep.mubr.f32.mxu0 0.0
        %v2476 = vand.u32 %v209, 4294901760
        %v2477 = vsub.f32 %v209, %v2476
        %v2478 = vand.u32 %v2477, 4294901760
        %v2479 = vsub.f32 %v2477, %v2478
        %v2480 = vand.u32 %v2479, 4294901760
        %2481 = vmatmul.mubr.f32.gmra.mrb[0].mxu0 %v2480
        %v2482 = vpop.f32.mrb[0].mxu0
        %v2483 = vadd.f32 0.0, %v2482
        %v2484 = vpop.f32.mrb[0].mxu0
        %v2485 = vadd.f32 0.0, %v2484
        %2486 = vmatprep.mubr.f32.mxu0 0.0
        %v2487 = vand.u32 %v212, 4294901760
        %v2488 = vsub.f32 %v212, %v2487
        %v2489 = vand.u32 %v2488, 4294901760
        %v2490 = vsub.f32 %v2488, %v2489
        %v2491 = vand.u32 %v2490, 4294901760
        %2492 = vmatmul.mubr.f32.gmra.mrb[0].mxu0 %v2491
        %v2493 = vpop.f32.mrb[0].mxu0
        %v2494 = vadd.f32 0.0, %v2493
        %v2495 = vpop.f32.mrb[0].mxu0
        %v2496 = vadd.f32 0.0, %v2495
        %2497 = vmatprep.mubr.f32.mxu0 0.0
        %v2498 = vand.u32 %v215, 4294901760
        %v2499 = vsub.f32 %v215, %v2498
        %v2500 = vand.u32 %v2499, 4294901760
        %v2501 = vsub.f32 %v2499, %v2500
        %v2502 = vand.u32 %v2501, 4294901760
        %2503 = vmatmul.mubr.f32.gmra.mrb[0].mxu0 %v2502
        %v2504 = vpop.f32.mrb[0].mxu0
        %v2505 = vadd.f32 0.0, %v2504
        %v2506 = vpop.f32.mrb[0].mxu0
        %v2507 = vadd.f32 0.0, %v2506
        %2508 = vdwg.mxu0
        %v2509 = vand.u32 %v171, 4294901760
        %v2510 = vsub.f32 %v171, %v2509
        %v2511 = vand.u32 %v2510, 4294901760
        %v2512 = vsub.f32 %v2510, %v2511
        %v2513 = vand.u32 %v2512, 4294901760
        %2514 = vmatprep.subr.mxu0 %v2513
        %v2515 = vand.u32 %v170, 4294901760
        %v2516 = vsub.f32 %v170, %v2515
        %v2517 = vand.u32 %v2516, 4294901760
        %v2518 = vsub.f32 %v2516, %v2517
        %v2519 = vand.u32 %v2518, 4294901760
        %2520 = vmatpush1.msra.mxu0 %v2519
        %v2521 = vand.u32 %v179, 4294901760
        %v2522 = vsub.f32 %v179, %v2521
        %v2523 = vand.u32 %v2522, 4294901760
        %v2524 = vsub.f32 %v2522, %v2523
        %v2525 = vand.u32 %v2524, 4294901760
        %2526 = vmatprep.subr.mxu0 %v2525
        %v2527 = vand.u32 %v178, 4294901760
        %v2528 = vsub.f32 %v178, %v2527
        %v2529 = vand.u32 %v2528, 4294901760
        %v2530 = vsub.f32 %v2528, %v2529
        %v2531 = vand.u32 %v2530, 4294901760
        %2532 = vmatpush1.msra.mxu0 %v2531
        %v2533 = vand.u32 %v187, 4294901760
        %v2534 = vsub.f32 %v187, %v2533
        %v2535 = vand.u32 %v2534, 4294901760
        %v2536 = vsub.f32 %v2534, %v2535
        %v2537 = vand.u32 %v2536, 4294901760
        %2538 = vmatprep.subr.mxu0 %v2537
        %v2539 = vand.u32 %v186, 4294901760
        %v2540 = vsub.f32 %v186, %v2539
        %v2541 = vand.u32 %v2540, 4294901760
        %v2542 = vsub.f32 %v2540, %v2541
        %v2543 = vand.u32 %v2542, 4294901760
        %2544 = vmatpush1.msra.mxu0 %v2543
        %v2545 = vand.u32 %v195, 4294901760
        %v2546 = vsub.f32 %v195, %v2545
        %v2547 = vand.u32 %v2546, 4294901760
        %v2548 = vsub.f32 %v2546, %v2547
        %v2549 = vand.u32 %v2548, 4294901760
        %2550 = vmatprep.subr.mxu0 %v2549
        %v2551 = vand.u32 %v194, 4294901760
        %v2552 = vsub.f32 %v194, %v2551
        %v2553 = vand.u32 %v2552, 4294901760
        %v2554 = vsub.f32 %v2552, %v2553
        %v2555 = vand.u32 %v2554, 4294901760
        %2556 = vmatpush1.msra.mxu0 %v2555
        %v2557 = vand.u32 %v240, 4294901760
        %v2558 = vsub.f32 %v240, %v2557
        %v2559 = vand.u32 %v2558, 4294901760
        %v2560 = vsub.f32 %v2558, %v2559
        %v2561 = vand.u32 %v2560, 4294901760
        %2562 = vmatprep.subr.mxu0 %v2561
        %v2563 = vand.u32 %v237, 4294901760
        %v2564 = vsub.f32 %v237, %v2563
        %v2565 = vand.u32 %v2564, 4294901760
        %v2566 = vsub.f32 %v2564, %v2565
        %v2567 = vand.u32 %v2566, 4294901760
        %2568 = vmatpush1.msra.mxu0 %v2567
        %2569 = vmatprep.subr.mxu0 0.0
        %2570 = vmatpush1.msra.mxu0 0.0
        %2571 = vmatprep.subr.mxu0 0.0
        %2572 = vmatpush1.msra.mxu0 0.0
        %2573 = vmatprep.subr.mxu0 0.0
        %2574 = vmatpush1.msra.mxu0 0.0
        %2575 = vmatprep.subr.mxu0 0.0
        %2576 = vmatpush1.msra.mxu0 0.0
        %2577 = vmatprep.subr.mxu0 0.0
        %2578 = vmatpush1.msra.mxu0 0.0
        %2579 = vmatprep.subr.mxu0 0.0
        %2580 = vmatpush1.msra.mxu0 0.0
        %2581 = vmatprep.subr.mxu0 0.0
        %2582 = vmatpush1.msra.mxu0 0.0
        %2583 = vmatprep.subr.mxu0 0.0
        %2584 = vmatpush1.msra.mxu0 0.0
        %2585 = vmatprep.subr.mxu0 0.0
        %2586 = vmatpush1.msra.mxu0 0.0
        %2587 = vmatprep.subr.mxu0 0.0
        %2588 = vmatpush1.msra.mxu0 0.0
        %2589 = vmatprep.subr.mxu0 0.0
        %2590 = vmatpush1.msra.mxu0 0.0
        %2591 = vmatprep.subr.mxu0 0.0
        %2592 = vmatpush1.msra.mxu0 0.0
        %2593 = vmatprep.subr.mxu0 0.0
        %2594 = vmatpush1.msra.mxu0 0.0
        %2595 = vmatprep.subr.mxu0 0.0
        %2596 = vmatpush1.msra.mxu0 0.0
        %2597 = vmatprep.subr.mxu0 0.0
        %2598 = vmatpush1.msra.mxu0 0.0
        %2599 = vmatprep.subr.mxu0 0.0
        %2600 = vmatpush1.msra.mxu0 0.0
        %2601 = vmatprep.subr.mxu0 0.0
        %2602 = vmatpush1.msra.mxu0 0.0
        %2603 = vmatprep.subr.mxu0 0.0
        %2604 = vmatpush1.msra.mxu0 0.0
        %2605 = vmatprep.subr.mxu0 0.0
        %2606 = vmatpush1.msra.mxu0 0.0
        %2607 = vmatprep.subr.mxu0 0.0
        %2608 = vmatpush1.msra.mxu0 0.0
        %2609 = vmatprep.subr.mxu0 0.0
        %2610 = vmatpush1.msra.mxu0 0.0
        %2611 = vmatprep.subr.mxu0 0.0
        %2612 = vmatpush1.msra.mxu0 0.0
        %2613 = vmatprep.subr.mxu0 0.0
        %2614 = vmatpush1.msra.mxu0 0.0
        %2615 = vmatprep.subr.mxu0 0.0
        %2616 = vmatpush1.msra.mxu0 0.0
        %2617 = vmatprep.subr.mxu0 0.0
        %2618 = vmatpush1.msra.mxu0 0.0
        %2619 = vmatprep.subr.mxu0 0.0
        %2620 = vmatpush1.msra.mxu0 0.0
        %2621 = vmatprep.subr.mxu0 0.0
        %2622 = vmatpush1.msra.mxu0 0.0
        %2623 = vmatprep.mubr.f32.mxu0 0.0
        %v2624 = vand.u32 %v206, 4294901760
        %2625 = vmatmul.mubr.f32.gmra.mrb[0].mxu0 %v2624
        %v2626 = vpop.f32.mrb[0].mxu0
        %v2627 = vadd.f32 %v2472, %v2626
        %v2628 = vpop.f32.mrb[0].mxu0
        %v2629 = vadd.f32 %v2474, %v2628
        %2630 = vmatprep.mubr.f32.mxu0 0.0
        %v2631 = vand.u32 %v209, 4294901760
        %2632 = vmatmul.mubr.f32.gmra.mrb[0].mxu0 %v2631
        %v2633 = vpop.f32.mrb[0].mxu0
        %v2634 = vadd.f32 %v2483, %v2633
        %v2635 = vpop.f32.mrb[0].mxu0
        %v2636 = vadd.f32 %v2485, %v2635
        %2637 = vmatprep.mubr.f32.mxu0 0.0
        %v2638 = vand.u32 %v212, 4294901760
        %2639 = vmatmul.mubr.f32.gmra.mrb[0].mxu0 %v2638
        %v2640 = vpop.f32.mrb[0].mxu0
        %v2641 = vadd.f32 %v2494, %v2640
        %v2642 = vpop.f32.mrb[0].mxu0
        %v2643 = vadd.f32 %v2496, %v2642
        %2644 = vmatprep.mubr.f32.mxu0 0.0
        %v2645 = vand.u32 %v215, 4294901760
        %2646 = vmatmul.mubr.f32.gmra.mrb[0].mxu0 %v2645
        %v2647 = vpop.f32.mrb[0].mxu0
        %v2648 = vadd.f32 %v2505, %v2647
        %v2649 = vpop.f32.mrb[0].mxu0
        %v2650 = vadd.f32 %v2507, %v2649
        %2651 = vdwg.mxu0
        %v2652 = vand.u32 %v171, 4294901760
        %v2653 = vsub.f32 %v171, %v2652
        %2654 = vmatprep.subr.mxu0 %v2653
        %v2655 = vand.u32 %v170, 4294901760
        %v2656 = vsub.f32 %v170, %v2655
        %2657 = vmatpush1.msra.mxu0 %v2656
        %v2658 = vand.u32 %v179, 4294901760
        %v2659 = vsub.f32 %v179, %v2658
        %2660 = vmatprep.subr.mxu0 %v2659
        %v2661 = vand.u32 %v178, 4294901760
        %v2662 = vsub.f32 %v178, %v2661
        %2663 = vmatpush1.msra.mxu0 %v2662
        %v2664 = vand.u32 %v187, 4294901760
        %v2665 = vsub.f32 %v187, %v2664
        %2666 = vmatprep.subr.mxu0 %v2665
        %v2667 = vand.u32 %v186, 4294901760
        %v2668 = vsub.f32 %v186, %v2667
        %2669 = vmatpush1.msra.mxu0 %v2668
        %v2670 = vand.u32 %v195, 4294901760
        %v2671 = vsub.f32 %v195, %v2670
        %2672 = vmatprep.subr.mxu0 %v2671
        %v2673 = vand.u32 %v194, 4294901760
        %v2674 = vsub.f32 %v194, %v2673
        %2675 = vmatpush1.msra.mxu0 %v2674
        %v2676 = vand.u32 %v240, 4294901760
        %v2677 = vsub.f32 %v240, %v2676
        %2678 = vmatprep.subr.mxu0 %v2677
        %v2679 = vand.u32 %v237, 4294901760
        %v2680 = vsub.f32 %v237, %v2679
        %2681 = vmatpush1.msra.mxu0 %v2680
        %2682 = vmatprep.subr.mxu0 0.0
        %2683 = vmatpush1.msra.mxu0 0.0
        %2684 = vmatprep.subr.mxu0 0.0
        %2685 = vmatpush1.msra.mxu0 0.0
        %2686 = vmatprep.subr.mxu0 0.0
        %2687 = vmatpush1.msra.mxu0 0.0
        %2688 = vmatprep.subr.mxu0 0.0
        %2689 = vmatpush1.msra.mxu0 0.0
        %2690 = vmatprep.subr.mxu0 0.0
        %2691 = vmatpush1.msra.mxu0 0.0
        %2692 = vmatprep.subr.mxu0 0.0
        %2693 = vmatpush1.msra.mxu0 0.0
        %2694 = vmatprep.subr.mxu0 0.0
        %2695 = vmatpush1.msra.mxu0 0.0
        %2696 = vmatprep.subr.mxu0 0.0
        %2697 = vmatpush1.msra.mxu0 0.0
        %2698 = vmatprep.subr.mxu0 0.0
        %2699 = vmatpush1.msra.mxu0 0.0
        %2700 = vmatprep.subr.mxu0 0.0
        %2701 = vmatpush1.msra.mxu0 0.0
        %2702 = vmatprep.subr.mxu0 0.0
        %2703 = vmatpush1.msra.mxu0 0.0
        %2704 = vmatprep.subr.mxu0 0.0
        %2705 = vmatpush1.msra.mxu0 0.0
        %2706 = vmatprep.subr.mxu0 0.0
        %2707 = vmatpush1.msra.mxu0 0.0
        %2708 = vmatprep.subr.mxu0 0.0
        %2709 = vmatpush1.msra.mxu0 0.0
        %2710 = vmatprep.subr.mxu0 0.0
        %2711 = vmatpush1.msra.mxu0 0.0
        %2712 = vmatprep.subr.mxu0 0.0
        %2713 = vmatpush1.msra.mxu0 0.0
        %2714 = vmatprep.subr.mxu0 0.0
        %2715 = vmatpush1.msra.mxu0 0.0
        %2716 = vmatprep.subr.mxu0 0.0
        %2717 = vmatpush1.msra.mxu0 0.0
        %2718 = vmatprep.subr.mxu0 0.0
        %2719 = vmatpush1.msra.mxu0 0.0
        %2720 = vmatprep.subr.mxu0 0.0
        %2721 = vmatpush1.msra.mxu0 0.0
        %2722 = vmatprep.subr.mxu0 0.0
        %2723 = vmatpush1.msra.mxu0 0.0
        %2724 = vmatprep.subr.mxu0 0.0
        %2725 = vmatpush1.msra.mxu0 0.0
        %2726 = vmatprep.subr.mxu0 0.0
        %2727 = vmatpush1.msra.mxu0 0.0
        %2728 = vmatprep.subr.mxu0 0.0
        %2729 = vmatpush1.msra.mxu0 0.0
        %2730 = vmatprep.subr.mxu0 0.0
        %2731 = vmatpush1.msra.mxu0 0.0
        %2732 = vmatprep.subr.mxu0 0.0
        %2733 = vmatpush1.msra.mxu0 0.0
        %2734 = vmatprep.subr.mxu0 0.0
        %2735 = vmatpush1.msra.mxu0 0.0
        %2736 = vmatprep.mubr.f32.mxu0 0.0
        %v2737 = vand.u32 %v206, 4294901760
        %v2738 = vsub.f32 %v206, %v2737
        %2739 = vmatmul.mubr.f32.gmra.mrb[0].mxu0 %v2738
        %v2740 = vpop.f32.mrb[0].mxu0
        %v2741 = vadd.f32 %v2627, %v2740
        %v2742 = vpop.f32.mrb[0].mxu0
        %v2743 = vadd.f32 %v2629, %v2742
        %2744 = vmatprep.mubr.f32.mxu0 0.0
        %v2745 = vand.u32 %v209, 4294901760
        %v2746 = vsub.f32 %v209, %v2745
        %2747 = vmatmul.mubr.f32.gmra.mrb[0].mxu0 %v2746
        %v2748 = vpop.f32.mrb[0].mxu0
        %v2749 = vadd.f32 %v2634, %v2748
        %v2750 = vpop.f32.mrb[0].mxu0
        %v2751 = vadd.f32 %v2636, %v2750
        %2752 = vmatprep.mubr.f32.mxu0 0.0
        %v2753 = vand.u32 %v212, 4294901760
        %v2754 = vsub.f32 %v212, %v2753
        %2755 = vmatmul.mubr.f32.gmra.mrb[0].mxu0 %v2754
        %v2756 = vpop.f32.mrb[0].mxu0
        %v2757 = vadd.f32 %v2641, %v2756
        %v2758 = vpop.f32.mrb[0].mxu0
        %v2759 = vadd.f32 %v2643, %v2758
        %2760 = vmatprep.mubr.f32.mxu0 0.0
        %v2761 = vand.u32 %v215, 4294901760
        %v2762 = vsub.f32 %v215, %v2761
        %2763 = vmatmul.mubr.f32.gmra.mrb[0].mxu0 %v2762
        %v2764 = vpop.f32.mrb[0].mxu0
        %v2765 = vadd.f32 %v2648, %v2764
        %v2766 = vpop.f32.mrb[0].mxu0
        %v2767 = vadd.f32 %v2650, %v2766
        %2768 = vdwg.mxu0
        %v2769 = vand.u32 %v171, 4294901760
        %2770 = vmatprep.subr.mxu0 %v2769
        %v2771 = vand.u32 %v170, 4294901760
        %2772 = vmatpush1.msra.mxu0 %v2771
        %v2773 = vand.u32 %v179, 4294901760
        %2774 = vmatprep.subr.mxu0 %v2773
        %v2775 = vand.u32 %v178, 4294901760
        %2776 = vmatpush1.msra.mxu0 %v2775
        %v2777 = vand.u32 %v187, 4294901760
        %2778 = vmatprep.subr.mxu0 %v2777
        %v2779 = vand.u32 %v186, 4294901760
        %2780 = vmatpush1.msra.mxu0 %v2779
        %v2781 = vand.u32 %v195, 4294901760
        %2782 = vmatprep.subr.mxu0 %v2781
        %v2783 = vand.u32 %v194, 4294901760
        %2784 = vmatpush1.msra.mxu0 %v2783
        %v2785 = vand.u32 %v240, 4294901760
        %2786 = vmatprep.subr.mxu0 %v2785
        %v2787 = vand.u32 %v237, 4294901760
        %2788 = vmatpush1.msra.mxu0 %v2787
        %2789 = vmatprep.subr.mxu0 0.0
        %2790 = vmatpush1.msra.mxu0 0.0
        %2791 = vmatprep.subr.mxu0 0.0
        %2792 = vmatpush1.msra.mxu0 0.0
        %2793 = vmatprep.subr.mxu0 0.0
        %2794 = vmatpush1.msra.mxu0 0.0
        %2795 = vmatprep.subr.mxu0 0.0
        %2796 = vmatpush1.msra.mxu0 0.0
        %2797 = vmatprep.subr.mxu0 0.0
        %2798 = vmatpush1.msra.mxu0 0.0
        %2799 = vmatprep.subr.mxu0 0.0
        %2800 = vmatpush1.msra.mxu0 0.0
        %2801 = vmatprep.subr.mxu0 0.0
        %2802 = vmatpush1.msra.mxu0 0.0
        %2803 = vmatprep.subr.mxu0 0.0
        %2804 = vmatpush1.msra.mxu0 0.0
        %2805 = vmatprep.subr.mxu0 0.0
        %2806 = vmatpush1.msra.mxu0 0.0
        %2807 = vmatprep.subr.mxu0 0.0
        %2808 = vmatpush1.msra.mxu0 0.0
        %2809 = vmatprep.subr.mxu0 0.0
        %2810 = vmatpush1.msra.mxu0 0.0
        %2811 = vmatprep.subr.mxu0 0.0
        %2812 = vmatpush1.msra.mxu0 0.0
        %2813 = vmatprep.subr.mxu0 0.0
        %2814 = vmatpush1.msra.mxu0 0.0
        %2815 = vmatprep.subr.mxu0 0.0
        %2816 = vmatpush1.msra.mxu0 0.0
        %2817 = vmatprep.subr.mxu0 0.0
        %2818 = vmatpush1.msra.mxu0 0.0
        %2819 = vmatprep.subr.mxu0 0.0
        %2820 = vmatpush1.msra.mxu0 0.0
        %2821 = vmatprep.subr.mxu0 0.0
        %2822 = vmatpush1.msra.mxu0 0.0
        %2823 = vmatprep.subr.mxu0 0.0
        %2824 = vmatpush1.msra.mxu0 0.0
        %2825 = vmatprep.subr.mxu0 0.0
        %2826 = vmatpush1.msra.mxu0 0.0
        %2827 = vmatprep.subr.mxu0 0.0
        %2828 = vmatpush1.msra.mxu0 0.0
        %2829 = vmatprep.subr.mxu0 0.0
        %2830 = vmatpush1.msra.mxu0 0.0
        %2831 = vmatprep.subr.mxu0 0.0
        %2832 = vmatpush1.msra.mxu0 0.0
        %2833 = vmatprep.subr.mxu0 0.0
        %2834 = vmatpush1.msra.mxu0 0.0
        %2835 = vmatprep.subr.mxu0 0.0
        %2836 = vmatpush1.msra.mxu0 0.0
        %2837 = vmatprep.subr.mxu0 0.0
        %2838 = vmatpush1.msra.mxu0 0.0
        %2839 = vmatprep.subr.mxu0 0.0
        %2840 = vmatpush1.msra.mxu0 0.0
        %2841 = vmatprep.subr.mxu0 0.0
        %2842 = vmatpush1.msra.mxu0 0.0
        %2843 = vmatprep.mubr.f32.mxu0 0.0
        %v2844 = vand.u32 %v206, 4294901760
        %v2845 = vsub.f32 %v206, %v2844
        %v2846 = vand.u32 %v2845, 4294901760
        %2847 = vmatmul.mubr.f32.gmra.mrb[0].mxu0 %v2846
        %v2848 = vpop.f32.mrb[0].mxu0
        %v2849 = vadd.f32 %v2741, %v2848
        %v2850 = vpop.f32.mrb[0].mxu0
        %v2851 = vadd.f32 %v2743, %v2850
        %2852 = vmatprep.mubr.f32.mxu0 0.0
        %v2853 = vand.u32 %v209, 4294901760
        %v2854 = vsub.f32 %v209, %v2853
        %v2855 = vand.u32 %v2854, 4294901760
        %2856 = vmatmul.mubr.f32.gmra.mrb[0].mxu0 %v2855
        %v2857 = vpop.f32.mrb[0].mxu0
        %v2858 = vadd.f32 %v2749, %v2857
        %v2859 = vpop.f32.mrb[0].mxu0
        %v2860 = vadd.f32 %v2751, %v2859
        %2861 = vmatprep.mubr.f32.mxu0 0.0
        %v2862 = vand.u32 %v212, 4294901760
        %v2863 = vsub.f32 %v212, %v2862
        %v2864 = vand.u32 %v2863, 4294901760
        %2865 = vmatmul.mubr.f32.gmra.mrb[0].mxu0 %v2864
        %v2866 = vpop.f32.mrb[0].mxu0
        %v2867 = vadd.f32 %v2757, %v2866
        %v2868 = vpop.f32.mrb[0].mxu0
        %v2869 = vadd.f32 %v2759, %v2868
        %2870 = vmatprep.mubr.f32.mxu0 0.0
        %v2871 = vand.u32 %v215, 4294901760
        %v2872 = vsub.f32 %v215, %v2871
        %v2873 = vand.u32 %v2872, 4294901760
        %2874 = vmatmul.mubr.f32.gmra.mrb[0].mxu0 %v2873
        %v2875 = vpop.f32.mrb[0].mxu0
        %v2876 = vadd.f32 %v2765, %v2875
        %v2877 = vpop.f32.mrb[0].mxu0
        %v2878 = vadd.f32 %v2767, %v2877
        %2879 = vdwg.mxu0
        %v2880 = vand.u32 %v171, 4294901760
        %v2881 = vsub.f32 %v171, %v2880
        %v2882 = vand.u32 %v2881, 4294901760
        %2883 = vmatprep.subr.mxu0 %v2882
        %v2884 = vand.u32 %v170, 4294901760
        %v2885 = vsub.f32 %v170, %v2884
        %v2886 = vand.u32 %v2885, 4294901760
        %2887 = vmatpush1.msra.mxu0 %v2886
        %v2888 = vand.u32 %v179, 4294901760
        %v2889 = vsub.f32 %v179, %v2888
        %v2890 = vand.u32 %v2889, 4294901760
        %2891 = vmatprep.subr.mxu0 %v2890
        %v2892 = vand.u32 %v178, 4294901760
        %v2893 = vsub.f32 %v178, %v2892
        %v2894 = vand.u32 %v2893, 4294901760
        %2895 = vmatpush1.msra.mxu0 %v2894
        %v2896 = vand.u32 %v187, 4294901760
        %v2897 = vsub.f32 %v187, %v2896
        %v2898 = vand.u32 %v2897, 4294901760
        %2899 = vmatprep.subr.mxu0 %v2898
        %v2900 = vand.u32 %v186, 4294901760
        %v2901 = vsub.f32 %v186, %v2900
        %v2902 = vand.u32 %v2901, 4294901760
        %2903 = vmatpush1.msra.mxu0 %v2902
        %v2904 = vand.u32 %v195, 4294901760
        %v2905 = vsub.f32 %v195, %v2904
        %v2906 = vand.u32 %v2905, 4294901760
        %2907 = vmatprep.subr.mxu0 %v2906
        %v2908 = vand.u32 %v194, 4294901760
        %v2909 = vsub.f32 %v194, %v2908
        %v2910 = vand.u32 %v2909, 4294901760
        %2911 = vmatpush1.msra.mxu0 %v2910
        %v2912 = vand.u32 %v240, 4294901760
        %v2913 = vsub.f32 %v240, %v2912
        %v2914 = vand.u32 %v2913, 4294901760
        %2915 = vmatprep.subr.mxu0 %v2914
        %v2916 = vand.u32 %v237, 4294901760
        %v2917 = vsub.f32 %v237, %v2916
        %v2918 = vand.u32 %v2917, 4294901760
        %2919 = vmatpush1.msra.mxu0 %v2918
        %2920 = vmatprep.subr.mxu0 0.0
        %2921 = vmatpush1.msra.mxu0 0.0
        %2922 = vmatprep.subr.mxu0 0.0
        %2923 = vmatpush1.msra.mxu0 0.0
        %2924 = vmatprep.subr.mxu0 0.0
        %2925 = vmatpush1.msra.mxu0 0.0
        %2926 = vmatprep.subr.mxu0 0.0
        %2927 = vmatpush1.msra.mxu0 0.0
        %2928 = vmatprep.subr.mxu0 0.0
        %2929 = vmatpush1.msra.mxu0 0.0
        %2930 = vmatprep.subr.mxu0 0.0
        %2931 = vmatpush1.msra.mxu0 0.0
        %2932 = vmatprep.subr.mxu0 0.0
        %2933 = vmatpush1.msra.mxu0 0.0
        %2934 = vmatprep.subr.mxu0 0.0
        %2935 = vmatpush1.msra.mxu0 0.0
        %2936 = vmatprep.subr.mxu0 0.0
        %2937 = vmatpush1.msra.mxu0 0.0
        %2938 = vmatprep.subr.mxu0 0.0
        %2939 = vmatpush1.msra.mxu0 0.0
        %2940 = vmatprep.subr.mxu0 0.0
        %2941 = vmatpush1.msra.mxu0 0.0
        %2942 = vmatprep.subr.mxu0 0.0
        %2943 = vmatpush1.msra.mxu0 0.0
        %2944 = vmatprep.subr.mxu0 0.0
        %2945 = vmatpush1.msra.mxu0 0.0
        %2946 = vmatprep.subr.mxu0 0.0
        %2947 = vmatpush1.msra.mxu0 0.0
        %2948 = vmatprep.subr.mxu0 0.0
        %2949 = vmatpush1.msra.mxu0 0.0
        %2950 = vmatprep.subr.mxu0 0.0
        %2951 = vmatpush1.msra.mxu0 0.0
        %2952 = vmatprep.subr.mxu0 0.0
        %2953 = vmatpush1.msra.mxu0 0.0
        %2954 = vmatprep.subr.mxu0 0.0
        %2955 = vmatpush1.msra.mxu0 0.0
        %2956 = vmatprep.subr.mxu0 0.0
        %2957 = vmatpush1.msra.mxu0 0.0
        %2958 = vmatprep.subr.mxu0 0.0
        %2959 = vmatpush1.msra.mxu0 0.0
        %2960 = vmatprep.subr.mxu0 0.0
        %2961 = vmatpush1.msra.mxu0 0.0
        %2962 = vmatprep.subr.mxu0 0.0
        %2963 = vmatpush1.msra.mxu0 0.0
        %2964 = vmatprep.subr.mxu0 0.0
        %2965 = vmatpush1.msra.mxu0 0.0
        %2966 = vmatprep.subr.mxu0 0.0
        %2967 = vmatpush1.msra.mxu0 0.0
        %2968 = vmatprep.subr.mxu0 0.0
        %2969 = vmatpush1.msra.mxu0 0.0
        %2970 = vmatprep.subr.mxu0 0.0
        %2971 = vmatpush1.msra.mxu0 0.0
        %2972 = vmatprep.subr.mxu0 0.0
        %2973 = vmatpush1.msra.mxu0 0.0
        %2974 = vmatprep.mubr.f32.mxu0 0.0
        %v2975 = vand.u32 %v206, 4294901760
        %2976 = vmatmul.mubr.f32.gmra.mrb[0].mxu0 %v2975
        %v2977 = vpop.f32.mrb[0].mxu0
        %v2978 = vadd.f32 %v2849, %v2977
        %v2979 = vpop.f32.mrb[0].mxu0
        %v2980 = vadd.f32 %v2851, %v2979
        %2981 = vmatprep.mubr.f32.mxu0 0.0
        %v2982 = vand.u32 %v209, 4294901760
        %2983 = vmatmul.mubr.f32.gmra.mrb[0].mxu0 %v2982
        %v2984 = vpop.f32.mrb[0].mxu0
        %v2985 = vadd.f32 %v2858, %v2984
        %v2986 = vpop.f32.mrb[0].mxu0
        %v2987 = vadd.f32 %v2860, %v2986
        %2988 = vmatprep.mubr.f32.mxu0 0.0
        %v2989 = vand.u32 %v212, 4294901760
        %2990 = vmatmul.mubr.f32.gmra.mrb[0].mxu0 %v2989
        %v2991 = vpop.f32.mrb[0].mxu0
        %v2992 = vadd.f32 %v2867, %v2991
        %v2993 = vpop.f32.mrb[0].mxu0
        %v2994 = vadd.f32 %v2869, %v2993
        %2995 = vmatprep.mubr.f32.mxu0 0.0
        %v2996 = vand.u32 %v215, 4294901760
        %2997 = vmatmul.mubr.f32.gmra.mrb[0].mxu0 %v2996
        %v2998 = vpop.f32.mrb[0].mxu0
        %v2999 = vadd.f32 %v2876, %v2998
        %v3000 = vpop.f32.mrb[0].mxu0
        %v3001 = vadd.f32 %v2878, %v3000
        %3002 = vdwg.mxu0
        %v3003 = vand.u32 %v171, 4294901760
        %3004 = vmatprep.subr.mxu0 %v3003
        %v3005 = vand.u32 %v170, 4294901760
        %3006 = vmatpush1.msra.mxu0 %v3005
        %v3007 = vand.u32 %v179, 4294901760
        %3008 = vmatprep.subr.mxu0 %v3007
        %v3009 = vand.u32 %v178, 4294901760
        %3010 = vmatpush1.msra.mxu0 %v3009
        %v3011 = vand.u32 %v187, 4294901760
        %3012 = vmatprep.subr.mxu0 %v3011
        %v3013 = vand.u32 %v186, 4294901760
        %3014 = vmatpush1.msra.mxu0 %v3013
        %v3015 = vand.u32 %v195, 4294901760
        %3016 = vmatprep.subr.mxu0 %v3015
        %v3017 = vand.u32 %v194, 4294901760
        %3018 = vmatpush1.msra.mxu0 %v3017
        %v3019 = vand.u32 %v240, 4294901760
        %3020 = vmatprep.subr.mxu0 %v3019
        %v3021 = vand.u32 %v237, 4294901760
        %3022 = vmatpush1.msra.mxu0 %v3021
        %3023 = vmatprep.subr.mxu0 0.0
        %3024 = vmatpush1.msra.mxu0 0.0
        %3025 = vmatprep.subr.mxu0 0.0
        %3026 = vmatpush1.msra.mxu0 0.0
        %3027 = vmatprep.subr.mxu0 0.0
        %3028 = vmatpush1.msra.mxu0 0.0
        %3029 = vmatprep.subr.mxu0 0.0
        %3030 = vmatpush1.msra.mxu0 0.0
        %3031 = vmatprep.subr.mxu0 0.0
        %3032 = vmatpush1.msra.mxu0 0.0
        %3033 = vmatprep.subr.mxu0 0.0
        %3034 = vmatpush1.msra.mxu0 0.0
        %3035 = vmatprep.subr.mxu0 0.0
        %3036 = vmatpush1.msra.mxu0 0.0
        %3037 = vmatprep.subr.mxu0 0.0
        %3038 = vmatpush1.msra.mxu0 0.0
        %3039 = vmatprep.subr.mxu0 0.0
        %3040 = vmatpush1.msra.mxu0 0.0
        %3041 = vmatprep.subr.mxu0 0.0
        %3042 = vmatpush1.msra.mxu0 0.0
        %3043 = vmatprep.subr.mxu0 0.0
        %3044 = vmatpush1.msra.mxu0 0.0
        %3045 = vmatprep.subr.mxu0 0.0
        %3046 = vmatpush1.msra.mxu0 0.0
        %3047 = vmatprep.subr.mxu0 0.0
        %3048 = vmatpush1.msra.mxu0 0.0
        %3049 = vmatprep.subr.mxu0 0.0
        %3050 = vmatpush1.msra.mxu0 0.0
        %3051 = vmatprep.subr.mxu0 0.0
        %3052 = vmatpush1.msra.mxu0 0.0
        %3053 = vmatprep.subr.mxu0 0.0
        %3054 = vmatpush1.msra.mxu0 0.0
        %3055 = vmatprep.subr.mxu0 0.0
        %3056 = vmatpush1.msra.mxu0 0.0
        %3057 = vmatprep.subr.mxu0 0.0
        %3058 = vmatpush1.msra.mxu0 0.0
        %3059 = vmatprep.subr.mxu0 0.0
        %3060 = vmatpush1.msra.mxu0 0.0
        %3061 = vmatprep.subr.mxu0 0.0
        %3062 = vmatpush1.msra.mxu0 0.0
        %3063 = vmatprep.subr.mxu0 0.0
        %3064 = vmatpush1.msra.mxu0 0.0
        %3065 = vmatprep.subr.mxu0 0.0
        %3066 = vmatpush1.msra.mxu0 0.0
        %3067 = vmatprep.subr.mxu0 0.0
        %3068 = vmatpush1.msra.mxu0 0.0
        %3069 = vmatprep.subr.mxu0 0.0
        %3070 = vmatpush1.msra.mxu0 0.0
        %3071 = vmatprep.subr.mxu0 0.0
        %3072 = vmatpush1.msra.mxu0 0.0
        %3073 = vmatprep.subr.mxu0 0.0
        %3074 = vmatpush1.msra.mxu0 0.0
        %3075 = vmatprep.subr.mxu0 0.0
        %3076 = vmatpush1.msra.mxu0 0.0
        %3077 = vmatprep.mubr.f32.mxu0 0.0
        %v3078 = vand.u32 %v206, 4294901760
        %3079 = vmatmul.mubr.f32.gmra.mrb[0].mxu0 %v3078
        %v3080 = vpop.f32.mrb[0].mxu0
        %v3081 = vadd.f32 %v2978, %v3080
        %v3082 = vpop.f32.mrb[0].mxu0
        %v3083 = vadd.f32 %v2980, %v3082
        %3084 = vmatprep.mubr.f32.mxu0 0.0
        %v3085 = vand.u32 %v209, 4294901760
        %3086 = vmatmul.mubr.f32.gmra.mrb[0].mxu0 %v3085
        %v3087 = vpop.f32.mrb[0].mxu0
        %v3088 = vadd.f32 %v2985, %v3087
        %v3089 = vpop.f32.mrb[0].mxu0
        %v3090 = vadd.f32 %v2987, %v3089
        %3091 = vmatprep.mubr.f32.mxu0 0.0
        %v3092 = vand.u32 %v212, 4294901760
        %3093 = vmatmul.mubr.f32.gmra.mrb[0].mxu0 %v3092
        %v3094 = vpop.f32.mrb[0].mxu0
        %v3095 = vadd.f32 %v2992, %v3094
        %v3096 = vpop.f32.mrb[0].mxu0
        %v3097 = vadd.f32 %v2994, %v3096
        %3098 = vmatprep.mubr.f32.mxu0 0.0
        %v3099 = vand.u32 %v215, 4294901760
        %3100 = vmatmul.mubr.f32.gmra.mrb[0].mxu0 %v3099
        %v3101 = vpop.f32.mrb[0].mxu0
        %v3102 = vadd.f32 %v2999, %v3101
        %v3103 = vpop.f32.mrb[0].mxu0
        %v3104 = vadd.f32 %v3001, %v3103
        %3105 = vdwg.mxu0
        %v3106 = vand.u32 2147483647, %v933
        %vm3107 = vcmp.le.f32.partialorder %v3106, 0.7853982
        %vm3108 = vcmp.lt.s32.totalorder %v933, 0
        %v3109 = vand.u32 %v933, 2139095040
        %v3110 = vshrl.u32 %v3109, 23
        %v3111 = vsub.s32 %v3110, 127
        %v3112 = vand.u32 2147483647, %v933
        %v3113 = vand.u32 %v3112, 8388607
        %v3114 = vor.u32 %v3113, 8388608
        %v3115 = vsub.s32 0, %v3114
        %v3116 = vadd.s32 %v3111, 1
        %vm3117 = vcmp.gt.s32.totalorder %v3116, 0
        %v3118 = vsel %vm3117, %v3116, 0
        %v3119 = vshrl.u32 %v3118, 5
        %v3120 = vand.u32 %v3118, 31
        %v3121 = vsub.s32 32, %v3120
        %v3122 = vshrl.u32 683565275, %v3121
        %v3123 = vshll.u32 683565275, %v3120
        %v3124 = vshrl.u32 2475754826, %v3121
        %v3125 = vor.u32 %v3123, %v3124
        %v3126 = vshll.u32 2475754826, %v3120
        %v3127 = vshrl.u32 2131351028, %v3121
        %v3128 = vor.u32 %v3126, %v3127
        %v3129 = vshll.u32 2131351028, %v3120
        %v3130 = vshrl.u32 2102212464, %v3121
        %v3131 = vor.u32 %v3129, %v3130
        %v3132 = vshll.u32 2102212464, %v3120
        %v3133 = vshrl.u32 920167782, %v3121
        %v3134 = vor.u32 %v3132, %v3133
        %v3135 = vshll.u32 920167782, %v3120
        %v3136 = vshrl.u32 1326507024, %v3121
        %v3137 = vor.u32 %v3135, %v3136
        %vm3138 = vcmp.lt.s32.totalorder %v3119, 1
        %vm3139 = vcmp.lt.s32.totalorder %v3119, 2
        %vm3140 = vcmp.lt.s32.totalorder %v3119, 3
        %vm3141 = vcmp.lt.s32.totalorder %v3119, 4
        %v3142 = vsel %vm3138, %v3122, %v3125
        %v3143 = vsel %vm3141, %v3131, 2102212464
        %v3144 = vsel %vm3140, %v3128, %v3143
        %v3145 = vsel %vm3139, %v3142, %v3144
        %v3146 = vsel %vm3138, %v3125, %v3128
        %v3147 = vsel %vm3141, %v3134, 920167782
        %v3148 = vsel %vm3140, %v3131, %v3147
        %v3149 = vsel %vm3139, %v3146, %v3148
        %v3150 = vsel %vm3138, %v3128, %v3131
        %v3151 = vsel %vm3141, %v3137, 1326507024
        %v3152 = vsel %vm3140, %v3134, %v3151
        %v3153 = vsel %vm3139, %v3150, %v3152
        %v3154 = vshll.u32 %v3114, 8
        %v3155 = vmul.u32.u64.compose %v3154, %v3153
        %v3156 = vextract.low.u32 %v3155
        %v3157 = vextract.high.u32 %v3155
        %v3158 = vmul.u32.u64.compose %v3154, %v3149
        %v3159 = vextract.low.u32 %v3158
        %v3160 = vextract.high.u32 %v3158
        %v3161 = vmul.u32 %v3154, %v3145
        %v3162 = vadd.s32 %v3157, %v3159
        %vm3163 = vc.u32 %v3157, %v3159
        %v3164 = vadd.s32 %v3160, 1
        %v3165 = vsel %vm3163, %v3164, %v3160
        %v3166 = vadd.s32 %v3161, %v3165
        %v3167 = vadd.s32 %v3166, 536870912
        %v3168 = vshrl.u32 %v3167, 30
        %v3169 = vshll.u32 %v3168, 30
        %v3170 = vsub.s32 %v3166, %v3169
        %vm3171 = vcmp.lt.s32.totalorder %v3170, 0
        %v3172 = vsub.s32 0, %v3170
        %v3173 = vsel %vm3171, %v3172, %v3170
        %v3174 = vclz %v3173
        %v3175 = vsub.s32 %v3174, 2
        %vm3176 = vcmp.gt.s32.totalorder 0, %v3175
        %v3177 = vsel %vm3176, 0, %v3175
        %v3178 = vsub.s32 32, %v3177
        %v3179 = vshll.u32 %v3170, %v3177
        %v3180 = vshrl.u32 %v3162, %v3178
        %v3181 = vor.u32 %v3179, %v3180
        %v3182 = vsub.s32 4294967266, %v3177
        %v3183 = vadd.s32 %v3182, 127
        %v3184 = vshll.u32 %v3183, 23
        %v3185 = vor.u32 4788187, %v3184
        %v3186 = vand.u32 2147483647, %v3185
        %v3188 = vcvt.s32.f32 %v3181
        %v3189 = vmul.f32 %v3188, %v3186
        %v3190 = vxor.u32 %v3189, 2147483648
        %v3191 = vsel %vm3108, %v3190, %v3189
        %v3192 = vsub.s32 4, %v3168
        %v3193 = vsel %vm3108, %v3192, %v3168
        %v3194 = vsel %vm3107, %v933, %v3191
        %v3195 = vsel %vm3107, 0, %v3193
        %v3196 = vcosq.f32.pop %v3194
        %v3197 = vsinq.f32.pop %v3194
        %vm3198 = vweird.f32 %v933
        %v3199 = vand.u32 %v3195, 3
        %vm3200 = vcmp.lt.s32.totalorder %v3199, 2
        %vm3201 = vcmp.eq.s32.totalorder %v3199, 0
        %v3202 = vxor.u32 %v3197, 2147483648
        %v3203 = vsel %vm3201, %v3196, %v3202
        %vm3204 = vcmp.eq.s32.totalorder %v3199, 2
        %v3205 = vxor.u32 %v3196, 2147483648
        %v3206 = vsel %vm3204, %v3205, %v3197
        %v3207 = vsel %vm3200, %v3203, %v3206
        %v3208 = vsel %vm3198, nan, %v3207
        %v3209 = vand.u32 2147483647, %v935
        %vm3210 = vcmp.le.f32.partialorder %v3209, 0.7853982
        %vm3211 = vcmp.lt.s32.totalorder %v935, 0
        %v3212 = vand.u32 %v935, 2139095040
        %v3213 = vshrl.u32 %v3212, 23
        %v3214 = vsub.s32 %v3213, 127
        %v3215 = vand.u32 2147483647, %v935
        %v3216 = vand.u32 %v3215, 8388607
        %v3217 = vor.u32 %v3216, 8388608
        %v3218 = vsub.s32 0, %v3217
        %v3219 = vadd.s32 %v3214, 1
        %vm3220 = vcmp.gt.s32.totalorder %v3219, 0
        %v3221 = vsel %vm3220, %v3219, 0
        %v3222 = vshrl.u32 %v3221, 5
        %v3223 = vand.u32 %v3221, 31
        %v3224 = vsub.s32 32, %v3223
        %v3225 = vshrl.u32 683565275, %v3224
        %v3226 = vshll.u32 683565275, %v3223
        %v3227 = vshrl.u32 2475754826, %v3224
        %v3228 = vor.u32 %v3226, %v3227
        %v3229 = vshll.u32 2475754826, %v3223
        %v3230 = vshrl.u32 2131351028, %v3224
        %v3231 = vor.u32 %v3229, %v3230
        %v3232 = vshll.u32 2131351028, %v3223
        %v3233 = vshrl.u32 2102212464, %v3224
        %v3234 = vor.u32 %v3232, %v3233
        %v3235 = vshll.u32 2102212464, %v3223
        %v3236 = vshrl.u32 920167782, %v3224
        %v3237 = vor.u32 %v3235, %v3236
        %v3238 = vshll.u32 920167782, %v3223
        %v3239 = vshrl.u32 1326507024, %v3224
        %v3240 = vor.u32 %v3238, %v3239
        %vm3241 = vcmp.lt.s32.totalorder %v3222, 1
        %vm3242 = vcmp.lt.s32.totalorder %v3222, 2
        %vm3243 = vcmp.lt.s32.totalorder %v3222, 3
        %vm3244 = vcmp.lt.s32.totalorder %v3222, 4
        %v3245 = vsel %vm3241, %v3225, %v3228
        %v3246 = vsel %vm3244, %v3234, 2102212464
        %v3247 = vsel %vm3243, %v3231, %v3246
        %v3248 = vsel %vm3242, %v3245, %v3247
        %v3249 = vsel %vm3241, %v3228, %v3231
        %v3250 = vsel %vm3244, %v3237, 920167782
        %v3251 = vsel %vm3243, %v3234, %v3250
        %v3252 = vsel %vm3242, %v3249, %v3251
        %v3253 = vsel %vm3241, %v3231, %v3234
        %v3254 = vsel %vm3244, %v3240, 1326507024
        %v3255 = vsel %vm3243, %v3237, %v3254
        %v3256 = vsel %vm3242, %v3253, %v3255
        %v3257 = vshll.u32 %v3217, 8
        %v3258 = vmul.u32.u64.compose %v3257, %v3256
        %v3259 = vextract.low.u32 %v3258
        %v3260 = vextract.high.u32 %v3258
        %v3261 = vmul.u32.u64.compose %v3257, %v3252
        %v3262 = vextract.low.u32 %v3261
        %v3263 = vextract.high.u32 %v3261
        %v3264 = vmul.u32 %v3257, %v3248
        %v3265 = vadd.s32 %v3260, %v3262
        %vm3266 = vc.u32 %v3260, %v3262
        %v3267 = vadd.s32 %v3263, 1
        %v3268 = vsel %vm3266, %v3267, %v3263
        %v3269 = vadd.s32 %v3264, %v3268
        %v3270 = vadd.s32 %v3269, 536870912
        %v3271 = vshrl.u32 %v3270, 30
        %v3272 = vshll.u32 %v3271, 30
        %v3273 = vsub.s32 %v3269, %v3272
        %vm3274 = vcmp.lt.s32.totalorder %v3273, 0
        %v3275 = vsub.s32 0, %v3273
        %v3276 = vsel %vm3274, %v3275, %v3273
        %v3277 = vclz %v3276
        %v3278 = vsub.s32 %v3277, 2
        %vm3279 = vcmp.gt.s32.totalorder 0, %v3278
        %v3280 = vsel %vm3279, 0, %v3278
        %v3281 = vsub.s32 32, %v3280
        %v3282 = vshll.u32 %v3273, %v3280
        %v3283 = vshrl.u32 %v3265, %v3281
        %v3284 = vor.u32 %v3282, %v3283
        %v3285 = vsub.s32 4294967266, %v3280
        %v3286 = vadd.s32 %v3285, 127
        %v3287 = vshll.u32 %v3286, 23
        %v3288 = vor.u32 4788187, %v3287
        %v3289 = vand.u32 2147483647, %v3288
        %v3291 = vcvt.s32.f32 %v3284
        %v3292 = vmul.f32 %v3291, %v3289
        %v3293 = vxor.u32 %v3292, 2147483648
        %v3294 = vsel %vm3211, %v3293, %v3292
        %v3295 = vsub.s32 4, %v3271
        %v3296 = vsel %vm3211, %v3295, %v3271
        %v3297 = vsel %vm3210, %v935, %v3294
        %v3298 = vsel %vm3210, 0, %v3296
        %v3299 = vcosq.f32.pop %v3297
        %v3300 = vsinq.f32.pop %v3297
        %vm3301 = vweird.f32 %v935
        %v3302 = vand.u32 %v3298, 3
        %vm3303 = vcmp.lt.s32.totalorder %v3302, 2
        %vm3304 = vcmp.eq.s32.totalorder %v3302, 0
        %v3305 = vxor.u32 %v3300, 2147483648
        %v3306 = vsel %vm3304, %v3299, %v3305
        %vm3307 = vcmp.eq.s32.totalorder %v3302, 2
        %v3308 = vxor.u32 %v3299, 2147483648
        %v3309 = vsel %vm3307, %v3308, %v3300
        %v3310 = vsel %vm3303, %v3306, %v3309
        %v3311 = vsel %vm3301, nan, %v3310
        %v3312 = vand.u32 2147483647, %v1649
        %vm3313 = vcmp.le.f32.partialorder %v3312, 0.7853982
        %vm3314 = vcmp.lt.s32.totalorder %v1649, 0
        %v3315 = vand.u32 %v1649, 2139095040
        %v3316 = vshrl.u32 %v3315, 23
        %v3317 = vsub.s32 %v3316, 127
        %v3318 = vand.u32 2147483647, %v1649
        %v3319 = vand.u32 %v3318, 8388607
        %v3320 = vor.u32 %v3319, 8388608
        %v3321 = vsub.s32 0, %v3320
        %v3322 = vadd.s32 %v3317, 1
        %vm3323 = vcmp.gt.s32.totalorder %v3322, 0
        %v3324 = vsel %vm3323, %v3322, 0
        %v3325 = vshrl.u32 %v3324, 5
        %v3326 = vand.u32 %v3324, 31
        %v3327 = vsub.s32 32, %v3326
        %v3328 = vshrl.u32 683565275, %v3327
        %v3329 = vshll.u32 683565275, %v3326
        %v3330 = vshrl.u32 2475754826, %v3327
        %v3331 = vor.u32 %v3329, %v3330
        %v3332 = vshll.u32 2475754826, %v3326
        %v3333 = vshrl.u32 2131351028, %v3327
        %v3334 = vor.u32 %v3332, %v3333
        %v3335 = vshll.u32 2131351028, %v3326
        %v3336 = vshrl.u32 2102212464, %v3327
        %v3337 = vor.u32 %v3335, %v3336
        %v3338 = vshll.u32 2102212464, %v3326
        %v3339 = vshrl.u32 920167782, %v3327
        %v3340 = vor.u32 %v3338, %v3339
        %v3341 = vshll.u32 920167782, %v3326
        %v3342 = vshrl.u32 1326507024, %v3327
        %v3343 = vor.u32 %v3341, %v3342
        %vm3344 = vcmp.lt.s32.totalorder %v3325, 1
        %vm3345 = vcmp.lt.s32.totalorder %v3325, 2
        %vm3346 = vcmp.lt.s32.totalorder %v3325, 3
        %vm3347 = vcmp.lt.s32.totalorder %v3325, 4
        %v3348 = vsel %vm3344, %v3328, %v3331
        %v3349 = vsel %vm3347, %v3337, 2102212464
        %v3350 = vsel %vm3346, %v3334, %v3349
        %v3351 = vsel %vm3345, %v3348, %v3350
        %v3352 = vsel %vm3344, %v3331, %v3334
        %v3353 = vsel %vm3347, %v3340, 920167782
        %v3354 = vsel %vm3346, %v3337, %v3353
        %v3355 = vsel %vm3345, %v3352, %v3354
        %v3356 = vsel %vm3344, %v3334, %v3337
        %v3357 = vsel %vm3347, %v3343, 1326507024
        %v3358 = vsel %vm3346, %v3340, %v3357
        %v3359 = vsel %vm3345, %v3356, %v3358
        %v3360 = vshll.u32 %v3320, 8
        %v3361 = vmul.u32.u64.compose %v3360, %v3359
        %v3362 = vextract.low.u32 %v3361
        %v3363 = vextract.high.u32 %v3361
        %v3364 = vmul.u32.u64.compose %v3360, %v3355
        %v3365 = vextract.low.u32 %v3364
        %v3366 = vextract.high.u32 %v3364
        %v3367 = vmul.u32 %v3360, %v3351
        %v3368 = vadd.s32 %v3363, %v3365
        %vm3369 = vc.u32 %v3363, %v3365
        %v3370 = vadd.s32 %v3366, 1
        %v3371 = vsel %vm3369, %v3370, %v3366
        %v3372 = vadd.s32 %v3367, %v3371
        %v3373 = vadd.s32 %v3372, 536870912
        %v3374 = vshrl.u32 %v3373, 30
        %v3375 = vshll.u32 %v3374, 30
        %v3376 = vsub.s32 %v3372, %v3375
        %vm3377 = vcmp.lt.s32.totalorder %v3376, 0
        %v3378 = vsub.s32 0, %v3376
        %v3379 = vsel %vm3377, %v3378, %v3376
        %v3380 = vclz %v3379
        %v3381 = vsub.s32 %v3380, 2
        %vm3382 = vcmp.gt.s32.totalorder 0, %v3381
        %v3383 = vsel %vm3382, 0, %v3381
        %v3384 = vsub.s32 32, %v3383
        %v3385 = vshll.u32 %v3376, %v3383
        %v3386 = vshrl.u32 %v3368, %v3384
        %v3387 = vor.u32 %v3385, %v3386
        %v3388 = vsub.s32 4294967266, %v3383
        %v3389 = vadd.s32 %v3388, 127
        %v3390 = vshll.u32 %v3389, 23
        %v3391 = vor.u32 4788187, %v3390
        %v3392 = vand.u32 2147483647, %v3391
        %v3394 = vcvt.s32.f32 %v3387
        %v3395 = vmul.f32 %v3394, %v3392
        %v3396 = vxor.u32 %v3395, 2147483648
        %v3397 = vsel %vm3314, %v3396, %v3395
        %v3398 = vsub.s32 4, %v3374
        %v3399 = vsel %vm3314, %v3398, %v3374
        %v3400 = vsel %vm3313, %v1649, %v3397
        %v3401 = vsel %vm3313, 0, %v3399
        %v3402 = vcosq.f32.pop %v3400
        %v3403 = vsinq.f32.pop %v3400
        %vm3404 = vweird.f32 %v1649
        %v3405 = vand.u32 %v3401, 3
        %vm3406 = vcmp.lt.s32.totalorder %v3405, 2
        %vm3407 = vcmp.eq.s32.totalorder %v3405, 0
        %v3408 = vxor.u32 %v3403, 2147483648
        %v3409 = vsel %vm3407, %v3402, %v3408
        %vm3410 = vcmp.eq.s32.totalorder %v3405, 2
        %v3411 = vxor.u32 %v3402, 2147483648
        %v3412 = vsel %vm3410, %v3411, %v3403
        %v3413 = vsel %vm3406, %v3409, %v3412
        %v3414 = vsel %vm3404, nan, %v3413
        %v3415 = vand.u32 2147483647, %v1651
        %vm3416 = vcmp.le.f32.partialorder %v3415, 0.7853982
        %vm3417 = vcmp.lt.s32.totalorder %v1651, 0
        %v3418 = vand.u32 %v1651, 2139095040
        %v3419 = vshrl.u32 %v3418, 23
        %v3420 = vsub.s32 %v3419, 127
        %v3421 = vand.u32 2147483647, %v1651
        %v3422 = vand.u32 %v3421, 8388607
        %v3423 = vor.u32 %v3422, 8388608
        %v3424 = vsub.s32 0, %v3423
        %v3425 = vadd.s32 %v3420, 1
        %vm3426 = vcmp.gt.s32.totalorder %v3425, 0
        %v3427 = vsel %vm3426, %v3425, 0
        %v3428 = vshrl.u32 %v3427, 5
        %v3429 = vand.u32 %v3427, 31
        %v3430 = vsub.s32 32, %v3429
        %v3431 = vshrl.u32 683565275, %v3430
        %v3432 = vshll.u32 683565275, %v3429
        %v3433 = vshrl.u32 2475754826, %v3430
        %v3434 = vor.u32 %v3432, %v3433
        %v3435 = vshll.u32 2475754826, %v3429
        %v3436 = vshrl.u32 2131351028, %v3430
        %v3437 = vor.u32 %v3435, %v3436
        %v3438 = vshll.u32 2131351028, %v3429
        %v3439 = vshrl.u32 2102212464, %v3430
        %v3440 = vor.u32 %v3438, %v3439
        %v3441 = vshll.u32 2102212464, %v3429
        %v3442 = vshrl.u32 920167782, %v3430
        %v3443 = vor.u32 %v3441, %v3442
        %v3444 = vshll.u32 920167782, %v3429
        %v3445 = vshrl.u32 1326507024, %v3430
        %v3446 = vor.u32 %v3444, %v3445
        %vm3447 = vcmp.lt.s32.totalorder %v3428, 1
        %vm3448 = vcmp.lt.s32.totalorder %v3428, 2
        %vm3449 = vcmp.lt.s32.totalorder %v3428, 3
        %vm3450 = vcmp.lt.s32.totalorder %v3428, 4
        %v3451 = vsel %vm3447, %v3431, %v3434
        %v3452 = vsel %vm3450, %v3440, 2102212464
        %v3453 = vsel %vm3449, %v3437, %v3452
        %v3454 = vsel %vm3448, %v3451, %v3453
        %v3455 = vsel %vm3447, %v3434, %v3437
        %v3456 = vsel %vm3450, %v3443, 920167782
        %v3457 = vsel %vm3449, %v3440, %v3456
        %v3458 = vsel %vm3448, %v3455, %v3457
        %v3459 = vsel %vm3447, %v3437, %v3440
        %v3460 = vsel %vm3450, %v3446, 1326507024
        %v3461 = vsel %vm3449, %v3443, %v3460
        %v3462 = vsel %vm3448, %v3459, %v3461
        %v3463 = vshll.u32 %v3423, 8
        %v3464 = vmul.u32.u64.compose %v3463, %v3462
        %v3465 = vextract.low.u32 %v3464
        %v3466 = vextract.high.u32 %v3464
        %v3467 = vmul.u32.u64.compose %v3463, %v3458
        %v3468 = vextract.low.u32 %v3467
        %v3469 = vextract.high.u32 %v3467
        %v3470 = vmul.u32 %v3463, %v3454
        %v3471 = vadd.s32 %v3466, %v3468
        %vm3472 = vc.u32 %v3466, %v3468
        %v3473 = vadd.s32 %v3469, 1
        %v3474 = vsel %vm3472, %v3473, %v3469
        %v3475 = vadd.s32 %v3470, %v3474
        %v3476 = vadd.s32 %v3475, 536870912
        %v3477 = vshrl.u32 %v3476, 30
        %v3478 = vshll.u32 %v3477, 30
        %v3479 = vsub.s32 %v3475, %v3478
        %vm3480 = vcmp.lt.s32.totalorder %v3479, 0
        %v3481 = vsub.s32 0, %v3479
        %v3482 = vsel %vm3480, %v3481, %v3479
        %v3483 = vclz %v3482
        %v3484 = vsub.s32 %v3483, 2
        %vm3485 = vcmp.gt.s32.totalorder 0, %v3484
        %v3486 = vsel %vm3485, 0, %v3484
        %v3487 = vsub.s32 32, %v3486
        %v3488 = vshll.u32 %v3479, %v3486
        %v3489 = vshrl.u32 %v3471, %v3487
        %v3490 = vor.u32 %v3488, %v3489
        %v3491 = vsub.s32 4294967266, %v3486
        %v3492 = vadd.s32 %v3491, 127
        %v3493 = vshll.u32 %v3492, 23
        %v3494 = vor.u32 4788187, %v3493
        %v3495 = vand.u32 2147483647, %v3494
        %v3497 = vcvt.s32.f32 %v3490
        %v3498 = vmul.f32 %v3497, %v3495
        %v3499 = vxor.u32 %v3498, 2147483648
        %v3500 = vsel %vm3417, %v3499, %v3498
        %v3501 = vsub.s32 4, %v3477
        %v3502 = vsel %vm3417, %v3501, %v3477
        %v3503 = vsel %vm3416, %v1651, %v3500
        %v3504 = vsel %vm3416, 0, %v3502
        %v3505 = vcosq.f32.pop %v3503
        %v3506 = vsinq.f32.pop %v3503
        %vm3507 = vweird.f32 %v1651
        %v3508 = vand.u32 %v3504, 3
        %vm3509 = vcmp.lt.s32.totalorder %v3508, 2
        %vm3510 = vcmp.eq.s32.totalorder %v3508, 0
        %v3511 = vxor.u32 %v3506, 2147483648
        %v3512 = vsel %vm3510, %v3505, %v3511
        %vm3513 = vcmp.eq.s32.totalorder %v3508, 2
        %v3514 = vxor.u32 %v3505, 2147483648
        %v3515 = vsel %vm3513, %v3514, %v3506
        %v3516 = vsel %vm3509, %v3512, %v3515
        %v3517 = vsel %vm3507, nan, %v3516
        %v3518 = vand.u32 2147483647, %v2365
        %vm3519 = vcmp.le.f32.partialorder %v3518, 0.7853982
        %vm3520 = vcmp.lt.s32.totalorder %v2365, 0
        %v3521 = vand.u32 %v2365, 2139095040
        %v3522 = vshrl.u32 %v3521, 23
        %v3523 = vsub.s32 %v3522, 127
        %v3524 = vand.u32 2147483647, %v2365
        %v3525 = vand.u32 %v3524, 8388607
        %v3526 = vor.u32 %v3525, 8388608
        %v3527 = vsub.s32 0, %v3526
        %v3528 = vadd.s32 %v3523, 1
        %vm3529 = vcmp.gt.s32.totalorder %v3528, 0
        %v3530 = vsel %vm3529, %v3528, 0
        %v3531 = vshrl.u32 %v3530, 5
        %v3532 = vand.u32 %v3530, 31
        %v3533 = vsub.s32 32, %v3532
        %v3534 = vshrl.u32 683565275, %v3533
        %v3535 = vshll.u32 683565275, %v3532
        %v3536 = vshrl.u32 2475754826, %v3533
        %v3537 = vor.u32 %v3535, %v3536
        %v3538 = vshll.u32 2475754826, %v3532
        %v3539 = vshrl.u32 2131351028, %v3533
        %v3540 = vor.u32 %v3538, %v3539
        %v3541 = vshll.u32 2131351028, %v3532
        %v3542 = vshrl.u32 2102212464, %v3533
        %v3543 = vor.u32 %v3541, %v3542
        %v3544 = vshll.u32 2102212464, %v3532
        %v3545 = vshrl.u32 920167782, %v3533
        %v3546 = vor.u32 %v3544, %v3545
        %v3547 = vshll.u32 920167782, %v3532
        %v3548 = vshrl.u32 1326507024, %v3533
        %v3549 = vor.u32 %v3547, %v3548
        %vm3550 = vcmp.lt.s32.totalorder %v3531, 1
        %vm3551 = vcmp.lt.s32.totalorder %v3531, 2
        %vm3552 = vcmp.lt.s32.totalorder %v3531, 3
        %vm3553 = vcmp.lt.s32.totalorder %v3531, 4
        %v3554 = vsel %vm3550, %v3534, %v3537
        %v3555 = vsel %vm3553, %v3543, 2102212464
        %v3556 = vsel %vm3552, %v3540, %v3555
        %v3557 = vsel %vm3551, %v3554, %v3556
        %v3558 = vsel %vm3550, %v3537, %v3540
        %v3559 = vsel %vm3553, %v3546, 920167782
        %v3560 = vsel %vm3552, %v3543, %v3559
        %v3561 = vsel %vm3551, %v3558, %v3560
        %v3562 = vsel %vm3550, %v3540, %v3543
        %v3563 = vsel %vm3553, %v3549, 1326507024
        %v3564 = vsel %vm3552, %v3546, %v3563
        %v3565 = vsel %vm3551, %v3562, %v3564
        %v3566 = vshll.u32 %v3526, 8
        %v3567 = vmul.u32.u64.compose %v3566, %v3565
        %v3568 = vextract.low.u32 %v3567
        %v3569 = vextract.high.u32 %v3567
        %v3570 = vmul.u32.u64.compose %v3566, %v3561
        %v3571 = vextract.low.u32 %v3570
        %v3572 = vextract.high.u32 %v3570
        %v3573 = vmul.u32 %v3566, %v3557
        %v3574 = vadd.s32 %v3569, %v3571
        %vm3575 = vc.u32 %v3569, %v3571
        %v3576 = vadd.s32 %v3572, 1
        %v3577 = vsel %vm3575, %v3576, %v3572
        %v3578 = vadd.s32 %v3573, %v3577
        %v3579 = vadd.s32 %v3578, 536870912
        %v3580 = vshrl.u32 %v3579, 30
        %v3581 = vshll.u32 %v3580, 30
        %v3582 = vsub.s32 %v3578, %v3581
        %vm3583 = vcmp.lt.s32.totalorder %v3582, 0
        %v3584 = vsub.s32 0, %v3582
        %v3585 = vsel %vm3583, %v3584, %v3582
        %v3586 = vclz %v3585
        %v3587 = vsub.s32 %v3586, 2
        %vm3588 = vcmp.gt.s32.totalorder 0, %v3587
        %v3589 = vsel %vm3588, 0, %v3587
        %v3590 = vsub.s32 32, %v3589
        %v3591 = vshll.u32 %v3582, %v3589
        %v3592 = vshrl.u32 %v3574, %v3590
        %v3593 = vor.u32 %v3591, %v3592
        %v3594 = vsub.s32 4294967266, %v3589
        %v3595 = vadd.s32 %v3594, 127
        %v3596 = vshll.u32 %v3595, 23
        %v3597 = vor.u32 4788187, %v3596
        %v3598 = vand.u32 2147483647, %v3597
        %v3600 = vcvt.s32.f32 %v3593
        %v3601 = vmul.f32 %v3600, %v3598
        %v3602 = vxor.u32 %v3601, 2147483648
        %v3603 = vsel %vm3520, %v3602, %v3601
        %v3604 = vsub.s32 4, %v3580
        %v3605 = vsel %vm3520, %v3604, %v3580
        %v3606 = vsel %vm3519, %v2365, %v3603
        %v3607 = vsel %vm3519, 0, %v3605
        %v3608 = vcosq.f32.pop %v3606
        %v3609 = vsinq.f32.pop %v3606
        %vm3610 = vweird.f32 %v2365
        %v3611 = vand.u32 %v3607, 3
        %vm3612 = vcmp.lt.s32.totalorder %v3611, 2
        %vm3613 = vcmp.eq.s32.totalorder %v3611, 0
        %v3614 = vxor.u32 %v3609, 2147483648
        %v3615 = vsel %vm3613, %v3608, %v3614
        %vm3616 = vcmp.eq.s32.totalorder %v3611, 2
        %v3617 = vxor.u32 %v3608, 2147483648
        %v3618 = vsel %vm3616, %v3617, %v3609
        %v3619 = vsel %vm3612, %v3615, %v3618
        %v3620 = vsel %vm3610, nan, %v3619
        %v3621 = vand.u32 2147483647, %v2367
        %vm3622 = vcmp.le.f32.partialorder %v3621, 0.7853982
        %vm3623 = vcmp.lt.s32.totalorder %v2367, 0
        %v3624 = vand.u32 %v2367, 2139095040
        %v3625 = vshrl.u32 %v3624, 23
        %v3626 = vsub.s32 %v3625, 127
        %v3627 = vand.u32 2147483647, %v2367
        %v3628 = vand.u32 %v3627, 8388607
        %v3629 = vor.u32 %v3628, 8388608
        %v3630 = vsub.s32 0, %v3629
        %v3631 = vadd.s32 %v3626, 1
        %vm3632 = vcmp.gt.s32.totalorder %v3631, 0
        %v3633 = vsel %vm3632, %v3631, 0
        %v3634 = vshrl.u32 %v3633, 5
        %v3635 = vand.u32 %v3633, 31
        %v3636 = vsub.s32 32, %v3635
        %v3637 = vshrl.u32 683565275, %v3636
        %v3638 = vshll.u32 683565275, %v3635
        %v3639 = vshrl.u32 2475754826, %v3636
        %v3640 = vor.u32 %v3638, %v3639
        %v3641 = vshll.u32 2475754826, %v3635
        %v3642 = vshrl.u32 2131351028, %v3636
        %v3643 = vor.u32 %v3641, %v3642
        %v3644 = vshll.u32 2131351028, %v3635
        %v3645 = vshrl.u32 2102212464, %v3636
        %v3646 = vor.u32 %v3644, %v3645
        %v3647 = vshll.u32 2102212464, %v3635
        %v3648 = vshrl.u32 920167782, %v3636
        %v3649 = vor.u32 %v3647, %v3648
        %v3650 = vshll.u32 920167782, %v3635
        %v3651 = vshrl.u32 1326507024, %v3636
        %v3652 = vor.u32 %v3650, %v3651
        %vm3653 = vcmp.lt.s32.totalorder %v3634, 1
        %vm3654 = vcmp.lt.s32.totalorder %v3634, 2
        %vm3655 = vcmp.lt.s32.totalorder %v3634, 3
        %vm3656 = vcmp.lt.s32.totalorder %v3634, 4
        %v3657 = vsel %vm3653, %v3637, %v3640
        %v3658 = vsel %vm3656, %v3646, 2102212464
        %v3659 = vsel %vm3655, %v3643, %v3658
        %v3660 = vsel %vm3654, %v3657, %v3659
        %v3661 = vsel %vm3653, %v3640, %v3643
        %v3662 = vsel %vm3656, %v3649, 920167782
        %v3663 = vsel %vm3655, %v3646, %v3662
        %v3664 = vsel %vm3654, %v3661, %v3663
        %v3665 = vsel %vm3653, %v3643, %v3646
        %v3666 = vsel %vm3656, %v3652, 1326507024
        %v3667 = vsel %vm3655, %v3649, %v3666
        %v3668 = vsel %vm3654, %v3665, %v3667
        %v3669 = vshll.u32 %v3629, 8
        %v3670 = vmul.u32.u64.compose %v3669, %v3668
        %v3671 = vextract.low.u32 %v3670
        %v3672 = vextract.high.u32 %v3670
        %v3673 = vmul.u32.u64.compose %v3669, %v3664
        %v3674 = vextract.low.u32 %v3673
        %v3675 = vextract.high.u32 %v3673
        %v3676 = vmul.u32 %v3669, %v3660
        %v3677 = vadd.s32 %v3672, %v3674
        %vm3678 = vc.u32 %v3672, %v3674
        %v3679 = vadd.s32 %v3675, 1
        %v3680 = vsel %vm3678, %v3679, %v3675
        %v3681 = vadd.s32 %v3676, %v3680
        %v3682 = vadd.s32 %v3681, 536870912
        %v3683 = vshrl.u32 %v3682, 30
        %v3684 = vshll.u32 %v3683, 30
        %v3685 = vsub.s32 %v3681, %v3684
        %vm3686 = vcmp.lt.s32.totalorder %v3685, 0
        %v3687 = vsub.s32 0, %v3685
        %v3688 = vsel %vm3686, %v3687, %v3685
        %v3689 = vclz %v3688
        %v3690 = vsub.s32 %v3689, 2
        %vm3691 = vcmp.gt.s32.totalorder 0, %v3690
        %v3692 = vsel %vm3691, 0, %v3690
        %v3693 = vsub.s32 32, %v3692
        %v3694 = vshll.u32 %v3685, %v3692
        %v3695 = vshrl.u32 %v3677, %v3693
        %v3696 = vor.u32 %v3694, %v3695
        %v3697 = vsub.s32 4294967266, %v3692
        %v3698 = vadd.s32 %v3697, 127
        %v3699 = vshll.u32 %v3698, 23
        %v3700 = vor.u32 4788187, %v3699
        %v3701 = vand.u32 2147483647, %v3700
        %v3703 = vcvt.s32.f32 %v3696
        %v3704 = vmul.f32 %v3703, %v3701
        %v3705 = vxor.u32 %v3704, 2147483648
        %v3706 = vsel %vm3623, %v3705, %v3704
        %v3707 = vsub.s32 4, %v3683
        %v3708 = vsel %vm3623, %v3707, %v3683
        %v3709 = vsel %vm3622, %v2367, %v3706
        %v3710 = vsel %vm3622, 0, %v3708
        %v3711 = vcosq.f32.pop %v3709
        %v3712 = vsinq.f32.pop %v3709
        %vm3713 = vweird.f32 %v2367
        %v3714 = vand.u32 %v3710, 3
        %vm3715 = vcmp.lt.s32.totalorder %v3714, 2
        %vm3716 = vcmp.eq.s32.totalorder %v3714, 0
        %v3717 = vxor.u32 %v3712, 2147483648
        %v3718 = vsel %vm3716, %v3711, %v3717
        %vm3719 = vcmp.eq.s32.totalorder %v3714, 2
        %v3720 = vxor.u32 %v3711, 2147483648
        %v3721 = vsel %vm3719, %v3720, %v3712
        %v3722 = vsel %vm3715, %v3718, %v3721
        %v3723 = vsel %vm3713, nan, %v3722
        %v3724 = vand.u32 2147483647, %v3081
        %vm3725 = vcmp.le.f32.partialorder %v3724, 0.7853982
        %vm3726 = vcmp.lt.s32.totalorder %v3081, 0
        %v3727 = vand.u32 %v3081, 2139095040
        %v3728 = vshrl.u32 %v3727, 23
        %v3729 = vsub.s32 %v3728, 127
        %v3730 = vand.u32 2147483647, %v3081
        %v3731 = vand.u32 %v3730, 8388607
        %v3732 = vor.u32 %v3731, 8388608
        %v3733 = vsub.s32 0, %v3732
        %v3734 = vadd.s32 %v3729, 1
        %vm3735 = vcmp.gt.s32.totalorder %v3734, 0
        %v3736 = vsel %vm3735, %v3734, 0
        %v3737 = vshrl.u32 %v3736, 5
        %v3738 = vand.u32 %v3736, 31
        %v3739 = vsub.s32 32, %v3738
        %v3740 = vshrl.u32 683565275, %v3739
        %v3741 = vshll.u32 683565275, %v3738
        %v3742 = vshrl.u32 2475754826, %v3739
        %v3743 = vor.u32 %v3741, %v3742
        %v3744 = vshll.u32 2475754826, %v3738
        %v3745 = vshrl.u32 2131351028, %v3739
        %v3746 = vor.u32 %v3744, %v3745
        %v3747 = vshll.u32 2131351028, %v3738
        %v3748 = vshrl.u32 2102212464, %v3739
        %v3749 = vor.u32 %v3747, %v3748
        %v3750 = vshll.u32 2102212464, %v3738
        %v3751 = vshrl.u32 920167782, %v3739
        %v3752 = vor.u32 %v3750, %v3751
        %v3753 = vshll.u32 920167782, %v3738
        %v3754 = vshrl.u32 1326507024, %v3739
        %v3755 = vor.u32 %v3753, %v3754
        %vm3756 = vcmp.lt.s32.totalorder %v3737, 1
        %vm3757 = vcmp.lt.s32.totalorder %v3737, 2
        %vm3758 = vcmp.lt.s32.totalorder %v3737, 3
        %vm3759 = vcmp.lt.s32.totalorder %v3737, 4
        %v3760 = vsel %vm3756, %v3740, %v3743
        %v3761 = vsel %vm3759, %v3749, 2102212464
        %v3762 = vsel %vm3758, %v3746, %v3761
        %v3763 = vsel %vm3757, %v3760, %v3762
        %v3764 = vsel %vm3756, %v3743, %v3746
        %v3765 = vsel %vm3759, %v3752, 920167782
        %v3766 = vsel %vm3758, %v3749, %v3765
        %v3767 = vsel %vm3757, %v3764, %v3766
        %v3768 = vsel %vm3756, %v3746, %v3749
        %v3769 = vsel %vm3759, %v3755, 1326507024
        %v3770 = vsel %vm3758, %v3752, %v3769
        %v3771 = vsel %vm3757, %v3768, %v3770
        %v3772 = vshll.u32 %v3732, 8
        %v3773 = vmul.u32.u64.compose %v3772, %v3771
        %v3774 = vextract.low.u32 %v3773
        %v3775 = vextract.high.u32 %v3773
        %v3776 = vmul.u32.u64.compose %v3772, %v3767
        %v3777 = vextract.low.u32 %v3776
        %v3778 = vextract.high.u32 %v3776
        %v3779 = vmul.u32 %v3772, %v3763
        %v3780 = vadd.s32 %v3775, %v3777
        %vm3781 = vc.u32 %v3775, %v3777
        %v3782 = vadd.s32 %v3778, 1
        %v3783 = vsel %vm3781, %v3782, %v3778
        %v3784 = vadd.s32 %v3779, %v3783
        %v3785 = vadd.s32 %v3784, 536870912
        %v3786 = vshrl.u32 %v3785, 30
        %v3787 = vshll.u32 %v3786, 30
        %v3788 = vsub.s32 %v3784, %v3787
        %vm3789 = vcmp.lt.s32.totalorder %v3788, 0
        %v3790 = vsub.s32 0, %v3788
        %v3791 = vsel %vm3789, %v3790, %v3788
        %v3792 = vclz %v3791
        %v3793 = vsub.s32 %v3792, 2
        %vm3794 = vcmp.gt.s32.totalorder 0, %v3793
        %v3795 = vsel %vm3794, 0, %v3793
        %v3796 = vsub.s32 32, %v3795
        %v3797 = vshll.u32 %v3788, %v3795
        %v3798 = vshrl.u32 %v3780, %v3796
        %v3799 = vor.u32 %v3797, %v3798
        %v3800 = vsub.s32 4294967266, %v3795
        %v3801 = vadd.s32 %v3800, 127
        %v3802 = vshll.u32 %v3801, 23
        %v3803 = vor.u32 4788187, %v3802
        %v3804 = vand.u32 2147483647, %v3803
        %v3806 = vcvt.s32.f32 %v3799
        %v3807 = vmul.f32 %v3806, %v3804
        %v3808 = vxor.u32 %v3807, 2147483648
        %v3809 = vsel %vm3726, %v3808, %v3807
        %v3810 = vsub.s32 4, %v3786
        %v3811 = vsel %vm3726, %v3810, %v3786
        %v3812 = vsel %vm3725, %v3081, %v3809
        %v3813 = vsel %vm3725, 0, %v3811
        %v3814 = vcosq.f32.pop %v3812
        %v3815 = vsinq.f32.pop %v3812
        %vm3816 = vweird.f32 %v3081
        %v3817 = vand.u32 %v3813, 3
        %vm3818 = vcmp.lt.s32.totalorder %v3817, 2
        %vm3819 = vcmp.eq.s32.totalorder %v3817, 0
        %v3820 = vxor.u32 %v3815, 2147483648
        %v3821 = vsel %vm3819, %v3814, %v3820
        %vm3822 = vcmp.eq.s32.totalorder %v3817, 2
        %v3823 = vxor.u32 %v3814, 2147483648
        %v3824 = vsel %vm3822, %v3823, %v3815
        %v3825 = vsel %vm3818, %v3821, %v3824
        %v3826 = vsel %vm3816, nan, %v3825
        %v3827 = vand.u32 2147483647, %v3083
        %vm3828 = vcmp.le.f32.partialorder %v3827, 0.7853982
        %vm3829 = vcmp.lt.s32.totalorder %v3083, 0
        %v3830 = vand.u32 %v3083, 2139095040
        %v3831 = vshrl.u32 %v3830, 23
        %v3832 = vsub.s32 %v3831, 127
        %v3833 = vand.u32 2147483647, %v3083
        %v3834 = vand.u32 %v3833, 8388607
        %v3835 = vor.u32 %v3834, 8388608
        %v3836 = vsub.s32 0, %v3835
        %v3837 = vadd.s32 %v3832, 1
        %vm3838 = vcmp.gt.s32.totalorder %v3837, 0
        %v3839 = vsel %vm3838, %v3837, 0
        %v3840 = vshrl.u32 %v3839, 5
        %v3841 = vand.u32 %v3839, 31
        %v3842 = vsub.s32 32, %v3841
        %v3843 = vshrl.u32 683565275, %v3842
        %v3844 = vshll.u32 683565275, %v3841
        %v3845 = vshrl.u32 2475754826, %v3842
        %v3846 = vor.u32 %v3844, %v3845
        %v3847 = vshll.u32 2475754826, %v3841
        %v3848 = vshrl.u32 2131351028, %v3842
        %v3849 = vor.u32 %v3847, %v3848
        %v3850 = vshll.u32 2131351028, %v3841
        %v3851 = vshrl.u32 2102212464, %v3842
        %v3852 = vor.u32 %v3850, %v3851
        %v3853 = vshll.u32 2102212464, %v3841
        %v3854 = vshrl.u32 920167782, %v3842
        %v3855 = vor.u32 %v3853, %v3854
        %v3856 = vshll.u32 920167782, %v3841
        %v3857 = vshrl.u32 1326507024, %v3842
        %v3858 = vor.u32 %v3856, %v3857
        %vm3859 = vcmp.lt.s32.totalorder %v3840, 1
        %vm3860 = vcmp.lt.s32.totalorder %v3840, 2
        %vm3861 = vcmp.lt.s32.totalorder %v3840, 3
        %vm3862 = vcmp.lt.s32.totalorder %v3840, 4
        %v3863 = vsel %vm3859, %v3843, %v3846
        %v3864 = vsel %vm3862, %v3852, 2102212464
        %v3865 = vsel %vm3861, %v3849, %v3864
        %v3866 = vsel %vm3860, %v3863, %v3865
        %v3867 = vsel %vm3859, %v3846, %v3849
        %v3868 = vsel %vm3862, %v3855, 920167782
        %v3869 = vsel %vm3861, %v3852, %v3868
        %v3870 = vsel %vm3860, %v3867, %v3869
        %v3871 = vsel %vm3859, %v3849, %v3852
        %v3872 = vsel %vm3862, %v3858, 1326507024
        %v3873 = vsel %vm3861, %v3855, %v3872
        %v3874 = vsel %vm3860, %v3871, %v3873
        %v3875 = vshll.u32 %v3835, 8
        %v3876 = vmul.u32.u64.compose %v3875, %v3874
        %v3877 = vextract.low.u32 %v3876
        %v3878 = vextract.high.u32 %v3876
        %v3879 = vmul.u32.u64.compose %v3875, %v3870
        %v3880 = vextract.low.u32 %v3879
        %v3881 = vextract.high.u32 %v3879
        %v3882 = vmul.u32 %v3875, %v3866
        %v3883 = vadd.s32 %v3878, %v3880
        %vm3884 = vc.u32 %v3878, %v3880
        %v3885 = vadd.s32 %v3881, 1
        %v3886 = vsel %vm3884, %v3885, %v3881
        %v3887 = vadd.s32 %v3882, %v3886
        %v3888 = vadd.s32 %v3887, 536870912
        %v3889 = vshrl.u32 %v3888, 30
        %v3890 = vshll.u32 %v3889, 30
        %v3891 = vsub.s32 %v3887, %v3890
        %vm3892 = vcmp.lt.s32.totalorder %v3891, 0
        %v3893 = vsub.s32 0, %v3891
        %v3894 = vsel %vm3892, %v3893, %v3891
        %v3895 = vclz %v3894
        %v3896 = vsub.s32 %v3895, 2
        %vm3897 = vcmp.gt.s32.totalorder 0, %v3896
        %v3898 = vsel %vm3897, 0, %v3896
        %v3899 = vsub.s32 32, %v3898
        %v3900 = vshll.u32 %v3891, %v3898
        %v3901 = vshrl.u32 %v3883, %v3899
        %v3902 = vor.u32 %v3900, %v3901
        %v3903 = vsub.s32 4294967266, %v3898
        %v3904 = vadd.s32 %v3903, 127
        %v3905 = vshll.u32 %v3904, 23
        %v3906 = vor.u32 4788187, %v3905
        %v3907 = vand.u32 2147483647, %v3906
        %v3909 = vcvt.s32.f32 %v3902
        %v3910 = vmul.f32 %v3909, %v3907
        %v3911 = vxor.u32 %v3910, 2147483648
        %v3912 = vsel %vm3829, %v3911, %v3910
        %v3913 = vsub.s32 4, %v3889
        %v3914 = vsel %vm3829, %v3913, %v3889
        %v3915 = vsel %vm3828, %v3083, %v3912
        %v3916 = vsel %vm3828, 0, %v3914
        %v3917 = vcosq.f32.pop %v3915
        %v3918 = vsinq.f32.pop %v3915
        %vm3919 = vweird.f32 %v3083
        %v3920 = vand.u32 %v3916, 3
        %vm3921 = vcmp.lt.s32.totalorder %v3920, 2
        %vm3922 = vcmp.eq.s32.totalorder %v3920, 0
        %v3923 = vxor.u32 %v3918, 2147483648
        %v3924 = vsel %vm3922, %v3917, %v3923
        %vm3925 = vcmp.eq.s32.totalorder %v3920, 2
        %v3926 = vxor.u32 %v3917, 2147483648
        %v3927 = vsel %vm3925, %v3926, %v3918
        %v3928 = vsel %vm3921, %v3924, %v3927
        %v3929 = vsel %vm3919, nan, %v3928
        %v3930 = vand.u32 2147483647, %v940
        %vm3931 = vcmp.le.f32.partialorder %v3930, 0.7853982
        %vm3932 = vcmp.lt.s32.totalorder %v940, 0
        %v3933 = vand.u32 %v940, 2139095040
        %v3934 = vshrl.u32 %v3933, 23
        %v3935 = vsub.s32 %v3934, 127
        %v3936 = vand.u32 2147483647, %v940
        %v3937 = vand.u32 %v3936, 8388607
        %v3938 = vor.u32 %v3937, 8388608
        %v3939 = vsub.s32 0, %v3938
        %v3940 = vadd.s32 %v3935, 1
        %vm3941 = vcmp.gt.s32.totalorder %v3940, 0
        %v3942 = vsel %vm3941, %v3940, 0
        %v3943 = vshrl.u32 %v3942, 5
        %v3944 = vand.u32 %v3942, 31
        %v3945 = vsub.s32 32, %v3944
        %v3946 = vshrl.u32 683565275, %v3945
        %v3947 = vshll.u32 683565275, %v3944
        %v3948 = vshrl.u32 2475754826, %v3945
        %v3949 = vor.u32 %v3947, %v3948
        %v3950 = vshll.u32 2475754826, %v3944
        %v3951 = vshrl.u32 2131351028, %v3945
        %v3952 = vor.u32 %v3950, %v3951
        %v3953 = vshll.u32 2131351028, %v3944
        %v3954 = vshrl.u32 2102212464, %v3945
        %v3955 = vor.u32 %v3953, %v3954
        %v3956 = vshll.u32 2102212464, %v3944
        %v3957 = vshrl.u32 920167782, %v3945
        %v3958 = vor.u32 %v3956, %v3957
        %v3959 = vshll.u32 920167782, %v3944
        %v3960 = vshrl.u32 1326507024, %v3945
        %v3961 = vor.u32 %v3959, %v3960
        %vm3962 = vcmp.lt.s32.totalorder %v3943, 1
        %vm3963 = vcmp.lt.s32.totalorder %v3943, 2
        %vm3964 = vcmp.lt.s32.totalorder %v3943, 3
        %vm3965 = vcmp.lt.s32.totalorder %v3943, 4
        %v3966 = vsel %vm3962, %v3946, %v3949
        %v3967 = vsel %vm3965, %v3955, 2102212464
        %v3968 = vsel %vm3964, %v3952, %v3967
        %v3969 = vsel %vm3963, %v3966, %v3968
        %v3970 = vsel %vm3962, %v3949, %v3952
        %v3971 = vsel %vm3965, %v3958, 920167782
        %v3972 = vsel %vm3964, %v3955, %v3971
        %v3973 = vsel %vm3963, %v3970, %v3972
        %v3974 = vsel %vm3962, %v3952, %v3955
        %v3975 = vsel %vm3965, %v3961, 1326507024
        %v3976 = vsel %vm3964, %v3958, %v3975
        %v3977 = vsel %vm3963, %v3974, %v3976
        %v3978 = vshll.u32 %v3938, 8
        %v3979 = vmul.u32.u64.compose %v3978, %v3977
        %v3980 = vextract.low.u32 %v3979
        %v3981 = vextract.high.u32 %v3979
        %v3982 = vmul.u32.u64.compose %v3978, %v3973
        %v3983 = vextract.low.u32 %v3982
        %v3984 = vextract.high.u32 %v3982
        %v3985 = vmul.u32 %v3978, %v3969
        %v3986 = vadd.s32 %v3981, %v3983
        %vm3987 = vc.u32 %v3981, %v3983
        %v3988 = vadd.s32 %v3984, 1
        %v3989 = vsel %vm3987, %v3988, %v3984
        %v3990 = vadd.s32 %v3985, %v3989
        %v3991 = vadd.s32 %v3990, 536870912
        %v3992 = vshrl.u32 %v3991, 30
        %v3993 = vshll.u32 %v3992, 30
        %v3994 = vsub.s32 %v3990, %v3993
        %vm3995 = vcmp.lt.s32.totalorder %v3994, 0
        %v3996 = vsub.s32 0, %v3994
        %v3997 = vsel %vm3995, %v3996, %v3994
        %v3998 = vclz %v3997
        %v3999 = vsub.s32 %v3998, 2
        %vm4000 = vcmp.gt.s32.totalorder 0, %v3999
        %v4001 = vsel %vm4000, 0, %v3999
        %v4002 = vsub.s32 32, %v4001
        %v4003 = vshll.u32 %v3994, %v4001
        %v4004 = vshrl.u32 %v3986, %v4002
        %v4005 = vor.u32 %v4003, %v4004
        %v4006 = vsub.s32 4294967266, %v4001
        %v4007 = vadd.s32 %v4006, 127
        %v4008 = vshll.u32 %v4007, 23
        %v4009 = vor.u32 4788187, %v4008
        %v4010 = vand.u32 2147483647, %v4009
        %v4012 = vcvt.s32.f32 %v4005
        %v4013 = vmul.f32 %v4012, %v4010
        %v4014 = vxor.u32 %v4013, 2147483648
        %v4015 = vsel %vm3932, %v4014, %v4013
        %v4016 = vsub.s32 4, %v3992
        %v4017 = vsel %vm3932, %v4016, %v3992
        %v4018 = vsel %vm3931, %v940, %v4015
        %v4019 = vsel %vm3931, 0, %v4017
        %v4020 = vcosq.f32.pop %v4018
        %v4021 = vsinq.f32.pop %v4018
        %vm4022 = vweird.f32 %v940
        %v4023 = vand.u32 %v4019, 3
        %vm4024 = vcmp.lt.s32.totalorder %v4023, 2
        %vm4025 = vcmp.eq.s32.totalorder %v4023, 0
        %v4026 = vxor.u32 %v4021, 2147483648
        %v4027 = vsel %vm4025, %v4020, %v4026
        %vm4028 = vcmp.eq.s32.totalorder %v4023, 2
        %v4029 = vxor.u32 %v4020, 2147483648
        %v4030 = vsel %vm4028, %v4029, %v4021
        %v4031 = vsel %vm4024, %v4027, %v4030
        %v4032 = vsel %vm4022, nan, %v4031
        %v4033 = vand.u32 2147483647, %v942
        %vm4034 = vcmp.le.f32.partialorder %v4033, 0.7853982
        %vm4035 = vcmp.lt.s32.totalorder %v942, 0
        %v4036 = vand.u32 %v942, 2139095040
        %v4037 = vshrl.u32 %v4036, 23
        %v4038 = vsub.s32 %v4037, 127
        %v4039 = vand.u32 2147483647, %v942
        %v4040 = vand.u32 %v4039, 8388607
        %v4041 = vor.u32 %v4040, 8388608
        %v4042 = vsub.s32 0, %v4041
        %v4043 = vadd.s32 %v4038, 1
        %vm4044 = vcmp.gt.s32.totalorder %v4043, 0
        %v4045 = vsel %vm4044, %v4043, 0
        %v4046 = vshrl.u32 %v4045, 5
        %v4047 = vand.u32 %v4045, 31
        %v4048 = vsub.s32 32, %v4047
        %v4049 = vshrl.u32 683565275, %v4048
        %v4050 = vshll.u32 683565275, %v4047
        %v4051 = vshrl.u32 2475754826, %v4048
        %v4052 = vor.u32 %v4050, %v4051
        %v4053 = vshll.u32 2475754826, %v4047
        %v4054 = vshrl.u32 2131351028, %v4048
        %v4055 = vor.u32 %v4053, %v4054
        %v4056 = vshll.u32 2131351028, %v4047
        %v4057 = vshrl.u32 2102212464, %v4048
        %v4058 = vor.u32 %v4056, %v4057
        %v4059 = vshll.u32 2102212464, %v4047
        %v4060 = vshrl.u32 920167782, %v4048
        %v4061 = vor.u32 %v4059, %v4060
        %v4062 = vshll.u32 920167782, %v4047
        %v4063 = vshrl.u32 1326507024, %v4048
        %v4064 = vor.u32 %v4062, %v4063
        %vm4065 = vcmp.lt.s32.totalorder %v4046, 1
        %vm4066 = vcmp.lt.s32.totalorder %v4046, 2
        %vm4067 = vcmp.lt.s32.totalorder %v4046, 3
        %vm4068 = vcmp.lt.s32.totalorder %v4046, 4
        %v4069 = vsel %vm4065, %v4049, %v4052
        %v4070 = vsel %vm4068, %v4058, 2102212464
        %v4071 = vsel %vm4067, %v4055, %v4070
        %v4072 = vsel %vm4066, %v4069, %v4071
        %v4073 = vsel %vm4065, %v4052, %v4055
        %v4074 = vsel %vm4068, %v4061, 920167782
        %v4075 = vsel %vm4067, %v4058, %v4074
        %v4076 = vsel %vm4066, %v4073, %v4075
        %v4077 = vsel %vm4065, %v4055, %v4058
        %v4078 = vsel %vm4068, %v4064, 1326507024
        %v4079 = vsel %vm4067, %v4061, %v4078
        %v4080 = vsel %vm4066, %v4077, %v4079
        %v4081 = vshll.u32 %v4041, 8
        %v4082 = vmul.u32.u64.compose %v4081, %v4080
        %v4083 = vextract.low.u32 %v4082
        %v4084 = vextract.high.u32 %v4082
        %v4085 = vmul.u32.u64.compose %v4081, %v4076
        %v4086 = vextract.low.u32 %v4085
        %v4087 = vextract.high.u32 %v4085
        %v4088 = vmul.u32 %v4081, %v4072
        %v4089 = vadd.s32 %v4084, %v4086
        %vm4090 = vc.u32 %v4084, %v4086
        %v4091 = vadd.s32 %v4087, 1
        %v4092 = vsel %vm4090, %v4091, %v4087
        %v4093 = vadd.s32 %v4088, %v4092
        %v4094 = vadd.s32 %v4093, 536870912
        %v4095 = vshrl.u32 %v4094, 30
        %v4096 = vshll.u32 %v4095, 30
        %v4097 = vsub.s32 %v4093, %v4096
        %vm4098 = vcmp.lt.s32.totalorder %v4097, 0
        %v4099 = vsub.s32 0, %v4097
        %v4100 = vsel %vm4098, %v4099, %v4097
        %v4101 = vclz %v4100
        %v4102 = vsub.s32 %v4101, 2
        %vm4103 = vcmp.gt.s32.totalorder 0, %v4102
        %v4104 = vsel %vm4103, 0, %v4102
        %v4105 = vsub.s32 32, %v4104
        %v4106 = vshll.u32 %v4097, %v4104
        %v4107 = vshrl.u32 %v4089, %v4105
        %v4108 = vor.u32 %v4106, %v4107
        %v4109 = vsub.s32 4294967266, %v4104
        %v4110 = vadd.s32 %v4109, 127
        %v4111 = vshll.u32 %v4110, 23
        %v4112 = vor.u32 4788187, %v4111
        %v4113 = vand.u32 2147483647, %v4112
        %v4115 = vcvt.s32.f32 %v4108
        %v4116 = vmul.f32 %v4115, %v4113
        %v4117 = vxor.u32 %v4116, 2147483648
        %v4118 = vsel %vm4035, %v4117, %v4116
        %v4119 = vsub.s32 4, %v4095
        %v4120 = vsel %vm4035, %v4119, %v4095
        %v4121 = vsel %vm4034, %v942, %v4118
        %v4122 = vsel %vm4034, 0, %v4120
        %v4123 = vcosq.f32.pop %v4121
        %v4124 = vsinq.f32.pop %v4121
        %vm4125 = vweird.f32 %v942
        %v4126 = vand.u32 %v4122, 3
        %vm4127 = vcmp.lt.s32.totalorder %v4126, 2
        %vm4128 = vcmp.eq.s32.totalorder %v4126, 0
        %v4129 = vxor.u32 %v4124, 2147483648
        %v4130 = vsel %vm4128, %v4123, %v4129
        %vm4131 = vcmp.eq.s32.totalorder %v4126, 2
        %v4132 = vxor.u32 %v4123, 2147483648
        %v4133 = vsel %vm4131, %v4132, %v4124
        %v4134 = vsel %vm4127, %v4130, %v4133
        %v4135 = vsel %vm4125, nan, %v4134
        %v4136 = vand.u32 2147483647, %v1656
        %vm4137 = vcmp.le.f32.partialorder %v4136, 0.7853982
        %vm4138 = vcmp.lt.s32.totalorder %v1656, 0
        %v4139 = vand.u32 %v1656, 2139095040
        %v4140 = vshrl.u32 %v4139, 23
        %v4141 = vsub.s32 %v4140, 127
        %v4142 = vand.u32 2147483647, %v1656
        %v4143 = vand.u32 %v4142, 8388607
        %v4144 = vor.u32 %v4143, 8388608
        %v4145 = vsub.s32 0, %v4144
        %v4146 = vadd.s32 %v4141, 1
        %vm4147 = vcmp.gt.s32.totalorder %v4146, 0
        %v4148 = vsel %vm4147, %v4146, 0
        %v4149 = vshrl.u32 %v4148, 5
        %v4150 = vand.u32 %v4148, 31
        %v4151 = vsub.s32 32, %v4150
        %v4152 = vshrl.u32 683565275, %v4151
        %v4153 = vshll.u32 683565275, %v4150
        %v4154 = vshrl.u32 2475754826, %v4151
        %v4155 = vor.u32 %v4153, %v4154
        %v4156 = vshll.u32 2475754826, %v4150
        %v4157 = vshrl.u32 2131351028, %v4151
        %v4158 = vor.u32 %v4156, %v4157
        %v4159 = vshll.u32 2131351028, %v4150
        %v4160 = vshrl.u32 2102212464, %v4151
        %v4161 = vor.u32 %v4159, %v4160
        %v4162 = vshll.u32 2102212464, %v4150
        %v4163 = vshrl.u32 920167782, %v4151
        %v4164 = vor.u32 %v4162, %v4163
        %v4165 = vshll.u32 920167782, %v4150
        %v4166 = vshrl.u32 1326507024, %v4151
        %v4167 = vor.u32 %v4165, %v4166
        %vm4168 = vcmp.lt.s32.totalorder %v4149, 1
        %vm4169 = vcmp.lt.s32.totalorder %v4149, 2
        %vm4170 = vcmp.lt.s32.totalorder %v4149, 3
        %vm4171 = vcmp.lt.s32.totalorder %v4149, 4
        %v4172 = vsel %vm4168, %v4152, %v4155
        %v4173 = vsel %vm4171, %v4161, 2102212464
        %v4174 = vsel %vm4170, %v4158, %v4173
        %v4175 = vsel %vm4169, %v4172, %v4174
        %v4176 = vsel %vm4168, %v4155, %v4158
        %v4177 = vsel %vm4171, %v4164, 920167782
        %v4178 = vsel %vm4170, %v4161, %v4177
        %v4179 = vsel %vm4169, %v4176, %v4178
        %v4180 = vsel %vm4168, %v4158, %v4161
        %v4181 = vsel %vm4171, %v4167, 1326507024
        %v4182 = vsel %vm4170, %v4164, %v4181
        %v4183 = vsel %vm4169, %v4180, %v4182
        %v4184 = vshll.u32 %v4144, 8
        %v4185 = vmul.u32.u64.compose %v4184, %v4183
        %v4186 = vextract.low.u32 %v4185
        %v4187 = vextract.high.u32 %v4185
        %v4188 = vmul.u32.u64.compose %v4184, %v4179
        %v4189 = vextract.low.u32 %v4188
        %v4190 = vextract.high.u32 %v4188
        %v4191 = vmul.u32 %v4184, %v4175
        %v4192 = vadd.s32 %v4187, %v4189
        %vm4193 = vc.u32 %v4187, %v4189
        %v4194 = vadd.s32 %v4190, 1
        %v4195 = vsel %vm4193, %v4194, %v4190
        %v4196 = vadd.s32 %v4191, %v4195
        %v4197 = vadd.s32 %v4196, 536870912
        %v4198 = vshrl.u32 %v4197, 30
        %v4199 = vshll.u32 %v4198, 30
        %v4200 = vsub.s32 %v4196, %v4199
        %vm4201 = vcmp.lt.s32.totalorder %v4200, 0
        %v4202 = vsub.s32 0, %v4200
        %v4203 = vsel %vm4201, %v4202, %v4200
        %v4204 = vclz %v4203
        %v4205 = vsub.s32 %v4204, 2
        %vm4206 = vcmp.gt.s32.totalorder 0, %v4205
        %v4207 = vsel %vm4206, 0, %v4205
        %v4208 = vsub.s32 32, %v4207
        %v4209 = vshll.u32 %v4200, %v4207
        %v4210 = vshrl.u32 %v4192, %v4208
        %v4211 = vor.u32 %v4209, %v4210
        %v4212 = vsub.s32 4294967266, %v4207
        %v4213 = vadd.s32 %v4212, 127
        %v4214 = vshll.u32 %v4213, 23
        %v4215 = vor.u32 4788187, %v4214
        %v4216 = vand.u32 2147483647, %v4215
        %v4218 = vcvt.s32.f32 %v4211
        %v4219 = vmul.f32 %v4218, %v4216
        %v4220 = vxor.u32 %v4219, 2147483648
        %v4221 = vsel %vm4138, %v4220, %v4219
        %v4222 = vsub.s32 4, %v4198
        %v4223 = vsel %vm4138, %v4222, %v4198
        %v4224 = vsel %vm4137, %v1656, %v4221
        %v4225 = vsel %vm4137, 0, %v4223
        %v4226 = vcosq.f32.pop %v4224
        %v4227 = vsinq.f32.pop %v4224
        %vm4228 = vweird.f32 %v1656
        %v4229 = vand.u32 %v4225, 3
        %vm4230 = vcmp.lt.s32.totalorder %v4229, 2
        %vm4231 = vcmp.eq.s32.totalorder %v4229, 0
        %v4232 = vxor.u32 %v4227, 2147483648
        %v4233 = vsel %vm4231, %v4226, %v4232
        %vm4234 = vcmp.eq.s32.totalorder %v4229, 2
        %v4235 = vxor.u32 %v4226, 2147483648
        %v4236 = vsel %vm4234, %v4235, %v4227
        %v4237 = vsel %vm4230, %v4233, %v4236
        %v4238 = vsel %vm4228, nan, %v4237
        %v4239 = vand.u32 2147483647, %v1658
        %vm4240 = vcmp.le.f32.partialorder %v4239, 0.7853982
        %vm4241 = vcmp.lt.s32.totalorder %v1658, 0
        %v4242 = vand.u32 %v1658, 2139095040
        %v4243 = vshrl.u32 %v4242, 23
        %v4244 = vsub.s32 %v4243, 127
        %v4245 = vand.u32 2147483647, %v1658
        %v4246 = vand.u32 %v4245, 8388607
        %v4247 = vor.u32 %v4246, 8388608
        %v4248 = vsub.s32 0, %v4247
        %v4249 = vadd.s32 %v4244, 1
        %vm4250 = vcmp.gt.s32.totalorder %v4249, 0
        %v4251 = vsel %vm4250, %v4249, 0
        %v4252 = vshrl.u32 %v4251, 5
        %v4253 = vand.u32 %v4251, 31
        %v4254 = vsub.s32 32, %v4253
        %v4255 = vshrl.u32 683565275, %v4254
        %v4256 = vshll.u32 683565275, %v4253
        %v4257 = vshrl.u32 2475754826, %v4254
        %v4258 = vor.u32 %v4256, %v4257
        %v4259 = vshll.u32 2475754826, %v4253
        %v4260 = vshrl.u32 2131351028, %v4254
        %v4261 = vor.u32 %v4259, %v4260
        %v4262 = vshll.u32 2131351028, %v4253
        %v4263 = vshrl.u32 2102212464, %v4254
        %v4264 = vor.u32 %v4262, %v4263
        %v4265 = vshll.u32 2102212464, %v4253
        %v4266 = vshrl.u32 920167782, %v4254
        %v4267 = vor.u32 %v4265, %v4266
        %v4268 = vshll.u32 920167782, %v4253
        %v4269 = vshrl.u32 1326507024, %v4254
        %v4270 = vor.u32 %v4268, %v4269
        %vm4271 = vcmp.lt.s32.totalorder %v4252, 1
        %vm4272 = vcmp.lt.s32.totalorder %v4252, 2
        %vm4273 = vcmp.lt.s32.totalorder %v4252, 3
        %vm4274 = vcmp.lt.s32.totalorder %v4252, 4
        %v4275 = vsel %vm4271, %v4255, %v4258
        %v4276 = vsel %vm4274, %v4264, 2102212464
        %v4277 = vsel %vm4273, %v4261, %v4276
        %v4278 = vsel %vm4272, %v4275, %v4277
        %v4279 = vsel %vm4271, %v4258, %v4261
        %v4280 = vsel %vm4274, %v4267, 920167782
        %v4281 = vsel %vm4273, %v4264, %v4280
        %v4282 = vsel %vm4272, %v4279, %v4281
        %v4283 = vsel %vm4271, %v4261, %v4264
        %v4284 = vsel %vm4274, %v4270, 1326507024
        %v4285 = vsel %vm4273, %v4267, %v4284
        %v4286 = vsel %vm4272, %v4283, %v4285
        %v4287 = vshll.u32 %v4247, 8
        %v4288 = vmul.u32.u64.compose %v4287, %v4286
        %v4289 = vextract.low.u32 %v4288
        %v4290 = vextract.high.u32 %v4288
        %v4291 = vmul.u32.u64.compose %v4287, %v4282
        %v4292 = vextract.low.u32 %v4291
        %v4293 = vextract.high.u32 %v4291
        %v4294 = vmul.u32 %v4287, %v4278
        %v4295 = vadd.s32 %v4290, %v4292
        %vm4296 = vc.u32 %v4290, %v4292
        %v4297 = vadd.s32 %v4293, 1
        %v4298 = vsel %vm4296, %v4297, %v4293
        %v4299 = vadd.s32 %v4294, %v4298
        %v4300 = vadd.s32 %v4299, 536870912
        %v4301 = vshrl.u32 %v4300, 30
        %v4302 = vshll.u32 %v4301, 30
        %v4303 = vsub.s32 %v4299, %v4302
        %vm4304 = vcmp.lt.s32.totalorder %v4303, 0
        %v4305 = vsub.s32 0, %v4303
        %v4306 = vsel %vm4304, %v4305, %v4303
        %v4307 = vclz %v4306
        %v4308 = vsub.s32 %v4307, 2
        %vm4309 = vcmp.gt.s32.totalorder 0, %v4308
        %v4310 = vsel %vm4309, 0, %v4308
        %v4311 = vsub.s32 32, %v4310
        %v4312 = vshll.u32 %v4303, %v4310
        %v4313 = vshrl.u32 %v4295, %v4311
        %v4314 = vor.u32 %v4312, %v4313
        %v4315 = vsub.s32 4294967266, %v4310
        %v4316 = vadd.s32 %v4315, 127
        %v4317 = vshll.u32 %v4316, 23
        %v4318 = vor.u32 4788187, %v4317
        %v4319 = vand.u32 2147483647, %v4318
        %v4321 = vcvt.s32.f32 %v4314
        %v4322 = vmul.f32 %v4321, %v4319
        %v4323 = vxor.u32 %v4322, 2147483648
        %v4324 = vsel %vm4241, %v4323, %v4322
        %v4325 = vsub.s32 4, %v4301
        %v4326 = vsel %vm4241, %v4325, %v4301
        %v4327 = vsel %vm4240, %v1658, %v4324
        %v4328 = vsel %vm4240, 0, %v4326
        %v4329 = vcosq.f32.pop %v4327
        %v4330 = vsinq.f32.pop %v4327
        %vm4331 = vweird.f32 %v1658
        %v4332 = vand.u32 %v4328, 3
        %vm4333 = vcmp.lt.s32.totalorder %v4332, 2
        %vm4334 = vcmp.eq.s32.totalorder %v4332, 0
        %v4335 = vxor.u32 %v4330, 2147483648
        %v4336 = vsel %vm4334, %v4329, %v4335
        %vm4337 = vcmp.eq.s32.totalorder %v4332, 2
        %v4338 = vxor.u32 %v4329, 2147483648
        %v4339 = vsel %vm4337, %v4338, %v4330
        %v4340 = vsel %vm4333, %v4336, %v4339
        %v4341 = vsel %vm4331, nan, %v4340
        %v4342 = vand.u32 2147483647, %v2372
        %vm4343 = vcmp.le.f32.partialorder %v4342, 0.7853982
        %vm4344 = vcmp.lt.s32.totalorder %v2372, 0
        %v4345 = vand.u32 %v2372, 2139095040
        %v4346 = vshrl.u32 %v4345, 23
        %v4347 = vsub.s32 %v4346, 127
        %v4348 = vand.u32 2147483647, %v2372
        %v4349 = vand.u32 %v4348, 8388607
        %v4350 = vor.u32 %v4349, 8388608
        %v4351 = vsub.s32 0, %v4350
        %v4352 = vadd.s32 %v4347, 1
        %vm4353 = vcmp.gt.s32.totalorder %v4352, 0
        %v4354 = vsel %vm4353, %v4352, 0
        %v4355 = vshrl.u32 %v4354, 5
        %v4356 = vand.u32 %v4354, 31
        %v4357 = vsub.s32 32, %v4356
        %v4358 = vshrl.u32 683565275, %v4357
        %v4359 = vshll.u32 683565275, %v4356
        %v4360 = vshrl.u32 2475754826, %v4357
        %v4361 = vor.u32 %v4359, %v4360
        %v4362 = vshll.u32 2475754826, %v4356
        %v4363 = vshrl.u32 2131351028, %v4357
        %v4364 = vor.u32 %v4362, %v4363
        %v4365 = vshll.u32 2131351028, %v4356
        %v4366 = vshrl.u32 2102212464, %v4357
        %v4367 = vor.u32 %v4365, %v4366
        %v4368 = vshll.u32 2102212464, %v4356
        %v4369 = vshrl.u32 920167782, %v4357
        %v4370 = vor.u32 %v4368, %v4369
        %v4371 = vshll.u32 920167782, %v4356
        %v4372 = vshrl.u32 1326507024, %v4357
        %v4373 = vor.u32 %v4371, %v4372
        %vm4374 = vcmp.lt.s32.totalorder %v4355, 1
        %vm4375 = vcmp.lt.s32.totalorder %v4355, 2
        %vm4376 = vcmp.lt.s32.totalorder %v4355, 3
        %vm4377 = vcmp.lt.s32.totalorder %v4355, 4
        %v4378 = vsel %vm4374, %v4358, %v4361
        %v4379 = vsel %vm4377, %v4367, 2102212464
        %v4380 = vsel %vm4376, %v4364, %v4379
        %v4381 = vsel %vm4375, %v4378, %v4380
        %v4382 = vsel %vm4374, %v4361, %v4364
        %v4383 = vsel %vm4377, %v4370, 920167782
        %v4384 = vsel %vm4376, %v4367, %v4383
        %v4385 = vsel %vm4375, %v4382, %v4384
        %v4386 = vsel %vm4374, %v4364, %v4367
        %v4387 = vsel %vm4377, %v4373, 1326507024
        %v4388 = vsel %vm4376, %v4370, %v4387
        %v4389 = vsel %vm4375, %v4386, %v4388
        %v4390 = vshll.u32 %v4350, 8
        %v4391 = vmul.u32.u64.compose %v4390, %v4389
        %v4392 = vextract.low.u32 %v4391
        %v4393 = vextract.high.u32 %v4391
        %v4394 = vmul.u32.u64.compose %v4390, %v4385
        %v4395 = vextract.low.u32 %v4394
        %v4396 = vextract.high.u32 %v4394
        %v4397 = vmul.u32 %v4390, %v4381
        %v4398 = vadd.s32 %v4393, %v4395
        %vm4399 = vc.u32 %v4393, %v4395
        %v4400 = vadd.s32 %v4396, 1
        %v4401 = vsel %vm4399, %v4400, %v4396
        %v4402 = vadd.s32 %v4397, %v4401
        %v4403 = vadd.s32 %v4402, 536870912
        %v4404 = vshrl.u32 %v4403, 30
        %v4405 = vshll.u32 %v4404, 30
        %v4406 = vsub.s32 %v4402, %v4405
        %vm4407 = vcmp.lt.s32.totalorder %v4406, 0
        %v4408 = vsub.s32 0, %v4406
        %v4409 = vsel %vm4407, %v4408, %v4406
        %v4410 = vclz %v4409
        %v4411 = vsub.s32 %v4410, 2
        %vm4412 = vcmp.gt.s32.totalorder 0, %v4411
        %v4413 = vsel %vm4412, 0, %v4411
        %v4414 = vsub.s32 32, %v4413
        %v4415 = vshll.u32 %v4406, %v4413
        %v4416 = vshrl.u32 %v4398, %v4414
        %v4417 = vor.u32 %v4415, %v4416
        %v4418 = vsub.s32 4294967266, %v4413
        %v4419 = vadd.s32 %v4418, 127
        %v4420 = vshll.u32 %v4419, 23
        %v4421 = vor.u32 4788187, %v4420
        %v4422 = vand.u32 2147483647, %v4421
        %v4424 = vcvt.s32.f32 %v4417
        %v4425 = vmul.f32 %v4424, %v4422
        %v4426 = vxor.u32 %v4425, 2147483648
        %v4427 = vsel %vm4344, %v4426, %v4425
        %v4428 = vsub.s32 4, %v4404
        %v4429 = vsel %vm4344, %v4428, %v4404
        %v4430 = vsel %vm4343, %v2372, %v4427
        %v4431 = vsel %vm4343, 0, %v4429
        %v4432 = vcosq.f32.pop %v4430
        %v4433 = vsinq.f32.pop %v4430
        %vm4434 = vweird.f32 %v2372
        %v4435 = vand.u32 %v4431, 3
        %vm4436 = vcmp.lt.s32.totalorder %v4435, 2
        %vm4437 = vcmp.eq.s32.totalorder %v4435, 0
        %v4438 = vxor.u32 %v4433, 2147483648
        %v4439 = vsel %vm4437, %v4432, %v4438
        %vm4440 = vcmp.eq.s32.totalorder %v4435, 2
        %v4441 = vxor.u32 %v4432, 2147483648
        %v4442 = vsel %vm4440, %v4441, %v4433
        %v4443 = vsel %vm4436, %v4439, %v4442
        %v4444 = vsel %vm4434, nan, %v4443
        %v4445 = vand.u32 2147483647, %v2374
        %vm4446 = vcmp.le.f32.partialorder %v4445, 0.7853982
        %vm4447 = vcmp.lt.s32.totalorder %v2374, 0
        %v4448 = vand.u32 %v2374, 2139095040
        %v4449 = vshrl.u32 %v4448, 23
        %v4450 = vsub.s32 %v4449, 127
        %v4451 = vand.u32 2147483647, %v2374
        %v4452 = vand.u32 %v4451, 8388607
        %v4453 = vor.u32 %v4452, 8388608
        %v4454 = vsub.s32 0, %v4453
        %v4455 = vadd.s32 %v4450, 1
        %vm4456 = vcmp.gt.s32.totalorder %v4455, 0
        %v4457 = vsel %vm4456, %v4455, 0
        %v4458 = vshrl.u32 %v4457, 5
        %v4459 = vand.u32 %v4457, 31
        %v4460 = vsub.s32 32, %v4459
        %v4461 = vshrl.u32 683565275, %v4460
        %v4462 = vshll.u32 683565275, %v4459
        %v4463 = vshrl.u32 2475754826, %v4460
        %v4464 = vor.u32 %v4462, %v4463
        %v4465 = vshll.u32 2475754826, %v4459
        %v4466 = vshrl.u32 2131351028, %v4460
        %v4467 = vor.u32 %v4465, %v4466
        %v4468 = vshll.u32 2131351028, %v4459
        %v4469 = vshrl.u32 2102212464, %v4460
        %v4470 = vor.u32 %v4468, %v4469
        %v4471 = vshll.u32 2102212464, %v4459
        %v4472 = vshrl.u32 920167782, %v4460
        %v4473 = vor.u32 %v4471, %v4472
        %v4474 = vshll.u32 920167782, %v4459
        %v4475 = vshrl.u32 1326507024, %v4460
        %v4476 = vor.u32 %v4474, %v4475
        %vm4477 = vcmp.lt.s32.totalorder %v4458, 1
        %vm4478 = vcmp.lt.s32.totalorder %v4458, 2
        %vm4479 = vcmp.lt.s32.totalorder %v4458, 3
        %vm4480 = vcmp.lt.s32.totalorder %v4458, 4
        %v4481 = vsel %vm4477, %v4461, %v4464
        %v4482 = vsel %vm4480, %v4470, 2102212464
        %v4483 = vsel %vm4479, %v4467, %v4482
        %v4484 = vsel %vm4478, %v4481, %v4483
        %v4485 = vsel %vm4477, %v4464, %v4467
        %v4486 = vsel %vm4480, %v4473, 920167782
        %v4487 = vsel %vm4479, %v4470, %v4486
        %v4488 = vsel %vm4478, %v4485, %v4487
        %v4489 = vsel %vm4477, %v4467, %v4470
        %v4490 = vsel %vm4480, %v4476, 1326507024
        %v4491 = vsel %vm4479, %v4473, %v4490
        %v4492 = vsel %vm4478, %v4489, %v4491
        %v4493 = vshll.u32 %v4453, 8
        %v4494 = vmul.u32.u64.compose %v4493, %v4492
        %v4495 = vextract.low.u32 %v4494
        %v4496 = vextract.high.u32 %v4494
        %v4497 = vmul.u32.u64.compose %v4493, %v4488
        %v4498 = vextract.low.u32 %v4497
        %v4499 = vextract.high.u32 %v4497
        %v4500 = vmul.u32 %v4493, %v4484
        %v4501 = vadd.s32 %v4496, %v4498
        %vm4502 = vc.u32 %v4496, %v4498
        %v4503 = vadd.s32 %v4499, 1
        %v4504 = vsel %vm4502, %v4503, %v4499
        %v4505 = vadd.s32 %v4500, %v4504
        %v4506 = vadd.s32 %v4505, 536870912
        %v4507 = vshrl.u32 %v4506, 30
        %v4508 = vshll.u32 %v4507, 30
        %v4509 = vsub.s32 %v4505, %v4508
        %vm4510 = vcmp.lt.s32.totalorder %v4509, 0
        %v4511 = vsub.s32 0, %v4509
        %v4512 = vsel %vm4510, %v4511, %v4509
        %v4513 = vclz %v4512
        %v4514 = vsub.s32 %v4513, 2
        %vm4515 = vcmp.gt.s32.totalorder 0, %v4514
        %v4516 = vsel %vm4515, 0, %v4514
        %v4517 = vsub.s32 32, %v4516
        %v4518 = vshll.u32 %v4509, %v4516
        %v4519 = vshrl.u32 %v4501, %v4517
        %v4520 = vor.u32 %v4518, %v4519
        %v4521 = vsub.s32 4294967266, %v4516
        %v4522 = vadd.s32 %v4521, 127
        %v4523 = vshll.u32 %v4522, 23
        %v4524 = vor.u32 4788187, %v4523
        %v4525 = vand.u32 2147483647, %v4524
        %v4527 = vcvt.s32.f32 %v4520
        %v4528 = vmul.f32 %v4527, %v4525
        %v4529 = vxor.u32 %v4528, 2147483648
        %v4530 = vsel %vm4447, %v4529, %v4528
        %v4531 = vsub.s32 4, %v4507
        %v4532 = vsel %vm4447, %v4531, %v4507
        %v4533 = vsel %vm4446, %v2374, %v4530
        %v4534 = vsel %vm4446, 0, %v4532
        %v4535 = vcosq.f32.pop %v4533
        %v4536 = vsinq.f32.pop %v4533
        %vm4537 = vweird.f32 %v2374
        %v4538 = vand.u32 %v4534, 3
        %vm4539 = vcmp.lt.s32.totalorder %v4538, 2
        %vm4540 = vcmp.eq.s32.totalorder %v4538, 0
        %v4541 = vxor.u32 %v4536, 2147483648
        %v4542 = vsel %vm4540, %v4535, %v4541
        %vm4543 = vcmp.eq.s32.totalorder %v4538, 2
        %v4544 = vxor.u32 %v4535, 2147483648
        %v4545 = vsel %vm4543, %v4544, %v4536
        %v4546 = vsel %vm4539, %v4542, %v4545
        %v4547 = vsel %vm4537, nan, %v4546
        %v4548 = vand.u32 2147483647, %v3088
        %vm4549 = vcmp.le.f32.partialorder %v4548, 0.7853982
        %vm4550 = vcmp.lt.s32.totalorder %v3088, 0
        %v4551 = vand.u32 %v3088, 2139095040
        %v4552 = vshrl.u32 %v4551, 23
        %v4553 = vsub.s32 %v4552, 127
        %v4554 = vand.u32 2147483647, %v3088
        %v4555 = vand.u32 %v4554, 8388607
        %v4556 = vor.u32 %v4555, 8388608
        %v4557 = vsub.s32 0, %v4556
        %v4558 = vadd.s32 %v4553, 1
        %vm4559 = vcmp.gt.s32.totalorder %v4558, 0
        %v4560 = vsel %vm4559, %v4558, 0
        %v4561 = vshrl.u32 %v4560, 5
        %v4562 = vand.u32 %v4560, 31
        %v4563 = vsub.s32 32, %v4562
        %v4564 = vshrl.u32 683565275, %v4563
        %v4565 = vshll.u32 683565275, %v4562
        %v4566 = vshrl.u32 2475754826, %v4563
        %v4567 = vor.u32 %v4565, %v4566
        %v4568 = vshll.u32 2475754826, %v4562
        %v4569 = vshrl.u32 2131351028, %v4563
        %v4570 = vor.u32 %v4568, %v4569
        %v4571 = vshll.u32 2131351028, %v4562
        %v4572 = vshrl.u32 2102212464, %v4563
        %v4573 = vor.u32 %v4571, %v4572
        %v4574 = vshll.u32 2102212464, %v4562
        %v4575 = vshrl.u32 920167782, %v4563
        %v4576 = vor.u32 %v4574, %v4575
        %v4577 = vshll.u32 920167782, %v4562
        %v4578 = vshrl.u32 1326507024, %v4563
        %v4579 = vor.u32 %v4577, %v4578
        %vm4580 = vcmp.lt.s32.totalorder %v4561, 1
        %vm4581 = vcmp.lt.s32.totalorder %v4561, 2
        %vm4582 = vcmp.lt.s32.totalorder %v4561, 3
        %vm4583 = vcmp.lt.s32.totalorder %v4561, 4
        %v4584 = vsel %vm4580, %v4564, %v4567
        %v4585 = vsel %vm4583, %v4573, 2102212464
        %v4586 = vsel %vm4582, %v4570, %v4585
        %v4587 = vsel %vm4581, %v4584, %v4586
        %v4588 = vsel %vm4580, %v4567, %v4570
        %v4589 = vsel %vm4583, %v4576, 920167782
        %v4590 = vsel %vm4582, %v4573, %v4589
        %v4591 = vsel %vm4581, %v4588, %v4590
        %v4592 = vsel %vm4580, %v4570, %v4573
        %v4593 = vsel %vm4583, %v4579, 1326507024
        %v4594 = vsel %vm4582, %v4576, %v4593
        %v4595 = vsel %vm4581, %v4592, %v4594
        %v4596 = vshll.u32 %v4556, 8
        %v4597 = vmul.u32.u64.compose %v4596, %v4595
        %v4598 = vextract.low.u32 %v4597
        %v4599 = vextract.high.u32 %v4597
        %v4600 = vmul.u32.u64.compose %v4596, %v4591
        %v4601 = vextract.low.u32 %v4600
        %v4602 = vextract.high.u32 %v4600
        %v4603 = vmul.u32 %v4596, %v4587
        %v4604 = vadd.s32 %v4599, %v4601
        %vm4605 = vc.u32 %v4599, %v4601
        %v4606 = vadd.s32 %v4602, 1
        %v4607 = vsel %vm4605, %v4606, %v4602
        %v4608 = vadd.s32 %v4603, %v4607
        %v4609 = vadd.s32 %v4608, 536870912
        %v4610 = vshrl.u32 %v4609, 30
        %v4611 = vshll.u32 %v4610, 30
        %v4612 = vsub.s32 %v4608, %v4611
        %vm4613 = vcmp.lt.s32.totalorder %v4612, 0
        %v4614 = vsub.s32 0, %v4612
        %v4615 = vsel %vm4613, %v4614, %v4612
        %v4616 = vclz %v4615
        %v4617 = vsub.s32 %v4616, 2
        %vm4618 = vcmp.gt.s32.totalorder 0, %v4617
        %v4619 = vsel %vm4618, 0, %v4617
        %v4620 = vsub.s32 32, %v4619
        %v4621 = vshll.u32 %v4612, %v4619
        %v4622 = vshrl.u32 %v4604, %v4620
        %v4623 = vor.u32 %v4621, %v4622
        %v4624 = vsub.s32 4294967266, %v4619
        %v4625 = vadd.s32 %v4624, 127
        %v4626 = vshll.u32 %v4625, 23
        %v4627 = vor.u32 4788187, %v4626
        %v4628 = vand.u32 2147483647, %v4627
        %v4630 = vcvt.s32.f32 %v4623
        %v4631 = vmul.f32 %v4630, %v4628
        %v4632 = vxor.u32 %v4631, 2147483648
        %v4633 = vsel %vm4550, %v4632, %v4631
        %v4634 = vsub.s32 4, %v4610
        %v4635 = vsel %vm4550, %v4634, %v4610
        %v4636 = vsel %vm4549, %v3088, %v4633
        %v4637 = vsel %vm4549, 0, %v4635
        %v4638 = vcosq.f32.pop %v4636
        %v4639 = vsinq.f32.pop %v4636
        %vm4640 = vweird.f32 %v3088
        %v4641 = vand.u32 %v4637, 3
        %vm4642 = vcmp.lt.s32.totalorder %v4641, 2
        %vm4643 = vcmp.eq.s32.totalorder %v4641, 0
        %v4644 = vxor.u32 %v4639, 2147483648
        %v4645 = vsel %vm4643, %v4638, %v4644
        %vm4646 = vcmp.eq.s32.totalorder %v4641, 2
        %v4647 = vxor.u32 %v4638, 2147483648
        %v4648 = vsel %vm4646, %v4647, %v4639
        %v4649 = vsel %vm4642, %v4645, %v4648
        %v4650 = vsel %vm4640, nan, %v4649
        %v4651 = vand.u32 2147483647, %v3090
        %vm4652 = vcmp.le.f32.partialorder %v4651, 0.7853982
        %vm4653 = vcmp.lt.s32.totalorder %v3090, 0
        %v4654 = vand.u32 %v3090, 2139095040
        %v4655 = vshrl.u32 %v4654, 23
        %v4656 = vsub.s32 %v4655, 127
        %v4657 = vand.u32 2147483647, %v3090
        %v4658 = vand.u32 %v4657, 8388607
        %v4659 = vor.u32 %v4658, 8388608
        %v4660 = vsub.s32 0, %v4659
        %v4661 = vadd.s32 %v4656, 1
        %vm4662 = vcmp.gt.s32.totalorder %v4661, 0
        %v4663 = vsel %vm4662, %v4661, 0
        %v4664 = vshrl.u32 %v4663, 5
        %v4665 = vand.u32 %v4663, 31
        %v4666 = vsub.s32 32, %v4665
        %v4667 = vshrl.u32 683565275, %v4666
        %v4668 = vshll.u32 683565275, %v4665
        %v4669 = vshrl.u32 2475754826, %v4666
        %v4670 = vor.u32 %v4668, %v4669
        %v4671 = vshll.u32 2475754826, %v4665
        %v4672 = vshrl.u32 2131351028, %v4666
        %v4673 = vor.u32 %v4671, %v4672
        %v4674 = vshll.u32 2131351028, %v4665
        %v4675 = vshrl.u32 2102212464, %v4666
        %v4676 = vor.u32 %v4674, %v4675
        %v4677 = vshll.u32 2102212464, %v4665
        %v4678 = vshrl.u32 920167782, %v4666
        %v4679 = vor.u32 %v4677, %v4678
        %v4680 = vshll.u32 920167782, %v4665
        %v4681 = vshrl.u32 1326507024, %v4666
        %v4682 = vor.u32 %v4680, %v4681
        %vm4683 = vcmp.lt.s32.totalorder %v4664, 1
        %vm4684 = vcmp.lt.s32.totalorder %v4664, 2
        %vm4685 = vcmp.lt.s32.totalorder %v4664, 3
        %vm4686 = vcmp.lt.s32.totalorder %v4664, 4
        %v4687 = vsel %vm4683, %v4667, %v4670
        %v4688 = vsel %vm4686, %v4676, 2102212464
        %v4689 = vsel %vm4685, %v4673, %v4688
        %v4690 = vsel %vm4684, %v4687, %v4689
        %v4691 = vsel %vm4683, %v4670, %v4673
        %v4692 = vsel %vm4686, %v4679, 920167782
        %v4693 = vsel %vm4685, %v4676, %v4692
        %v4694 = vsel %vm4684, %v4691, %v4693
        %v4695 = vsel %vm4683, %v4673, %v4676
        %v4696 = vsel %vm4686, %v4682, 1326507024
        %v4697 = vsel %vm4685, %v4679, %v4696
        %v4698 = vsel %vm4684, %v4695, %v4697
        %v4699 = vshll.u32 %v4659, 8
        %v4700 = vmul.u32.u64.compose %v4699, %v4698
        %v4701 = vextract.low.u32 %v4700
        %v4702 = vextract.high.u32 %v4700
        %v4703 = vmul.u32.u64.compose %v4699, %v4694
        %v4704 = vextract.low.u32 %v4703
        %v4705 = vextract.high.u32 %v4703
        %v4706 = vmul.u32 %v4699, %v4690
        %v4707 = vadd.s32 %v4702, %v4704
        %vm4708 = vc.u32 %v4702, %v4704
        %v4709 = vadd.s32 %v4705, 1
        %v4710 = vsel %vm4708, %v4709, %v4705
        %v4711 = vadd.s32 %v4706, %v4710
        %v4712 = vadd.s32 %v4711, 536870912
        %v4713 = vshrl.u32 %v4712, 30
        %v4714 = vshll.u32 %v4713, 30
        %v4715 = vsub.s32 %v4711, %v4714
        %vm4716 = vcmp.lt.s32.totalorder %v4715, 0
        %v4717 = vsub.s32 0, %v4715
        %v4718 = vsel %vm4716, %v4717, %v4715
        %v4719 = vclz %v4718
        %v4720 = vsub.s32 %v4719, 2
        %vm4721 = vcmp.gt.s32.totalorder 0, %v4720
        %v4722 = vsel %vm4721, 0, %v4720
        %v4723 = vsub.s32 32, %v4722
        %v4724 = vshll.u32 %v4715, %v4722
        %v4725 = vshrl.u32 %v4707, %v4723
        %v4726 = vor.u32 %v4724, %v4725
        %v4727 = vsub.s32 4294967266, %v4722
        %v4728 = vadd.s32 %v4727, 127
        %v4729 = vshll.u32 %v4728, 23
        %v4730 = vor.u32 4788187, %v4729
        %v4731 = vand.u32 2147483647, %v4730
        %v4733 = vcvt.s32.f32 %v4726
        %v4734 = vmul.f32 %v4733, %v4731
        %v4735 = vxor.u32 %v4734, 2147483648
        %v4736 = vsel %vm4653, %v4735, %v4734
        %v4737 = vsub.s32 4, %v4713
        %v4738 = vsel %vm4653, %v4737, %v4713
        %v4739 = vsel %vm4652, %v3090, %v4736
        %v4740 = vsel %vm4652, 0, %v4738
        %v4741 = vcosq.f32.pop %v4739
        %v4742 = vsinq.f32.pop %v4739
        %vm4743 = vweird.f32 %v3090
        %v4744 = vand.u32 %v4740, 3
        %vm4745 = vcmp.lt.s32.totalorder %v4744, 2
        %vm4746 = vcmp.eq.s32.totalorder %v4744, 0
        %v4747 = vxor.u32 %v4742, 2147483648
        %v4748 = vsel %vm4746, %v4741, %v4747
        %vm4749 = vcmp.eq.s32.totalorder %v4744, 2
        %v4750 = vxor.u32 %v4741, 2147483648
        %v4751 = vsel %vm4749, %v4750, %v4742
        %v4752 = vsel %vm4745, %v4748, %v4751
        %v4753 = vsel %vm4743, nan, %v4752
        %v4754 = vand.u32 2147483647, %v947
        %vm4755 = vcmp.le.f32.partialorder %v4754, 0.7853982
        %vm4756 = vcmp.lt.s32.totalorder %v947, 0
        %v4757 = vand.u32 %v947, 2139095040
        %v4758 = vshrl.u32 %v4757, 23
        %v4759 = vsub.s32 %v4758, 127
        %v4760 = vand.u32 2147483647, %v947
        %v4761 = vand.u32 %v4760, 8388607
        %v4762 = vor.u32 %v4761, 8388608
        %v4763 = vsub.s32 0, %v4762
        %v4764 = vadd.s32 %v4759, 1
        %vm4765 = vcmp.gt.s32.totalorder %v4764, 0
        %v4766 = vsel %vm4765, %v4764, 0
        %v4767 = vshrl.u32 %v4766, 5
        %v4768 = vand.u32 %v4766, 31
        %v4769 = vsub.s32 32, %v4768
        %v4770 = vshrl.u32 683565275, %v4769
        %v4771 = vshll.u32 683565275, %v4768
        %v4772 = vshrl.u32 2475754826, %v4769
        %v4773 = vor.u32 %v4771, %v4772
        %v4774 = vshll.u32 2475754826, %v4768
        %v4775 = vshrl.u32 2131351028, %v4769
        %v4776 = vor.u32 %v4774, %v4775
        %v4777 = vshll.u32 2131351028, %v4768
        %v4778 = vshrl.u32 2102212464, %v4769
        %v4779 = vor.u32 %v4777, %v4778
        %v4780 = vshll.u32 2102212464, %v4768
        %v4781 = vshrl.u32 920167782, %v4769
        %v4782 = vor.u32 %v4780, %v4781
        %v4783 = vshll.u32 920167782, %v4768
        %v4784 = vshrl.u32 1326507024, %v4769
        %v4785 = vor.u32 %v4783, %v4784
        %vm4786 = vcmp.lt.s32.totalorder %v4767, 1
        %vm4787 = vcmp.lt.s32.totalorder %v4767, 2
        %vm4788 = vcmp.lt.s32.totalorder %v4767, 3
        %vm4789 = vcmp.lt.s32.totalorder %v4767, 4
        %v4790 = vsel %vm4786, %v4770, %v4773
        %v4791 = vsel %vm4789, %v4779, 2102212464
        %v4792 = vsel %vm4788, %v4776, %v4791
        %v4793 = vsel %vm4787, %v4790, %v4792
        %v4794 = vsel %vm4786, %v4773, %v4776
        %v4795 = vsel %vm4789, %v4782, 920167782
        %v4796 = vsel %vm4788, %v4779, %v4795
        %v4797 = vsel %vm4787, %v4794, %v4796
        %v4798 = vsel %vm4786, %v4776, %v4779
        %v4799 = vsel %vm4789, %v4785, 1326507024
        %v4800 = vsel %vm4788, %v4782, %v4799
        %v4801 = vsel %vm4787, %v4798, %v4800
        %v4802 = vshll.u32 %v4762, 8
        %v4803 = vmul.u32.u64.compose %v4802, %v4801
        %v4804 = vextract.low.u32 %v4803
        %v4805 = vextract.high.u32 %v4803
        %v4806 = vmul.u32.u64.compose %v4802, %v4797
        %v4807 = vextract.low.u32 %v4806
        %v4808 = vextract.high.u32 %v4806
        %v4809 = vmul.u32 %v4802, %v4793
        %v4810 = vadd.s32 %v4805, %v4807
        %vm4811 = vc.u32 %v4805, %v4807
        %v4812 = vadd.s32 %v4808, 1
        %v4813 = vsel %vm4811, %v4812, %v4808
        %v4814 = vadd.s32 %v4809, %v4813
        %v4815 = vadd.s32 %v4814, 536870912
        %v4816 = vshrl.u32 %v4815, 30
        %v4817 = vshll.u32 %v4816, 30
        %v4818 = vsub.s32 %v4814, %v4817
        %vm4819 = vcmp.lt.s32.totalorder %v4818, 0
        %v4820 = vsub.s32 0, %v4818
        %v4821 = vsel %vm4819, %v4820, %v4818
        %v4822 = vclz %v4821
        %v4823 = vsub.s32 %v4822, 2
        %vm4824 = vcmp.gt.s32.totalorder 0, %v4823
        %v4825 = vsel %vm4824, 0, %v4823
        %v4826 = vsub.s32 32, %v4825
        %v4827 = vshll.u32 %v4818, %v4825
        %v4828 = vshrl.u32 %v4810, %v4826
        %v4829 = vor.u32 %v4827, %v4828
        %v4830 = vsub.s32 4294967266, %v4825
        %v4831 = vadd.s32 %v4830, 127
        %v4832 = vshll.u32 %v4831, 23
        %v4833 = vor.u32 4788187, %v4832
        %v4834 = vand.u32 2147483647, %v4833
        %v4836 = vcvt.s32.f32 %v4829
        %v4837 = vmul.f32 %v4836, %v4834
        %v4838 = vxor.u32 %v4837, 2147483648
        %v4839 = vsel %vm4756, %v4838, %v4837
        %v4840 = vsub.s32 4, %v4816
        %v4841 = vsel %vm4756, %v4840, %v4816
        %v4842 = vsel %vm4755, %v947, %v4839
        %v4843 = vsel %vm4755, 0, %v4841
        %v4844 = vcosq.f32.pop %v4842
        %v4845 = vsinq.f32.pop %v4842
        %vm4846 = vweird.f32 %v947
        %v4847 = vand.u32 %v4843, 3
        %vm4848 = vcmp.lt.s32.totalorder %v4847, 2
        %vm4849 = vcmp.eq.s32.totalorder %v4847, 0
        %v4850 = vxor.u32 %v4845, 2147483648
        %v4851 = vsel %vm4849, %v4844, %v4850
        %vm4852 = vcmp.eq.s32.totalorder %v4847, 2
        %v4853 = vxor.u32 %v4844, 2147483648
        %v4854 = vsel %vm4852, %v4853, %v4845
        %v4855 = vsel %vm4848, %v4851, %v4854
        %v4856 = vsel %vm4846, nan, %v4855
        %v4857 = vand.u32 2147483647, %v949
        %vm4858 = vcmp.le.f32.partialorder %v4857, 0.7853982
        %vm4859 = vcmp.lt.s32.totalorder %v949, 0
        %v4860 = vand.u32 %v949, 2139095040
        %v4861 = vshrl.u32 %v4860, 23
        %v4862 = vsub.s32 %v4861, 127
        %v4863 = vand.u32 2147483647, %v949
        %v4864 = vand.u32 %v4863, 8388607
        %v4865 = vor.u32 %v4864, 8388608
        %v4866 = vsub.s32 0, %v4865
        %v4867 = vadd.s32 %v4862, 1
        %vm4868 = vcmp.gt.s32.totalorder %v4867, 0
        %v4869 = vsel %vm4868, %v4867, 0
        %v4870 = vshrl.u32 %v4869, 5
        %v4871 = vand.u32 %v4869, 31
        %v4872 = vsub.s32 32, %v4871
        %v4873 = vshrl.u32 683565275, %v4872
        %v4874 = vshll.u32 683565275, %v4871
        %v4875 = vshrl.u32 2475754826, %v4872
        %v4876 = vor.u32 %v4874, %v4875
        %v4877 = vshll.u32 2475754826, %v4871
        %v4878 = vshrl.u32 2131351028, %v4872
        %v4879 = vor.u32 %v4877, %v4878
        %v4880 = vshll.u32 2131351028, %v4871
        %v4881 = vshrl.u32 2102212464, %v4872
        %v4882 = vor.u32 %v4880, %v4881
        %v4883 = vshll.u32 2102212464, %v4871
        %v4884 = vshrl.u32 920167782, %v4872
        %v4885 = vor.u32 %v4883, %v4884
        %v4886 = vshll.u32 920167782, %v4871
        %v4887 = vshrl.u32 1326507024, %v4872
        %v4888 = vor.u32 %v4886, %v4887
        %vm4889 = vcmp.lt.s32.totalorder %v4870, 1
        %vm4890 = vcmp.lt.s32.totalorder %v4870, 2
        %vm4891 = vcmp.lt.s32.totalorder %v4870, 3
        %vm4892 = vcmp.lt.s32.totalorder %v4870, 4
        %v4893 = vsel %vm4889, %v4873, %v4876
        %v4894 = vsel %vm4892, %v4882, 2102212464
        %v4895 = vsel %vm4891, %v4879, %v4894
        %v4896 = vsel %vm4890, %v4893, %v4895
        %v4897 = vsel %vm4889, %v4876, %v4879
        %v4898 = vsel %vm4892, %v4885, 920167782
        %v4899 = vsel %vm4891, %v4882, %v4898
        %v4900 = vsel %vm4890, %v4897, %v4899
        %v4901 = vsel %vm4889, %v4879, %v4882
        %v4902 = vsel %vm4892, %v4888, 1326507024
        %v4903 = vsel %vm4891, %v4885, %v4902
        %v4904 = vsel %vm4890, %v4901, %v4903
        %v4905 = vshll.u32 %v4865, 8
        %v4906 = vmul.u32.u64.compose %v4905, %v4904
        %v4907 = vextract.low.u32 %v4906
        %v4908 = vextract.high.u32 %v4906
        %v4909 = vmul.u32.u64.compose %v4905, %v4900
        %v4910 = vextract.low.u32 %v4909
        %v4911 = vextract.high.u32 %v4909
        %v4912 = vmul.u32 %v4905, %v4896
        %v4913 = vadd.s32 %v4908, %v4910
        %vm4914 = vc.u32 %v4908, %v4910
        %v4915 = vadd.s32 %v4911, 1
        %v4916 = vsel %vm4914, %v4915, %v4911
        %v4917 = vadd.s32 %v4912, %v4916
        %v4918 = vadd.s32 %v4917, 536870912
        %v4919 = vshrl.u32 %v4918, 30
        %v4920 = vshll.u32 %v4919, 30
        %v4921 = vsub.s32 %v4917, %v4920
        %vm4922 = vcmp.lt.s32.totalorder %v4921, 0
        %v4923 = vsub.s32 0, %v4921
        %v4924 = vsel %vm4922, %v4923, %v4921
        %v4925 = vclz %v4924
        %v4926 = vsub.s32 %v4925, 2
        %vm4927 = vcmp.gt.s32.totalorder 0, %v4926
        %v4928 = vsel %vm4927, 0, %v4926
        %v4929 = vsub.s32 32, %v4928
        %v4930 = vshll.u32 %v4921, %v4928
        %v4931 = vshrl.u32 %v4913, %v4929
        %v4932 = vor.u32 %v4930, %v4931
        %v4933 = vsub.s32 4294967266, %v4928
        %v4934 = vadd.s32 %v4933, 127
        %v4935 = vshll.u32 %v4934, 23
        %v4936 = vor.u32 4788187, %v4935
        %v4937 = vand.u32 2147483647, %v4936
        %v4939 = vcvt.s32.f32 %v4932
        %v4940 = vmul.f32 %v4939, %v4937
        %v4941 = vxor.u32 %v4940, 2147483648
        %v4942 = vsel %vm4859, %v4941, %v4940
        %v4943 = vsub.s32 4, %v4919
        %v4944 = vsel %vm4859, %v4943, %v4919
        %v4945 = vsel %vm4858, %v949, %v4942
        %v4946 = vsel %vm4858, 0, %v4944
        %v4947 = vcosq.f32.pop %v4945
        %v4948 = vsinq.f32.pop %v4945
        %vm4949 = vweird.f32 %v949
        %v4950 = vand.u32 %v4946, 3
        %vm4951 = vcmp.lt.s32.totalorder %v4950, 2
        %vm4952 = vcmp.eq.s32.totalorder %v4950, 0
        %v4953 = vxor.u32 %v4948, 2147483648
        %v4954 = vsel %vm4952, %v4947, %v4953
        %vm4955 = vcmp.eq.s32.totalorder %v4950, 2
        %v4956 = vxor.u32 %v4947, 2147483648
        %v4957 = vsel %vm4955, %v4956, %v4948
        %v4958 = vsel %vm4951, %v4954, %v4957
        %v4959 = vsel %vm4949, nan, %v4958
        %v4960 = vand.u32 2147483647, %v1663
        %vm4961 = vcmp.le.f32.partialorder %v4960, 0.7853982
        %vm4962 = vcmp.lt.s32.totalorder %v1663, 0
        %v4963 = vand.u32 %v1663, 2139095040
        %v4964 = vshrl.u32 %v4963, 23
        %v4965 = vsub.s32 %v4964, 127
        %v4966 = vand.u32 2147483647, %v1663
        %v4967 = vand.u32 %v4966, 8388607
        %v4968 = vor.u32 %v4967, 8388608
        %v4969 = vsub.s32 0, %v4968
        %v4970 = vadd.s32 %v4965, 1
        %vm4971 = vcmp.gt.s32.totalorder %v4970, 0
        %v4972 = vsel %vm4971, %v4970, 0
        %v4973 = vshrl.u32 %v4972, 5
        %v4974 = vand.u32 %v4972, 31
        %v4975 = vsub.s32 32, %v4974
        %v4976 = vshrl.u32 683565275, %v4975
        %v4977 = vshll.u32 683565275, %v4974
        %v4978 = vshrl.u32 2475754826, %v4975
        %v4979 = vor.u32 %v4977, %v4978
        %v4980 = vshll.u32 2475754826, %v4974
        %v4981 = vshrl.u32 2131351028, %v4975
        %v4982 = vor.u32 %v4980, %v4981
        %v4983 = vshll.u32 2131351028, %v4974
        %v4984 = vshrl.u32 2102212464, %v4975
        %v4985 = vor.u32 %v4983, %v4984
        %v4986 = vshll.u32 2102212464, %v4974
        %v4987 = vshrl.u32 920167782, %v4975
        %v4988 = vor.u32 %v4986, %v4987
        %v4989 = vshll.u32 920167782, %v4974
        %v4990 = vshrl.u32 1326507024, %v4975
        %v4991 = vor.u32 %v4989, %v4990
        %vm4992 = vcmp.lt.s32.totalorder %v4973, 1
        %vm4993 = vcmp.lt.s32.totalorder %v4973, 2
        %vm4994 = vcmp.lt.s32.totalorder %v4973, 3
        %vm4995 = vcmp.lt.s32.totalorder %v4973, 4
        %v4996 = vsel %vm4992, %v4976, %v4979
        %v4997 = vsel %vm4995, %v4985, 2102212464
        %v4998 = vsel %vm4994, %v4982, %v4997
        %v4999 = vsel %vm4993, %v4996, %v4998
        %v5000 = vsel %vm4992, %v4979, %v4982
        %v5001 = vsel %vm4995, %v4988, 920167782
        %v5002 = vsel %vm4994, %v4985, %v5001
        %v5003 = vsel %vm4993, %v5000, %v5002
        %v5004 = vsel %vm4992, %v4982, %v4985
        %v5005 = vsel %vm4995, %v4991, 1326507024
        %v5006 = vsel %vm4994, %v4988, %v5005
        %v5007 = vsel %vm4993, %v5004, %v5006
        %v5008 = vshll.u32 %v4968, 8
        %v5009 = vmul.u32.u64.compose %v5008, %v5007
        %v5010 = vextract.low.u32 %v5009
        %v5011 = vextract.high.u32 %v5009
        %v5012 = vmul.u32.u64.compose %v5008, %v5003
        %v5013 = vextract.low.u32 %v5012
        %v5014 = vextract.high.u32 %v5012
        %v5015 = vmul.u32 %v5008, %v4999
        %v5016 = vadd.s32 %v5011, %v5013
        %vm5017 = vc.u32 %v5011, %v5013
        %v5018 = vadd.s32 %v5014, 1
        %v5019 = vsel %vm5017, %v5018, %v5014
        %v5020 = vadd.s32 %v5015, %v5019
        %v5021 = vadd.s32 %v5020, 536870912
        %v5022 = vshrl.u32 %v5021, 30
        %v5023 = vshll.u32 %v5022, 30
        %v5024 = vsub.s32 %v5020, %v5023
        %vm5025 = vcmp.lt.s32.totalorder %v5024, 0
        %v5026 = vsub.s32 0, %v5024
        %v5027 = vsel %vm5025, %v5026, %v5024
        %v5028 = vclz %v5027
        %v5029 = vsub.s32 %v5028, 2
        %vm5030 = vcmp.gt.s32.totalorder 0, %v5029
        %v5031 = vsel %vm5030, 0, %v5029
        %v5032 = vsub.s32 32, %v5031
        %v5033 = vshll.u32 %v5024, %v5031
        %v5034 = vshrl.u32 %v5016, %v5032
        %v5035 = vor.u32 %v5033, %v5034
        %v5036 = vsub.s32 4294967266, %v5031
        %v5037 = vadd.s32 %v5036, 127
        %v5038 = vshll.u32 %v5037, 23
        %v5039 = vor.u32 4788187, %v5038
        %v5040 = vand.u32 2147483647, %v5039
        %v5042 = vcvt.s32.f32 %v5035
        %v5043 = vmul.f32 %v5042, %v5040
        %v5044 = vxor.u32 %v5043, 2147483648
        %v5045 = vsel %vm4962, %v5044, %v5043
        %v5046 = vsub.s32 4, %v5022
        %v5047 = vsel %vm4962, %v5046, %v5022
        %v5048 = vsel %vm4961, %v1663, %v5045
        %v5049 = vsel %vm4961, 0, %v5047
        %v5050 = vcosq.f32.pop %v5048
        %v5051 = vsinq.f32.pop %v5048
        %vm5052 = vweird.f32 %v1663
        %v5053 = vand.u32 %v5049, 3
        %vm5054 = vcmp.lt.s32.totalorder %v5053, 2
        %vm5055 = vcmp.eq.s32.totalorder %v5053, 0
        %v5056 = vxor.u32 %v5051, 2147483648
        %v5057 = vsel %vm5055, %v5050, %v5056
        %vm5058 = vcmp.eq.s32.totalorder %v5053, 2
        %v5059 = vxor.u32 %v5050, 2147483648
        %v5060 = vsel %vm5058, %v5059, %v5051
        %v5061 = vsel %vm5054, %v5057, %v5060
        %v5062 = vsel %vm5052, nan, %v5061
        %v5063 = vand.u32 2147483647, %v1665
        %vm5064 = vcmp.le.f32.partialorder %v5063, 0.7853982
        %vm5065 = vcmp.lt.s32.totalorder %v1665, 0
        %v5066 = vand.u32 %v1665, 2139095040
        %v5067 = vshrl.u32 %v5066, 23
        %v5068 = vsub.s32 %v5067, 127
        %v5069 = vand.u32 2147483647, %v1665
        %v5070 = vand.u32 %v5069, 8388607
        %v5071 = vor.u32 %v5070, 8388608
        %v5072 = vsub.s32 0, %v5071
        %v5073 = vadd.s32 %v5068, 1
        %vm5074 = vcmp.gt.s32.totalorder %v5073, 0
        %v5075 = vsel %vm5074, %v5073, 0
        %v5076 = vshrl.u32 %v5075, 5
        %v5077 = vand.u32 %v5075, 31
        %v5078 = vsub.s32 32, %v5077
        %v5079 = vshrl.u32 683565275, %v5078
        %v5080 = vshll.u32 683565275, %v5077
        %v5081 = vshrl.u32 2475754826, %v5078
        %v5082 = vor.u32 %v5080, %v5081
        %v5083 = vshll.u32 2475754826, %v5077
        %v5084 = vshrl.u32 2131351028, %v5078
        %v5085 = vor.u32 %v5083, %v5084
        %v5086 = vshll.u32 2131351028, %v5077
        %v5087 = vshrl.u32 2102212464, %v5078
        %v5088 = vor.u32 %v5086, %v5087
        %v5089 = vshll.u32 2102212464, %v5077
        %v5090 = vshrl.u32 920167782, %v5078
        %v5091 = vor.u32 %v5089, %v5090
        %v5092 = vshll.u32 920167782, %v5077
        %v5093 = vshrl.u32 1326507024, %v5078
        %v5094 = vor.u32 %v5092, %v5093
        %vm5095 = vcmp.lt.s32.totalorder %v5076, 1
        %vm5096 = vcmp.lt.s32.totalorder %v5076, 2
        %vm5097 = vcmp.lt.s32.totalorder %v5076, 3
        %vm5098 = vcmp.lt.s32.totalorder %v5076, 4
        %v5099 = vsel %vm5095, %v5079, %v5082
        %v5100 = vsel %vm5098, %v5088, 2102212464
        %v5101 = vsel %vm5097, %v5085, %v5100
        %v5102 = vsel %vm5096, %v5099, %v5101
        %v5103 = vsel %vm5095, %v5082, %v5085
        %v5104 = vsel %vm5098, %v5091, 920167782
        %v5105 = vsel %vm5097, %v5088, %v5104
        %v5106 = vsel %vm5096, %v5103, %v5105
        %v5107 = vsel %vm5095, %v5085, %v5088
        %v5108 = vsel %vm5098, %v5094, 1326507024
        %v5109 = vsel %vm5097, %v5091, %v5108
        %v5110 = vsel %vm5096, %v5107, %v5109
        %v5111 = vshll.u32 %v5071, 8
        %v5112 = vmul.u32.u64.compose %v5111, %v5110
        %v5113 = vextract.low.u32 %v5112
        %v5114 = vextract.high.u32 %v5112
        %v5115 = vmul.u32.u64.compose %v5111, %v5106
        %v5116 = vextract.low.u32 %v5115
        %v5117 = vextract.high.u32 %v5115
        %v5118 = vmul.u32 %v5111, %v5102
        %v5119 = vadd.s32 %v5114, %v5116
        %vm5120 = vc.u32 %v5114, %v5116
        %v5121 = vadd.s32 %v5117, 1
        %v5122 = vsel %vm5120, %v5121, %v5117
        %v5123 = vadd.s32 %v5118, %v5122
        %v5124 = vadd.s32 %v5123, 536870912
        %v5125 = vshrl.u32 %v5124, 30
        %v5126 = vshll.u32 %v5125, 30
        %v5127 = vsub.s32 %v5123, %v5126
        %vm5128 = vcmp.lt.s32.totalorder %v5127, 0
        %v5129 = vsub.s32 0, %v5127
        %v5130 = vsel %vm5128, %v5129, %v5127
        %v5131 = vclz %v5130
        %v5132 = vsub.s32 %v5131, 2
        %vm5133 = vcmp.gt.s32.totalorder 0, %v5132
        %v5134 = vsel %vm5133, 0, %v5132
        %v5135 = vsub.s32 32, %v5134
        %v5136 = vshll.u32 %v5127, %v5134
        %v5137 = vshrl.u32 %v5119, %v5135
        %v5138 = vor.u32 %v5136, %v5137
        %v5139 = vsub.s32 4294967266, %v5134
        %v5140 = vadd.s32 %v5139, 127
        %v5141 = vshll.u32 %v5140, 23
        %v5142 = vor.u32 4788187, %v5141
        %v5143 = vand.u32 2147483647, %v5142
        %v5145 = vcvt.s32.f32 %v5138
        %v5146 = vmul.f32 %v5145, %v5143
        %v5147 = vxor.u32 %v5146, 2147483648
        %v5148 = vsel %vm5065, %v5147, %v5146
        %v5149 = vsub.s32 4, %v5125
        %v5150 = vsel %vm5065, %v5149, %v5125
        %v5151 = vsel %vm5064, %v1665, %v5148
        %v5152 = vsel %vm5064, 0, %v5150
        %v5153 = vcosq.f32.pop %v5151
        %v5154 = vsinq.f32.pop %v5151
        %vm5155 = vweird.f32 %v1665
        %v5156 = vand.u32 %v5152, 3
        %vm5157 = vcmp.lt.s32.totalorder %v5156, 2
        %vm5158 = vcmp.eq.s32.totalorder %v5156, 0
        %v5159 = vxor.u32 %v5154, 2147483648
        %v5160 = vsel %vm5158, %v5153, %v5159
        %vm5161 = vcmp.eq.s32.totalorder %v5156, 2
        %v5162 = vxor.u32 %v5153, 2147483648
        %v5163 = vsel %vm5161, %v5162, %v5154
        %v5164 = vsel %vm5157, %v5160, %v5163
        %v5165 = vsel %vm5155, nan, %v5164
        %v5166 = vand.u32 2147483647, %v2379
        %vm5167 = vcmp.le.f32.partialorder %v5166, 0.7853982
        %vm5168 = vcmp.lt.s32.totalorder %v2379, 0
        %v5169 = vand.u32 %v2379, 2139095040
        %v5170 = vshrl.u32 %v5169, 23
        %v5171 = vsub.s32 %v5170, 127
        %v5172 = vand.u32 2147483647, %v2379
        %v5173 = vand.u32 %v5172, 8388607
        %v5174 = vor.u32 %v5173, 8388608
        %v5175 = vsub.s32 0, %v5174
        %v5176 = vadd.s32 %v5171, 1
        %vm5177 = vcmp.gt.s32.totalorder %v5176, 0
        %v5178 = vsel %vm5177, %v5176, 0
        %v5179 = vshrl.u32 %v5178, 5
        %v5180 = vand.u32 %v5178, 31
        %v5181 = vsub.s32 32, %v5180
        %v5182 = vshrl.u32 683565275, %v5181
        %v5183 = vshll.u32 683565275, %v5180
        %v5184 = vshrl.u32 2475754826, %v5181
        %v5185 = vor.u32 %v5183, %v5184
        %v5186 = vshll.u32 2475754826, %v5180
        %v5187 = vshrl.u32 2131351028, %v5181
        %v5188 = vor.u32 %v5186, %v5187
        %v5189 = vshll.u32 2131351028, %v5180
        %v5190 = vshrl.u32 2102212464, %v5181
        %v5191 = vor.u32 %v5189, %v5190
        %v5192 = vshll.u32 2102212464, %v5180
        %v5193 = vshrl.u32 920167782, %v5181
        %v5194 = vor.u32 %v5192, %v5193
        %v5195 = vshll.u32 920167782, %v5180
        %v5196 = vshrl.u32 1326507024, %v5181
        %v5197 = vor.u32 %v5195, %v5196
        %vm5198 = vcmp.lt.s32.totalorder %v5179, 1
        %vm5199 = vcmp.lt.s32.totalorder %v5179, 2
        %vm5200 = vcmp.lt.s32.totalorder %v5179, 3
        %vm5201 = vcmp.lt.s32.totalorder %v5179, 4
        %v5202 = vsel %vm5198, %v5182, %v5185
        %v5203 = vsel %vm5201, %v5191, 2102212464
        %v5204 = vsel %vm5200, %v5188, %v5203
        %v5205 = vsel %vm5199, %v5202, %v5204
        %v5206 = vsel %vm5198, %v5185, %v5188
        %v5207 = vsel %vm5201, %v5194, 920167782
        %v5208 = vsel %vm5200, %v5191, %v5207
        %v5209 = vsel %vm5199, %v5206, %v5208
        %v5210 = vsel %vm5198, %v5188, %v5191
        %v5211 = vsel %vm5201, %v5197, 1326507024
        %v5212 = vsel %vm5200, %v5194, %v5211
        %v5213 = vsel %vm5199, %v5210, %v5212
        %v5214 = vshll.u32 %v5174, 8
        %v5215 = vmul.u32.u64.compose %v5214, %v5213
        %v5216 = vextract.low.u32 %v5215
        %v5217 = vextract.high.u32 %v5215
        %v5218 = vmul.u32.u64.compose %v5214, %v5209
        %v5219 = vextract.low.u32 %v5218
        %v5220 = vextract.high.u32 %v5218
        %v5221 = vmul.u32 %v5214, %v5205
        %v5222 = vadd.s32 %v5217, %v5219
        %vm5223 = vc.u32 %v5217, %v5219
        %v5224 = vadd.s32 %v5220, 1
        %v5225 = vsel %vm5223, %v5224, %v5220
        %v5226 = vadd.s32 %v5221, %v5225
        %v5227 = vadd.s32 %v5226, 536870912
        %v5228 = vshrl.u32 %v5227, 30
        %v5229 = vshll.u32 %v5228, 30
        %v5230 = vsub.s32 %v5226, %v5229
        %vm5231 = vcmp.lt.s32.totalorder %v5230, 0
        %v5232 = vsub.s32 0, %v5230
        %v5233 = vsel %vm5231, %v5232, %v5230
        %v5234 = vclz %v5233
        %v5235 = vsub.s32 %v5234, 2
        %vm5236 = vcmp.gt.s32.totalorder 0, %v5235
        %v5237 = vsel %vm5236, 0, %v5235
        %v5238 = vsub.s32 32, %v5237
        %v5239 = vshll.u32 %v5230, %v5237
        %v5240 = vshrl.u32 %v5222, %v5238
        %v5241 = vor.u32 %v5239, %v5240
        %v5242 = vsub.s32 4294967266, %v5237
        %v5243 = vadd.s32 %v5242, 127
        %v5244 = vshll.u32 %v5243, 23
        %v5245 = vor.u32 4788187, %v5244
        %v5246 = vand.u32 2147483647, %v5245
        %v5248 = vcvt.s32.f32 %v5241
        %v5249 = vmul.f32 %v5248, %v5246
        %v5250 = vxor.u32 %v5249, 2147483648
        %v5251 = vsel %vm5168, %v5250, %v5249
        %v5252 = vsub.s32 4, %v5228
        %v5253 = vsel %vm5168, %v5252, %v5228
        %v5254 = vsel %vm5167, %v2379, %v5251
        %v5255 = vsel %vm5167, 0, %v5253
        %v5256 = vcosq.f32.pop %v5254
        %v5257 = vsinq.f32.pop %v5254
        %vm5258 = vweird.f32 %v2379
        %v5259 = vand.u32 %v5255, 3
        %vm5260 = vcmp.lt.s32.totalorder %v5259, 2
        %vm5261 = vcmp.eq.s32.totalorder %v5259, 0
        %v5262 = vxor.u32 %v5257, 2147483648
        %v5263 = vsel %vm5261, %v5256, %v5262
        %vm5264 = vcmp.eq.s32.totalorder %v5259, 2
        %v5265 = vxor.u32 %v5256, 2147483648
        %v5266 = vsel %vm5264, %v5265, %v5257
        %v5267 = vsel %vm5260, %v5263, %v5266
        %v5268 = vsel %vm5258, nan, %v5267
        %v5269 = vand.u32 2147483647, %v2381
        %vm5270 = vcmp.le.f32.partialorder %v5269, 0.7853982
        %vm5271 = vcmp.lt.s32.totalorder %v2381, 0
        %v5272 = vand.u32 %v2381, 2139095040
        %v5273 = vshrl.u32 %v5272, 23
        %v5274 = vsub.s32 %v5273, 127
        %v5275 = vand.u32 2147483647, %v2381
        %v5276 = vand.u32 %v5275, 8388607
        %v5277 = vor.u32 %v5276, 8388608
        %v5278 = vsub.s32 0, %v5277
        %v5279 = vadd.s32 %v5274, 1
        %vm5280 = vcmp.gt.s32.totalorder %v5279, 0
        %v5281 = vsel %vm5280, %v5279, 0
        %v5282 = vshrl.u32 %v5281, 5
        %v5283 = vand.u32 %v5281, 31
        %v5284 = vsub.s32 32, %v5283
        %v5285 = vshrl.u32 683565275, %v5284
        %v5286 = vshll.u32 683565275, %v5283
        %v5287 = vshrl.u32 2475754826, %v5284
        %v5288 = vor.u32 %v5286, %v5287
        %v5289 = vshll.u32 2475754826, %v5283
        %v5290 = vshrl.u32 2131351028, %v5284
        %v5291 = vor.u32 %v5289, %v5290
        %v5292 = vshll.u32 2131351028, %v5283
        %v5293 = vshrl.u32 2102212464, %v5284
        %v5294 = vor.u32 %v5292, %v5293
        %v5295 = vshll.u32 2102212464, %v5283
        %v5296 = vshrl.u32 920167782, %v5284
        %v5297 = vor.u32 %v5295, %v5296
        %v5298 = vshll.u32 920167782, %v5283
        %v5299 = vshrl.u32 1326507024, %v5284
        %v5300 = vor.u32 %v5298, %v5299
        %vm5301 = vcmp.lt.s32.totalorder %v5282, 1
        %vm5302 = vcmp.lt.s32.totalorder %v5282, 2
        %vm5303 = vcmp.lt.s32.totalorder %v5282, 3
        %vm5304 = vcmp.lt.s32.totalorder %v5282, 4
        %v5305 = vsel %vm5301, %v5285, %v5288
        %v5306 = vsel %vm5304, %v5294, 2102212464
        %v5307 = vsel %vm5303, %v5291, %v5306
        %v5308 = vsel %vm5302, %v5305, %v5307
        %v5309 = vsel %vm5301, %v5288, %v5291
        %v5310 = vsel %vm5304, %v5297, 920167782
        %v5311 = vsel %vm5303, %v5294, %v5310
        %v5312 = vsel %vm5302, %v5309, %v5311
        %v5313 = vsel %vm5301, %v5291, %v5294
        %v5314 = vsel %vm5304, %v5300, 1326507024
        %v5315 = vsel %vm5303, %v5297, %v5314
        %v5316 = vsel %vm5302, %v5313, %v5315
        %v5317 = vshll.u32 %v5277, 8
        %v5318 = vmul.u32.u64.compose %v5317, %v5316
        %v5319 = vextract.low.u32 %v5318
        %v5320 = vextract.high.u32 %v5318
        %v5321 = vmul.u32.u64.compose %v5317, %v5312
        %v5322 = vextract.low.u32 %v5321
        %v5323 = vextract.high.u32 %v5321
        %v5324 = vmul.u32 %v5317, %v5308
        %v5325 = vadd.s32 %v5320, %v5322
        %vm5326 = vc.u32 %v5320, %v5322
        %v5327 = vadd.s32 %v5323, 1
        %v5328 = vsel %vm5326, %v5327, %v5323
        %v5329 = vadd.s32 %v5324, %v5328
        %v5330 = vadd.s32 %v5329, 536870912
        %v5331 = vshrl.u32 %v5330, 30
        %v5332 = vshll.u32 %v5331, 30
        %v5333 = vsub.s32 %v5329, %v5332
        %vm5334 = vcmp.lt.s32.totalorder %v5333, 0
        %v5335 = vsub.s32 0, %v5333
        %v5336 = vsel %vm5334, %v5335, %v5333
        %v5337 = vclz %v5336
        %v5338 = vsub.s32 %v5337, 2
        %vm5339 = vcmp.gt.s32.totalorder 0, %v5338
        %v5340 = vsel %vm5339, 0, %v5338
        %v5341 = vsub.s32 32, %v5340
        %v5342 = vshll.u32 %v5333, %v5340
        %v5343 = vshrl.u32 %v5325, %v5341
        %v5344 = vor.u32 %v5342, %v5343
        %v5345 = vsub.s32 4294967266, %v5340
        %v5346 = vadd.s32 %v5345, 127
        %v5347 = vshll.u32 %v5346, 23
        %v5348 = vor.u32 4788187, %v5347
        %v5349 = vand.u32 2147483647, %v5348
        %v5351 = vcvt.s32.f32 %v5344
        %v5352 = vmul.f32 %v5351, %v5349
        %v5353 = vxor.u32 %v5352, 2147483648
        %v5354 = vsel %vm5271, %v5353, %v5352
        %v5355 = vsub.s32 4, %v5331
        %v5356 = vsel %vm5271, %v5355, %v5331
        %v5357 = vsel %vm5270, %v2381, %v5354
        %v5358 = vsel %vm5270, 0, %v5356
        %v5359 = vcosq.f32.pop %v5357
        %v5360 = vsinq.f32.pop %v5357
        %vm5361 = vweird.f32 %v2381
        %v5362 = vand.u32 %v5358, 3
        %vm5363 = vcmp.lt.s32.totalorder %v5362, 2
        %vm5364 = vcmp.eq.s32.totalorder %v5362, 0
        %v5365 = vxor.u32 %v5360, 2147483648
        %v5366 = vsel %vm5364, %v5359, %v5365
        %vm5367 = vcmp.eq.s32.totalorder %v5362, 2
        %v5368 = vxor.u32 %v5359, 2147483648
        %v5369 = vsel %vm5367, %v5368, %v5360
        %v5370 = vsel %vm5363, %v5366, %v5369
        %v5371 = vsel %vm5361, nan, %v5370
        %v5372 = vand.u32 2147483647, %v3095
        %vm5373 = vcmp.le.f32.partialorder %v5372, 0.7853982
        %vm5374 = vcmp.lt.s32.totalorder %v3095, 0
        %v5375 = vand.u32 %v3095, 2139095040
        %v5376 = vshrl.u32 %v5375, 23
        %v5377 = vsub.s32 %v5376, 127
        %v5378 = vand.u32 2147483647, %v3095
        %v5379 = vand.u32 %v5378, 8388607
        %v5380 = vor.u32 %v5379, 8388608
        %v5381 = vsub.s32 0, %v5380
        %v5382 = vadd.s32 %v5377, 1
        %vm5383 = vcmp.gt.s32.totalorder %v5382, 0
        %v5384 = vsel %vm5383, %v5382, 0
        %v5385 = vshrl.u32 %v5384, 5
        %v5386 = vand.u32 %v5384, 31
        %v5387 = vsub.s32 32, %v5386
        %v5388 = vshrl.u32 683565275, %v5387
        %v5389 = vshll.u32 683565275, %v5386
        %v5390 = vshrl.u32 2475754826, %v5387
        %v5391 = vor.u32 %v5389, %v5390
        %v5392 = vshll.u32 2475754826, %v5386
        %v5393 = vshrl.u32 2131351028, %v5387
        %v5394 = vor.u32 %v5392, %v5393
        %v5395 = vshll.u32 2131351028, %v5386
        %v5396 = vshrl.u32 2102212464, %v5387
        %v5397 = vor.u32 %v5395, %v5396
        %v5398 = vshll.u32 2102212464, %v5386
        %v5399 = vshrl.u32 920167782, %v5387
        %v5400 = vor.u32 %v5398, %v5399
        %v5401 = vshll.u32 920167782, %v5386
        %v5402 = vshrl.u32 1326507024, %v5387
        %v5403 = vor.u32 %v5401, %v5402
        %vm5404 = vcmp.lt.s32.totalorder %v5385, 1
        %vm5405 = vcmp.lt.s32.totalorder %v5385, 2
        %vm5406 = vcmp.lt.s32.totalorder %v5385, 3
        %vm5407 = vcmp.lt.s32.totalorder %v5385, 4
        %v5408 = vsel %vm5404, %v5388, %v5391
        %v5409 = vsel %vm5407, %v5397, 2102212464
        %v5410 = vsel %vm5406, %v5394, %v5409
        %v5411 = vsel %vm5405, %v5408, %v5410
        %v5412 = vsel %vm5404, %v5391, %v5394
        %v5413 = vsel %vm5407, %v5400, 920167782
        %v5414 = vsel %vm5406, %v5397, %v5413
        %v5415 = vsel %vm5405, %v5412, %v5414
        %v5416 = vsel %vm5404, %v5394, %v5397
        %v5417 = vsel %vm5407, %v5403, 1326507024
        %v5418 = vsel %vm5406, %v5400, %v5417
        %v5419 = vsel %vm5405, %v5416, %v5418
        %v5420 = vshll.u32 %v5380, 8
        %v5421 = vmul.u32.u64.compose %v5420, %v5419
        %v5422 = vextract.low.u32 %v5421
        %v5423 = vextract.high.u32 %v5421
        %v5424 = vmul.u32.u64.compose %v5420, %v5415
        %v5425 = vextract.low.u32 %v5424
        %v5426 = vextract.high.u32 %v5424
        %v5427 = vmul.u32 %v5420, %v5411
        %v5428 = vadd.s32 %v5423, %v5425
        %vm5429 = vc.u32 %v5423, %v5425
        %v5430 = vadd.s32 %v5426, 1
        %v5431 = vsel %vm5429, %v5430, %v5426
        %v5432 = vadd.s32 %v5427, %v5431
        %v5433 = vadd.s32 %v5432, 536870912
        %v5434 = vshrl.u32 %v5433, 30
        %v5435 = vshll.u32 %v5434, 30
        %v5436 = vsub.s32 %v5432, %v5435
        %vm5437 = vcmp.lt.s32.totalorder %v5436, 0
        %v5438 = vsub.s32 0, %v5436
        %v5439 = vsel %vm5437, %v5438, %v5436
        %v5440 = vclz %v5439
        %v5441 = vsub.s32 %v5440, 2
        %vm5442 = vcmp.gt.s32.totalorder 0, %v5441
        %v5443 = vsel %vm5442, 0, %v5441
        %v5444 = vsub.s32 32, %v5443
        %v5445 = vshll.u32 %v5436, %v5443
        %v5446 = vshrl.u32 %v5428, %v5444
        %v5447 = vor.u32 %v5445, %v5446
        %v5448 = vsub.s32 4294967266, %v5443
        %v5449 = vadd.s32 %v5448, 127
        %v5450 = vshll.u32 %v5449, 23
        %v5451 = vor.u32 4788187, %v5450
        %v5452 = vand.u32 2147483647, %v5451
        %v5454 = vcvt.s32.f32 %v5447
        %v5455 = vmul.f32 %v5454, %v5452
        %v5456 = vxor.u32 %v5455, 2147483648
        %v5457 = vsel %vm5374, %v5456, %v5455
        %v5458 = vsub.s32 4, %v5434
        %v5459 = vsel %vm5374, %v5458, %v5434
        %v5460 = vsel %vm5373, %v3095, %v5457
        %v5461 = vsel %vm5373, 0, %v5459
        %v5462 = vcosq.f32.pop %v5460
        %v5463 = vsinq.f32.pop %v5460
        %vm5464 = vweird.f32 %v3095
        %v5465 = vand.u32 %v5461, 3
        %vm5466 = vcmp.lt.s32.totalorder %v5465, 2
        %vm5467 = vcmp.eq.s32.totalorder %v5465, 0
        %v5468 = vxor.u32 %v5463, 2147483648
        %v5469 = vsel %vm5467, %v5462, %v5468
        %vm5470 = vcmp.eq.s32.totalorder %v5465, 2
        %v5471 = vxor.u32 %v5462, 2147483648
        %v5472 = vsel %vm5470, %v5471, %v5463
        %v5473 = vsel %vm5466, %v5469, %v5472
        %v5474 = vsel %vm5464, nan, %v5473
        %v5475 = vand.u32 2147483647, %v3097
        %vm5476 = vcmp.le.f32.partialorder %v5475, 0.7853982
        %vm5477 = vcmp.lt.s32.totalorder %v3097, 0
        %v5478 = vand.u32 %v3097, 2139095040
        %v5479 = vshrl.u32 %v5478, 23
        %v5480 = vsub.s32 %v5479, 127
        %v5481 = vand.u32 2147483647, %v3097
        %v5482 = vand.u32 %v5481, 8388607
        %v5483 = vor.u32 %v5482, 8388608
        %v5484 = vsub.s32 0, %v5483
        %v5485 = vadd.s32 %v5480, 1
        %vm5486 = vcmp.gt.s32.totalorder %v5485, 0
        %v5487 = vsel %vm5486, %v5485, 0
        %v5488 = vshrl.u32 %v5487, 5
        %v5489 = vand.u32 %v5487, 31
        %v5490 = vsub.s32 32, %v5489
        %v5491 = vshrl.u32 683565275, %v5490
        %v5492 = vshll.u32 683565275, %v5489
        %v5493 = vshrl.u32 2475754826, %v5490
        %v5494 = vor.u32 %v5492, %v5493
        %v5495 = vshll.u32 2475754826, %v5489
        %v5496 = vshrl.u32 2131351028, %v5490
        %v5497 = vor.u32 %v5495, %v5496
        %v5498 = vshll.u32 2131351028, %v5489
        %v5499 = vshrl.u32 2102212464, %v5490
        %v5500 = vor.u32 %v5498, %v5499
        %v5501 = vshll.u32 2102212464, %v5489
        %v5502 = vshrl.u32 920167782, %v5490
        %v5503 = vor.u32 %v5501, %v5502
        %v5504 = vshll.u32 920167782, %v5489
        %v5505 = vshrl.u32 1326507024, %v5490
        %v5506 = vor.u32 %v5504, %v5505
        %vm5507 = vcmp.lt.s32.totalorder %v5488, 1
        %vm5508 = vcmp.lt.s32.totalorder %v5488, 2
        %vm5509 = vcmp.lt.s32.totalorder %v5488, 3
        %vm5510 = vcmp.lt.s32.totalorder %v5488, 4
        %v5511 = vsel %vm5507, %v5491, %v5494
        %v5512 = vsel %vm5510, %v5500, 2102212464
        %v5513 = vsel %vm5509, %v5497, %v5512
        %v5514 = vsel %vm5508, %v5511, %v5513
        %v5515 = vsel %vm5507, %v5494, %v5497
        %v5516 = vsel %vm5510, %v5503, 920167782
        %v5517 = vsel %vm5509, %v5500, %v5516
        %v5518 = vsel %vm5508, %v5515, %v5517
        %v5519 = vsel %vm5507, %v5497, %v5500
        %v5520 = vsel %vm5510, %v5506, 1326507024
        %v5521 = vsel %vm5509, %v5503, %v5520
        %v5522 = vsel %vm5508, %v5519, %v5521
        %v5523 = vshll.u32 %v5483, 8
        %v5524 = vmul.u32.u64.compose %v5523, %v5522
        %v5525 = vextract.low.u32 %v5524
        %v5526 = vextract.high.u32 %v5524
        %v5527 = vmul.u32.u64.compose %v5523, %v5518
        %v5528 = vextract.low.u32 %v5527
        %v5529 = vextract.high.u32 %v5527
        %v5530 = vmul.u32 %v5523, %v5514
        %v5531 = vadd.s32 %v5526, %v5528
        %vm5532 = vc.u32 %v5526, %v5528
        %v5533 = vadd.s32 %v5529, 1
        %v5534 = vsel %vm5532, %v5533, %v5529
        %v5535 = vadd.s32 %v5530, %v5534
        %v5536 = vadd.s32 %v5535, 536870912
        %v5537 = vshrl.u32 %v5536, 30
        %v5538 = vshll.u32 %v5537, 30
        %v5539 = vsub.s32 %v5535, %v5538
        %vm5540 = vcmp.lt.s32.totalorder %v5539, 0
        %v5541 = vsub.s32 0, %v5539
        %v5542 = vsel %vm5540, %v5541, %v5539
        %v5543 = vclz %v5542
        %v5544 = vsub.s32 %v5543, 2
        %vm5545 = vcmp.gt.s32.totalorder 0, %v5544
        %v5546 = vsel %vm5545, 0, %v5544
        %v5547 = vsub.s32 32, %v5546
        %v5548 = vshll.u32 %v5539, %v5546
        %v5549 = vshrl.u32 %v5531, %v5547
        %v5550 = vor.u32 %v5548, %v5549
        %v5551 = vsub.s32 4294967266, %v5546
        %v5552 = vadd.s32 %v5551, 127
        %v5553 = vshll.u32 %v5552, 23
        %v5554 = vor.u32 4788187, %v5553
        %v5555 = vand.u32 2147483647, %v5554
        %v5557 = vcvt.s32.f32 %v5550
        %v5558 = vmul.f32 %v5557, %v5555
        %v5559 = vxor.u32 %v5558, 2147483648
        %v5560 = vsel %vm5477, %v5559, %v5558
        %v5561 = vsub.s32 4, %v5537
        %v5562 = vsel %vm5477, %v5561, %v5537
        %v5563 = vsel %vm5476, %v3097, %v5560
        %v5564 = vsel %vm5476, 0, %v5562
        %v5565 = vcosq.f32.pop %v5563
        %v5566 = vsinq.f32.pop %v5563
        %vm5567 = vweird.f32 %v3097
        %v5568 = vand.u32 %v5564, 3
        %vm5569 = vcmp.lt.s32.totalorder %v5568, 2
        %vm5570 = vcmp.eq.s32.totalorder %v5568, 0
        %v5571 = vxor.u32 %v5566, 2147483648
        %v5572 = vsel %vm5570, %v5565, %v5571
        %vm5573 = vcmp.eq.s32.totalorder %v5568, 2
        %v5574 = vxor.u32 %v5565, 2147483648
        %v5575 = vsel %vm5573, %v5574, %v5566
        %v5576 = vsel %vm5569, %v5572, %v5575
        %v5577 = vsel %vm5567, nan, %v5576
        %v5578 = vand.u32 2147483647, %v954
        %vm5579 = vcmp.le.f32.partialorder %v5578, 0.7853982
        %vm5580 = vcmp.lt.s32.totalorder %v954, 0
        %v5581 = vand.u32 %v954, 2139095040
        %v5582 = vshrl.u32 %v5581, 23
        %v5583 = vsub.s32 %v5582, 127
        %v5584 = vand.u32 2147483647, %v954
        %v5585 = vand.u32 %v5584, 8388607
        %v5586 = vor.u32 %v5585, 8388608
        %v5587 = vsub.s32 0, %v5586
        %v5588 = vadd.s32 %v5583, 1
        %vm5589 = vcmp.gt.s32.totalorder %v5588, 0
        %v5590 = vsel %vm5589, %v5588, 0
        %v5591 = vshrl.u32 %v5590, 5
        %v5592 = vand.u32 %v5590, 31
        %v5593 = vsub.s32 32, %v5592
        %v5594 = vshrl.u32 683565275, %v5593
        %v5595 = vshll.u32 683565275, %v5592
        %v5596 = vshrl.u32 2475754826, %v5593
        %v5597 = vor.u32 %v5595, %v5596
        %v5598 = vshll.u32 2475754826, %v5592
        %v5599 = vshrl.u32 2131351028, %v5593
        %v5600 = vor.u32 %v5598, %v5599
        %v5601 = vshll.u32 2131351028, %v5592
        %v5602 = vshrl.u32 2102212464, %v5593
        %v5603 = vor.u32 %v5601, %v5602
        %v5604 = vshll.u32 2102212464, %v5592
        %v5605 = vshrl.u32 920167782, %v5593
        %v5606 = vor.u32 %v5604, %v5605
        %v5607 = vshll.u32 920167782, %v5592
        %v5608 = vshrl.u32 1326507024, %v5593
        %v5609 = vor.u32 %v5607, %v5608
        %vm5610 = vcmp.lt.s32.totalorder %v5591, 1
        %vm5611 = vcmp.lt.s32.totalorder %v5591, 2
        %vm5612 = vcmp.lt.s32.totalorder %v5591, 3
        %vm5613 = vcmp.lt.s32.totalorder %v5591, 4
        %v5614 = vsel %vm5610, %v5594, %v5597
        %v5615 = vsel %vm5613, %v5603, 2102212464
        %v5616 = vsel %vm5612, %v5600, %v5615
        %v5617 = vsel %vm5611, %v5614, %v5616
        %v5618 = vsel %vm5610, %v5597, %v5600
        %v5619 = vsel %vm5613, %v5606, 920167782
        %v5620 = vsel %vm5612, %v5603, %v5619
        %v5621 = vsel %vm5611, %v5618, %v5620
        %v5622 = vsel %vm5610, %v5600, %v5603
        %v5623 = vsel %vm5613, %v5609, 1326507024
        %v5624 = vsel %vm5612, %v5606, %v5623
        %v5625 = vsel %vm5611, %v5622, %v5624
        %v5626 = vshll.u32 %v5586, 8
        %v5627 = vmul.u32.u64.compose %v5626, %v5625
        %v5628 = vextract.low.u32 %v5627
        %v5629 = vextract.high.u32 %v5627
        %v5630 = vmul.u32.u64.compose %v5626, %v5621
        %v5631 = vextract.low.u32 %v5630
        %v5632 = vextract.high.u32 %v5630
        %v5633 = vmul.u32 %v5626, %v5617
        %v5634 = vadd.s32 %v5629, %v5631
        %vm5635 = vc.u32 %v5629, %v5631
        %v5636 = vadd.s32 %v5632, 1
        %v5637 = vsel %vm5635, %v5636, %v5632
        %v5638 = vadd.s32 %v5633, %v5637
        %v5639 = vadd.s32 %v5638, 536870912
        %v5640 = vshrl.u32 %v5639, 30
        %v5641 = vshll.u32 %v5640, 30
        %v5642 = vsub.s32 %v5638, %v5641
        %vm5643 = vcmp.lt.s32.totalorder %v5642, 0
        %v5644 = vsub.s32 0, %v5642
        %v5645 = vsel %vm5643, %v5644, %v5642
        %v5646 = vclz %v5645
        %v5647 = vsub.s32 %v5646, 2
        %vm5648 = vcmp.gt.s32.totalorder 0, %v5647
        %v5649 = vsel %vm5648, 0, %v5647
        %v5650 = vsub.s32 32, %v5649
        %v5651 = vshll.u32 %v5642, %v5649
        %v5652 = vshrl.u32 %v5634, %v5650
        %v5653 = vor.u32 %v5651, %v5652
        %v5654 = vsub.s32 4294967266, %v5649
        %v5655 = vadd.s32 %v5654, 127
        %v5656 = vshll.u32 %v5655, 23
        %v5657 = vor.u32 4788187, %v5656
        %v5658 = vand.u32 2147483647, %v5657
        %v5660 = vcvt.s32.f32 %v5653
        %v5661 = vmul.f32 %v5660, %v5658
        %v5662 = vxor.u32 %v5661, 2147483648
        %v5663 = vsel %vm5580, %v5662, %v5661
        %v5664 = vsub.s32 4, %v5640
        %v5665 = vsel %vm5580, %v5664, %v5640
        %v5666 = vsel %vm5579, %v954, %v5663
        %v5667 = vsel %vm5579, 0, %v5665
        %v5668 = vcosq.f32.pop %v5666
        %v5669 = vsinq.f32.pop %v5666
        %vm5670 = vweird.f32 %v954
        %v5671 = vand.u32 %v5667, 3
        %vm5672 = vcmp.lt.s32.totalorder %v5671, 2
        %vm5673 = vcmp.eq.s32.totalorder %v5671, 0
        %v5674 = vxor.u32 %v5669, 2147483648
        %v5675 = vsel %vm5673, %v5668, %v5674
        %vm5676 = vcmp.eq.s32.totalorder %v5671, 2
        %v5677 = vxor.u32 %v5668, 2147483648
        %v5678 = vsel %vm5676, %v5677, %v5669
        %v5679 = vsel %vm5672, %v5675, %v5678
        %v5680 = vsel %vm5670, nan, %v5679
        %v5681 = vand.u32 2147483647, %v956
        %vm5682 = vcmp.le.f32.partialorder %v5681, 0.7853982
        %vm5683 = vcmp.lt.s32.totalorder %v956, 0
        %v5684 = vand.u32 %v956, 2139095040
        %v5685 = vshrl.u32 %v5684, 23
        %v5686 = vsub.s32 %v5685, 127
        %v5687 = vand.u32 2147483647, %v956
        %v5688 = vand.u32 %v5687, 8388607
        %v5689 = vor.u32 %v5688, 8388608
        %v5690 = vsub.s32 0, %v5689
        %v5691 = vadd.s32 %v5686, 1
        %vm5692 = vcmp.gt.s32.totalorder %v5691, 0
        %v5693 = vsel %vm5692, %v5691, 0
        %v5694 = vshrl.u32 %v5693, 5
        %v5695 = vand.u32 %v5693, 31
        %v5696 = vsub.s32 32, %v5695
        %v5697 = vshrl.u32 683565275, %v5696
        %v5698 = vshll.u32 683565275, %v5695
        %v5699 = vshrl.u32 2475754826, %v5696
        %v5700 = vor.u32 %v5698, %v5699
        %v5701 = vshll.u32 2475754826, %v5695
        %v5702 = vshrl.u32 2131351028, %v5696
        %v5703 = vor.u32 %v5701, %v5702
        %v5704 = vshll.u32 2131351028, %v5695
        %v5705 = vshrl.u32 2102212464, %v5696
        %v5706 = vor.u32 %v5704, %v5705
        %v5707 = vshll.u32 2102212464, %v5695
        %v5708 = vshrl.u32 920167782, %v5696
        %v5709 = vor.u32 %v5707, %v5708
        %v5710 = vshll.u32 920167782, %v5695
        %v5711 = vshrl.u32 1326507024, %v5696
        %v5712 = vor.u32 %v5710, %v5711
        %vm5713 = vcmp.lt.s32.totalorder %v5694, 1
        %vm5714 = vcmp.lt.s32.totalorder %v5694, 2
        %vm5715 = vcmp.lt.s32.totalorder %v5694, 3
        %vm5716 = vcmp.lt.s32.totalorder %v5694, 4
        %v5717 = vsel %vm5713, %v5697, %v5700
        %v5718 = vsel %vm5716, %v5706, 2102212464
        %v5719 = vsel %vm5715, %v5703, %v5718
        %v5720 = vsel %vm5714, %v5717, %v5719
        %v5721 = vsel %vm5713, %v5700, %v5703
        %v5722 = vsel %vm5716, %v5709, 920167782
        %v5723 = vsel %vm5715, %v5706, %v5722
        %v5724 = vsel %vm5714, %v5721, %v5723
        %v5725 = vsel %vm5713, %v5703, %v5706
        %v5726 = vsel %vm5716, %v5712, 1326507024
        %v5727 = vsel %vm5715, %v5709, %v5726
        %v5728 = vsel %vm5714, %v5725, %v5727
        %v5729 = vshll.u32 %v5689, 8
        %v5730 = vmul.u32.u64.compose %v5729, %v5728
        %v5731 = vextract.low.u32 %v5730
        %v5732 = vextract.high.u32 %v5730
        %v5733 = vmul.u32.u64.compose %v5729, %v5724
        %v5734 = vextract.low.u32 %v5733
        %v5735 = vextract.high.u32 %v5733
        %v5736 = vmul.u32 %v5729, %v5720
        %v5737 = vadd.s32 %v5732, %v5734
        %vm5738 = vc.u32 %v5732, %v5734
        %v5739 = vadd.s32 %v5735, 1
        %v5740 = vsel %vm5738, %v5739, %v5735
        %v5741 = vadd.s32 %v5736, %v5740
        %v5742 = vadd.s32 %v5741, 536870912
        %v5743 = vshrl.u32 %v5742, 30
        %v5744 = vshll.u32 %v5743, 30
        %v5745 = vsub.s32 %v5741, %v5744
        %vm5746 = vcmp.lt.s32.totalorder %v5745, 0
        %v5747 = vsub.s32 0, %v5745
        %v5748 = vsel %vm5746, %v5747, %v5745
        %v5749 = vclz %v5748
        %v5750 = vsub.s32 %v5749, 2
        %vm5751 = vcmp.gt.s32.totalorder 0, %v5750
        %v5752 = vsel %vm5751, 0, %v5750
        %v5753 = vsub.s32 32, %v5752
        %v5754 = vshll.u32 %v5745, %v5752
        %v5755 = vshrl.u32 %v5737, %v5753
        %v5756 = vor.u32 %v5754, %v5755
        %v5757 = vsub.s32 4294967266, %v5752
        %v5758 = vadd.s32 %v5757, 127
        %v5759 = vshll.u32 %v5758, 23
        %v5760 = vor.u32 4788187, %v5759
        %v5761 = vand.u32 2147483647, %v5760
        %v5763 = vcvt.s32.f32 %v5756
        %v5764 = vmul.f32 %v5763, %v5761
        %v5765 = vxor.u32 %v5764, 2147483648
        %v5766 = vsel %vm5683, %v5765, %v5764
        %v5767 = vsub.s32 4, %v5743
        %v5768 = vsel %vm5683, %v5767, %v5743
        %v5769 = vsel %vm5682, %v956, %v5766
        %v5770 = vsel %vm5682, 0, %v5768
        %v5771 = vcosq.f32.pop %v5769
        %v5772 = vsinq.f32.pop %v5769
        %vm5773 = vweird.f32 %v956
        %v5774 = vand.u32 %v5770, 3
        %vm5775 = vcmp.lt.s32.totalorder %v5774, 2
        %vm5776 = vcmp.eq.s32.totalorder %v5774, 0
        %v5777 = vxor.u32 %v5772, 2147483648
        %v5778 = vsel %vm5776, %v5771, %v5777
        %vm5779 = vcmp.eq.s32.totalorder %v5774, 2
        %v5780 = vxor.u32 %v5771, 2147483648
        %v5781 = vsel %vm5779, %v5780, %v5772
        %v5782 = vsel %vm5775, %v5778, %v5781
        %v5783 = vsel %vm5773, nan, %v5782
        %v5784 = vand.u32 2147483647, %v1670
        %vm5785 = vcmp.le.f32.partialorder %v5784, 0.7853982
        %vm5786 = vcmp.lt.s32.totalorder %v1670, 0
        %v5787 = vand.u32 %v1670, 2139095040
        %v5788 = vshrl.u32 %v5787, 23
        %v5789 = vsub.s32 %v5788, 127
        %v5790 = vand.u32 2147483647, %v1670
        %v5791 = vand.u32 %v5790, 8388607
        %v5792 = vor.u32 %v5791, 8388608
        %v5793 = vsub.s32 0, %v5792
        %v5794 = vadd.s32 %v5789, 1
        %vm5795 = vcmp.gt.s32.totalorder %v5794, 0
        %v5796 = vsel %vm5795, %v5794, 0
        %v5797 = vshrl.u32 %v5796, 5
        %v5798 = vand.u32 %v5796, 31
        %v5799 = vsub.s32 32, %v5798
        %v5800 = vshrl.u32 683565275, %v5799
        %v5801 = vshll.u32 683565275, %v5798
        %v5802 = vshrl.u32 2475754826, %v5799
        %v5803 = vor.u32 %v5801, %v5802
        %v5804 = vshll.u32 2475754826, %v5798
        %v5805 = vshrl.u32 2131351028, %v5799
        %v5806 = vor.u32 %v5804, %v5805
        %v5807 = vshll.u32 2131351028, %v5798
        %v5808 = vshrl.u32 2102212464, %v5799
        %v5809 = vor.u32 %v5807, %v5808
        %v5810 = vshll.u32 2102212464, %v5798
        %v5811 = vshrl.u32 920167782, %v5799
        %v5812 = vor.u32 %v5810, %v5811
        %v5813 = vshll.u32 920167782, %v5798
        %v5814 = vshrl.u32 1326507024, %v5799
        %v5815 = vor.u32 %v5813, %v5814
        %vm5816 = vcmp.lt.s32.totalorder %v5797, 1
        %vm5817 = vcmp.lt.s32.totalorder %v5797, 2
        %vm5818 = vcmp.lt.s32.totalorder %v5797, 3
        %vm5819 = vcmp.lt.s32.totalorder %v5797, 4
        %v5820 = vsel %vm5816, %v5800, %v5803
        %v5821 = vsel %vm5819, %v5809, 2102212464
        %v5822 = vsel %vm5818, %v5806, %v5821
        %v5823 = vsel %vm5817, %v5820, %v5822
        %v5824 = vsel %vm5816, %v5803, %v5806
        %v5825 = vsel %vm5819, %v5812, 920167782
        %v5826 = vsel %vm5818, %v5809, %v5825
        %v5827 = vsel %vm5817, %v5824, %v5826
        %v5828 = vsel %vm5816, %v5806, %v5809
        %v5829 = vsel %vm5819, %v5815, 1326507024
        %v5830 = vsel %vm5818, %v5812, %v5829
        %v5831 = vsel %vm5817, %v5828, %v5830
        %v5832 = vshll.u32 %v5792, 8
        %v5833 = vmul.u32.u64.compose %v5832, %v5831
        %v5834 = vextract.low.u32 %v5833
        %v5835 = vextract.high.u32 %v5833
        %v5836 = vmul.u32.u64.compose %v5832, %v5827
        %v5837 = vextract.low.u32 %v5836
        %v5838 = vextract.high.u32 %v5836
        %v5839 = vmul.u32 %v5832, %v5823
        %v5840 = vadd.s32 %v5835, %v5837
        %vm5841 = vc.u32 %v5835, %v5837
        %v5842 = vadd.s32 %v5838, 1
        %v5843 = vsel %vm5841, %v5842, %v5838
        %v5844 = vadd.s32 %v5839, %v5843
        %v5845 = vadd.s32 %v5844, 536870912
        %v5846 = vshrl.u32 %v5845, 30
        %v5847 = vshll.u32 %v5846, 30
        %v5848 = vsub.s32 %v5844, %v5847
        %vm5849 = vcmp.lt.s32.totalorder %v5848, 0
        %v5850 = vsub.s32 0, %v5848
        %v5851 = vsel %vm5849, %v5850, %v5848
        %v5852 = vclz %v5851
        %v5853 = vsub.s32 %v5852, 2
        %vm5854 = vcmp.gt.s32.totalorder 0, %v5853
        %v5855 = vsel %vm5854, 0, %v5853
        %v5856 = vsub.s32 32, %v5855
        %v5857 = vshll.u32 %v5848, %v5855
        %v5858 = vshrl.u32 %v5840, %v5856
        %v5859 = vor.u32 %v5857, %v5858
        %v5860 = vsub.s32 4294967266, %v5855
        %v5861 = vadd.s32 %v5860, 127
        %v5862 = vshll.u32 %v5861, 23
        %v5863 = vor.u32 4788187, %v5862
        %v5864 = vand.u32 2147483647, %v5863
        %v5866 = vcvt.s32.f32 %v5859
        %v5867 = vmul.f32 %v5866, %v5864
        %v5868 = vxor.u32 %v5867, 2147483648
        %v5869 = vsel %vm5786, %v5868, %v5867
        %v5870 = vsub.s32 4, %v5846
        %v5871 = vsel %vm5786, %v5870, %v5846
        %v5872 = vsel %vm5785, %v1670, %v5869
        %v5873 = vsel %vm5785, 0, %v5871
        %v5874 = vcosq.f32.pop %v5872
        %v5875 = vsinq.f32.pop %v5872
        %vm5876 = vweird.f32 %v1670
        %v5877 = vand.u32 %v5873, 3
        %vm5878 = vcmp.lt.s32.totalorder %v5877, 2
        %vm5879 = vcmp.eq.s32.totalorder %v5877, 0
        %v5880 = vxor.u32 %v5875, 2147483648
        %v5881 = vsel %vm5879, %v5874, %v5880
        %vm5882 = vcmp.eq.s32.totalorder %v5877, 2
        %v5883 = vxor.u32 %v5874, 2147483648
        %v5884 = vsel %vm5882, %v5883, %v5875
        %v5885 = vsel %vm5878, %v5881, %v5884
        %v5886 = vsel %vm5876, nan, %v5885
        %v5887 = vand.u32 2147483647, %v1672
        %vm5888 = vcmp.le.f32.partialorder %v5887, 0.7853982
        %vm5889 = vcmp.lt.s32.totalorder %v1672, 0
        %v5890 = vand.u32 %v1672, 2139095040
        %v5891 = vshrl.u32 %v5890, 23
        %v5892 = vsub.s32 %v5891, 127
        %v5893 = vand.u32 2147483647, %v1672
        %v5894 = vand.u32 %v5893, 8388607
        %v5895 = vor.u32 %v5894, 8388608
        %v5896 = vsub.s32 0, %v5895
        %v5897 = vadd.s32 %v5892, 1
        %vm5898 = vcmp.gt.s32.totalorder %v5897, 0
        %v5899 = vsel %vm5898, %v5897, 0
        %v5900 = vshrl.u32 %v5899, 5
        %v5901 = vand.u32 %v5899, 31
        %v5902 = vsub.s32 32, %v5901
        %v5903 = vshrl.u32 683565275, %v5902
        %v5904 = vshll.u32 683565275, %v5901
        %v5905 = vshrl.u32 2475754826, %v5902
        %v5906 = vor.u32 %v5904, %v5905
        %v5907 = vshll.u32 2475754826, %v5901
        %v5908 = vshrl.u32 2131351028, %v5902
        %v5909 = vor.u32 %v5907, %v5908
        %v5910 = vshll.u32 2131351028, %v5901
        %v5911 = vshrl.u32 2102212464, %v5902
        %v5912 = vor.u32 %v5910, %v5911
        %v5913 = vshll.u32 2102212464, %v5901
        %v5914 = vshrl.u32 920167782, %v5902
        %v5915 = vor.u32 %v5913, %v5914
        %v5916 = vshll.u32 920167782, %v5901
        %v5917 = vshrl.u32 1326507024, %v5902
        %v5918 = vor.u32 %v5916, %v5917
        %vm5919 = vcmp.lt.s32.totalorder %v5900, 1
        %vm5920 = vcmp.lt.s32.totalorder %v5900, 2
        %vm5921 = vcmp.lt.s32.totalorder %v5900, 3
        %vm5922 = vcmp.lt.s32.totalorder %v5900, 4
        %v5923 = vsel %vm5919, %v5903, %v5906
        %v5924 = vsel %vm5922, %v5912, 2102212464
        %v5925 = vsel %vm5921, %v5909, %v5924
        %v5926 = vsel %vm5920, %v5923, %v5925
        %v5927 = vsel %vm5919, %v5906, %v5909
        %v5928 = vsel %vm5922, %v5915, 920167782
        %v5929 = vsel %vm5921, %v5912, %v5928
        %v5930 = vsel %vm5920, %v5927, %v5929
        %v5931 = vsel %vm5919, %v5909, %v5912
        %v5932 = vsel %vm5922, %v5918, 1326507024
        %v5933 = vsel %vm5921, %v5915, %v5932
        %v5934 = vsel %vm5920, %v5931, %v5933
        %v5935 = vshll.u32 %v5895, 8
        %v5936 = vmul.u32.u64.compose %v5935, %v5934
        %v5937 = vextract.low.u32 %v5936
        %v5938 = vextract.high.u32 %v5936
        %v5939 = vmul.u32.u64.compose %v5935, %v5930
        %v5940 = vextract.low.u32 %v5939
        %v5941 = vextract.high.u32 %v5939
        %v5942 = vmul.u32 %v5935, %v5926
        %v5943 = vadd.s32 %v5938, %v5940
        %vm5944 = vc.u32 %v5938, %v5940
        %v5945 = vadd.s32 %v5941, 1
        %v5946 = vsel %vm5944, %v5945, %v5941
        %v5947 = vadd.s32 %v5942, %v5946
        %v5948 = vadd.s32 %v5947, 536870912
        %v5949 = vshrl.u32 %v5948, 30
        %v5950 = vshll.u32 %v5949, 30
        %v5951 = vsub.s32 %v5947, %v5950
        %vm5952 = vcmp.lt.s32.totalorder %v5951, 0
        %v5953 = vsub.s32 0, %v5951
        %v5954 = vsel %vm5952, %v5953, %v5951
        %v5955 = vclz %v5954
        %v5956 = vsub.s32 %v5955, 2
        %vm5957 = vcmp.gt.s32.totalorder 0, %v5956
        %v5958 = vsel %vm5957, 0, %v5956
        %v5959 = vsub.s32 32, %v5958
        %v5960 = vshll.u32 %v5951, %v5958
        %v5961 = vshrl.u32 %v5943, %v5959
        %v5962 = vor.u32 %v5960, %v5961
        %v5963 = vsub.s32 4294967266, %v5958
        %v5964 = vadd.s32 %v5963, 127
        %v5965 = vshll.u32 %v5964, 23
        %v5966 = vor.u32 4788187, %v5965
        %v5967 = vand.u32 2147483647, %v5966
        %v5969 = vcvt.s32.f32 %v5962
        %v5970 = vmul.f32 %v5969, %v5967
        %v5971 = vxor.u32 %v5970, 2147483648
        %v5972 = vsel %vm5889, %v5971, %v5970
        %v5973 = vsub.s32 4, %v5949
        %v5974 = vsel %vm5889, %v5973, %v5949
        %v5975 = vsel %vm5888, %v1672, %v5972
        %v5976 = vsel %vm5888, 0, %v5974
        %v5977 = vcosq.f32.pop %v5975
        %v5978 = vsinq.f32.pop %v5975
        %vm5979 = vweird.f32 %v1672
        %v5980 = vand.u32 %v5976, 3
        %vm5981 = vcmp.lt.s32.totalorder %v5980, 2
        %vm5982 = vcmp.eq.s32.totalorder %v5980, 0
        %v5983 = vxor.u32 %v5978, 2147483648
        %v5984 = vsel %vm5982, %v5977, %v5983
        %vm5985 = vcmp.eq.s32.totalorder %v5980, 2
        %v5986 = vxor.u32 %v5977, 2147483648
        %v5987 = vsel %vm5985, %v5986, %v5978
        %v5988 = vsel %vm5981, %v5984, %v5987
        %v5989 = vsel %vm5979, nan, %v5988
        %v5990 = vand.u32 2147483647, %v2386
        %vm5991 = vcmp.le.f32.partialorder %v5990, 0.7853982
        %vm5992 = vcmp.lt.s32.totalorder %v2386, 0
        %v5993 = vand.u32 %v2386, 2139095040
        %v5994 = vshrl.u32 %v5993, 23
        %v5995 = vsub.s32 %v5994, 127
        %v5996 = vand.u32 2147483647, %v2386
        %v5997 = vand.u32 %v5996, 8388607
        %v5998 = vor.u32 %v5997, 8388608
        %v5999 = vsub.s32 0, %v5998
        %v6000 = vadd.s32 %v5995, 1
        %vm6001 = vcmp.gt.s32.totalorder %v6000, 0
        %v6002 = vsel %vm6001, %v6000, 0
        %v6003 = vshrl.u32 %v6002, 5
        %v6004 = vand.u32 %v6002, 31
        %v6005 = vsub.s32 32, %v6004
        %v6006 = vshrl.u32 683565275, %v6005
        %v6007 = vshll.u32 683565275, %v6004
        %v6008 = vshrl.u32 2475754826, %v6005
        %v6009 = vor.u32 %v6007, %v6008
        %v6010 = vshll.u32 2475754826, %v6004
        %v6011 = vshrl.u32 2131351028, %v6005
        %v6012 = vor.u32 %v6010, %v6011
        %v6013 = vshll.u32 2131351028, %v6004
        %v6014 = vshrl.u32 2102212464, %v6005
        %v6015 = vor.u32 %v6013, %v6014
        %v6016 = vshll.u32 2102212464, %v6004
        %v6017 = vshrl.u32 920167782, %v6005
        %v6018 = vor.u32 %v6016, %v6017
        %v6019 = vshll.u32 920167782, %v6004
        %v6020 = vshrl.u32 1326507024, %v6005
        %v6021 = vor.u32 %v6019, %v6020
        %vm6022 = vcmp.lt.s32.totalorder %v6003, 1
        %vm6023 = vcmp.lt.s32.totalorder %v6003, 2
        %vm6024 = vcmp.lt.s32.totalorder %v6003, 3
        %vm6025 = vcmp.lt.s32.totalorder %v6003, 4
        %v6026 = vsel %vm6022, %v6006, %v6009
        %v6027 = vsel %vm6025, %v6015, 2102212464
        %v6028 = vsel %vm6024, %v6012, %v6027
        %v6029 = vsel %vm6023, %v6026, %v6028
        %v6030 = vsel %vm6022, %v6009, %v6012
        %v6031 = vsel %vm6025, %v6018, 920167782
        %v6032 = vsel %vm6024, %v6015, %v6031
        %v6033 = vsel %vm6023, %v6030, %v6032
        %v6034 = vsel %vm6022, %v6012, %v6015
        %v6035 = vsel %vm6025, %v6021, 1326507024
        %v6036 = vsel %vm6024, %v6018, %v6035
        %v6037 = vsel %vm6023, %v6034, %v6036
        %v6038 = vshll.u32 %v5998, 8
        %v6039 = vmul.u32.u64.compose %v6038, %v6037
        %v6040 = vextract.low.u32 %v6039
        %v6041 = vextract.high.u32 %v6039
        %v6042 = vmul.u32.u64.compose %v6038, %v6033
        %v6043 = vextract.low.u32 %v6042
        %v6044 = vextract.high.u32 %v6042
        %v6045 = vmul.u32 %v6038, %v6029
        %v6046 = vadd.s32 %v6041, %v6043
        %vm6047 = vc.u32 %v6041, %v6043
        %v6048 = vadd.s32 %v6044, 1
        %v6049 = vsel %vm6047, %v6048, %v6044
        %v6050 = vadd.s32 %v6045, %v6049
        %v6051 = vadd.s32 %v6050, 536870912
        %v6052 = vshrl.u32 %v6051, 30
        %v6053 = vshll.u32 %v6052, 30
        %v6054 = vsub.s32 %v6050, %v6053
        %vm6055 = vcmp.lt.s32.totalorder %v6054, 0
        %v6056 = vsub.s32 0, %v6054
        %v6057 = vsel %vm6055, %v6056, %v6054
        %v6058 = vclz %v6057
        %v6059 = vsub.s32 %v6058, 2
        %vm6060 = vcmp.gt.s32.totalorder 0, %v6059
        %v6061 = vsel %vm6060, 0, %v6059
        %v6062 = vsub.s32 32, %v6061
        %v6063 = vshll.u32 %v6054, %v6061
        %v6064 = vshrl.u32 %v6046, %v6062
        %v6065 = vor.u32 %v6063, %v6064
        %v6066 = vsub.s32 4294967266, %v6061
        %v6067 = vadd.s32 %v6066, 127
        %v6068 = vshll.u32 %v6067, 23
        %v6069 = vor.u32 4788187, %v6068
        %v6070 = vand.u32 2147483647, %v6069
        %v6072 = vcvt.s32.f32 %v6065
        %v6073 = vmul.f32 %v6072, %v6070
        %v6074 = vxor.u32 %v6073, 2147483648
        %v6075 = vsel %vm5992, %v6074, %v6073
        %v6076 = vsub.s32 4, %v6052
        %v6077 = vsel %vm5992, %v6076, %v6052
        %v6078 = vsel %vm5991, %v2386, %v6075
        %v6079 = vsel %vm5991, 0, %v6077
        %v6080 = vcosq.f32.pop %v6078
        %v6081 = vsinq.f32.pop %v6078
        %vm6082 = vweird.f32 %v2386
        %v6083 = vand.u32 %v6079, 3
        %vm6084 = vcmp.lt.s32.totalorder %v6083, 2
        %vm6085 = vcmp.eq.s32.totalorder %v6083, 0
        %v6086 = vxor.u32 %v6081, 2147483648
        %v6087 = vsel %vm6085, %v6080, %v6086
        %vm6088 = vcmp.eq.s32.totalorder %v6083, 2
        %v6089 = vxor.u32 %v6080, 2147483648
        %v6090 = vsel %vm6088, %v6089, %v6081
        %v6091 = vsel %vm6084, %v6087, %v6090
        %v6092 = vsel %vm6082, nan, %v6091
        %v6093 = vand.u32 2147483647, %v2388
        %vm6094 = vcmp.le.f32.partialorder %v6093, 0.7853982
        %vm6095 = vcmp.lt.s32.totalorder %v2388, 0
        %v6096 = vand.u32 %v2388, 2139095040
        %v6097 = vshrl.u32 %v6096, 23
        %v6098 = vsub.s32 %v6097, 127
        %v6099 = vand.u32 2147483647, %v2388
        %v6100 = vand.u32 %v6099, 8388607
        %v6101 = vor.u32 %v6100, 8388608
        %v6102 = vsub.s32 0, %v6101
        %v6103 = vadd.s32 %v6098, 1
        %vm6104 = vcmp.gt.s32.totalorder %v6103, 0
        %v6105 = vsel %vm6104, %v6103, 0
        %v6106 = vshrl.u32 %v6105, 5
        %v6107 = vand.u32 %v6105, 31
        %v6108 = vsub.s32 32, %v6107
        %v6109 = vshrl.u32 683565275, %v6108
        %v6110 = vshll.u32 683565275, %v6107
        %v6111 = vshrl.u32 2475754826, %v6108
        %v6112 = vor.u32 %v6110, %v6111
        %v6113 = vshll.u32 2475754826, %v6107
        %v6114 = vshrl.u32 2131351028, %v6108
        %v6115 = vor.u32 %v6113, %v6114
        %v6116 = vshll.u32 2131351028, %v6107
        %v6117 = vshrl.u32 2102212464, %v6108
        %v6118 = vor.u32 %v6116, %v6117
        %v6119 = vshll.u32 2102212464, %v6107
        %v6120 = vshrl.u32 920167782, %v6108
        %v6121 = vor.u32 %v6119, %v6120
        %v6122 = vshll.u32 920167782, %v6107
        %v6123 = vshrl.u32 1326507024, %v6108
        %v6124 = vor.u32 %v6122, %v6123
        %vm6125 = vcmp.lt.s32.totalorder %v6106, 1
        %vm6126 = vcmp.lt.s32.totalorder %v6106, 2
        %vm6127 = vcmp.lt.s32.totalorder %v6106, 3
        %vm6128 = vcmp.lt.s32.totalorder %v6106, 4
        %v6129 = vsel %vm6125, %v6109, %v6112
        %v6130 = vsel %vm6128, %v6118, 2102212464
        %v6131 = vsel %vm6127, %v6115, %v6130
        %v6132 = vsel %vm6126, %v6129, %v6131
        %v6133 = vsel %vm6125, %v6112, %v6115
        %v6134 = vsel %vm6128, %v6121, 920167782
        %v6135 = vsel %vm6127, %v6118, %v6134
        %v6136 = vsel %vm6126, %v6133, %v6135
        %v6137 = vsel %vm6125, %v6115, %v6118
        %v6138 = vsel %vm6128, %v6124, 1326507024
        %v6139 = vsel %vm6127, %v6121, %v6138
        %v6140 = vsel %vm6126, %v6137, %v6139
        %v6141 = vshll.u32 %v6101, 8
        %v6142 = vmul.u32.u64.compose %v6141, %v6140
        %v6143 = vextract.low.u32 %v6142
        %v6144 = vextract.high.u32 %v6142
        %v6145 = vmul.u32.u64.compose %v6141, %v6136
        %v6146 = vextract.low.u32 %v6145
        %v6147 = vextract.high.u32 %v6145
        %v6148 = vmul.u32 %v6141, %v6132
        %v6149 = vadd.s32 %v6144, %v6146
        %vm6150 = vc.u32 %v6144, %v6146
        %v6151 = vadd.s32 %v6147, 1
        %v6152 = vsel %vm6150, %v6151, %v6147
        %v6153 = vadd.s32 %v6148, %v6152
        %v6154 = vadd.s32 %v6153, 536870912
        %v6155 = vshrl.u32 %v6154, 30
        %v6156 = vshll.u32 %v6155, 30
        %v6157 = vsub.s32 %v6153, %v6156
        %vm6158 = vcmp.lt.s32.totalorder %v6157, 0
        %v6159 = vsub.s32 0, %v6157
        %v6160 = vsel %vm6158, %v6159, %v6157
        %v6161 = vclz %v6160
        %v6162 = vsub.s32 %v6161, 2
        %vm6163 = vcmp.gt.s32.totalorder 0, %v6162
        %v6164 = vsel %vm6163, 0, %v6162
        %v6165 = vsub.s32 32, %v6164
        %v6166 = vshll.u32 %v6157, %v6164
        %v6167 = vshrl.u32 %v6149, %v6165
        %v6168 = vor.u32 %v6166, %v6167
        %v6169 = vsub.s32 4294967266, %v6164
        %v6170 = vadd.s32 %v6169, 127
        %v6171 = vshll.u32 %v6170, 23
        %v6172 = vor.u32 4788187, %v6171
        %v6173 = vand.u32 2147483647, %v6172
        %v6175 = vcvt.s32.f32 %v6168
        %v6176 = vmul.f32 %v6175, %v6173
        %v6177 = vxor.u32 %v6176, 2147483648
        %v6178 = vsel %vm6095, %v6177, %v6176
        %v6179 = vsub.s32 4, %v6155
        %v6180 = vsel %vm6095, %v6179, %v6155
        %v6181 = vsel %vm6094, %v2388, %v6178
        %v6182 = vsel %vm6094, 0, %v6180
        %v6183 = vcosq.f32.pop %v6181
        %v6184 = vsinq.f32.pop %v6181
        %vm6185 = vweird.f32 %v2388
        %v6186 = vand.u32 %v6182, 3
        %vm6187 = vcmp.lt.s32.totalorder %v6186, 2
        %vm6188 = vcmp.eq.s32.totalorder %v6186, 0
        %v6189 = vxor.u32 %v6184, 2147483648
        %v6190 = vsel %vm6188, %v6183, %v6189
        %vm6191 = vcmp.eq.s32.totalorder %v6186, 2
        %v6192 = vxor.u32 %v6183, 2147483648
        %v6193 = vsel %vm6191, %v6192, %v6184
        %v6194 = vsel %vm6187, %v6190, %v6193
        %v6195 = vsel %vm6185, nan, %v6194
        %v6196 = vand.u32 2147483647, %v3102
        %vm6197 = vcmp.le.f32.partialorder %v6196, 0.7853982
        %vm6198 = vcmp.lt.s32.totalorder %v3102, 0
        %v6199 = vand.u32 %v3102, 2139095040
        %v6200 = vshrl.u32 %v6199, 23
        %v6201 = vsub.s32 %v6200, 127
        %v6202 = vand.u32 2147483647, %v3102
        %v6203 = vand.u32 %v6202, 8388607
        %v6204 = vor.u32 %v6203, 8388608
        %v6205 = vsub.s32 0, %v6204
        %v6206 = vadd.s32 %v6201, 1
        %vm6207 = vcmp.gt.s32.totalorder %v6206, 0
        %v6208 = vsel %vm6207, %v6206, 0
        %v6209 = vshrl.u32 %v6208, 5
        %v6210 = vand.u32 %v6208, 31
        %v6211 = vsub.s32 32, %v6210
        %v6212 = vshrl.u32 683565275, %v6211
        %v6213 = vshll.u32 683565275, %v6210
        %v6214 = vshrl.u32 2475754826, %v6211
        %v6215 = vor.u32 %v6213, %v6214
        %v6216 = vshll.u32 2475754826, %v6210
        %v6217 = vshrl.u32 2131351028, %v6211
        %v6218 = vor.u32 %v6216, %v6217
        %v6219 = vshll.u32 2131351028, %v6210
        %v6220 = vshrl.u32 2102212464, %v6211
        %v6221 = vor.u32 %v6219, %v6220
        %v6222 = vshll.u32 2102212464, %v6210
        %v6223 = vshrl.u32 920167782, %v6211
        %v6224 = vor.u32 %v6222, %v6223
        %v6225 = vshll.u32 920167782, %v6210
        %v6226 = vshrl.u32 1326507024, %v6211
        %v6227 = vor.u32 %v6225, %v6226
        %vm6228 = vcmp.lt.s32.totalorder %v6209, 1
        %vm6229 = vcmp.lt.s32.totalorder %v6209, 2
        %vm6230 = vcmp.lt.s32.totalorder %v6209, 3
        %vm6231 = vcmp.lt.s32.totalorder %v6209, 4
        %v6232 = vsel %vm6228, %v6212, %v6215
        %v6233 = vsel %vm6231, %v6221, 2102212464
        %v6234 = vsel %vm6230, %v6218, %v6233
        %v6235 = vsel %vm6229, %v6232, %v6234
        %v6236 = vsel %vm6228, %v6215, %v6218
        %v6237 = vsel %vm6231, %v6224, 920167782
        %v6238 = vsel %vm6230, %v6221, %v6237
        %v6239 = vsel %vm6229, %v6236, %v6238
        %v6240 = vsel %vm6228, %v6218, %v6221
        %v6241 = vsel %vm6231, %v6227, 1326507024
        %v6242 = vsel %vm6230, %v6224, %v6241
        %v6243 = vsel %vm6229, %v6240, %v6242
        %v6244 = vshll.u32 %v6204, 8
        %v6245 = vmul.u32.u64.compose %v6244, %v6243
        %v6246 = vextract.low.u32 %v6245
        %v6247 = vextract.high.u32 %v6245
        %v6248 = vmul.u32.u64.compose %v6244, %v6239
        %v6249 = vextract.low.u32 %v6248
        %v6250 = vextract.high.u32 %v6248
        %v6251 = vmul.u32 %v6244, %v6235
        %v6252 = vadd.s32 %v6247, %v6249
        %vm6253 = vc.u32 %v6247, %v6249
        %v6254 = vadd.s32 %v6250, 1
        %v6255 = vsel %vm6253, %v6254, %v6250
        %v6256 = vadd.s32 %v6251, %v6255
        %v6257 = vadd.s32 %v6256, 536870912
        %v6258 = vshrl.u32 %v6257, 30
        %v6259 = vshll.u32 %v6258, 30
        %v6260 = vsub.s32 %v6256, %v6259
        %vm6261 = vcmp.lt.s32.totalorder %v6260, 0
        %v6262 = vsub.s32 0, %v6260
        %v6263 = vsel %vm6261, %v6262, %v6260
        %v6264 = vclz %v6263
        %v6265 = vsub.s32 %v6264, 2
        %vm6266 = vcmp.gt.s32.totalorder 0, %v6265
        %v6267 = vsel %vm6266, 0, %v6265
        %v6268 = vsub.s32 32, %v6267
        %v6269 = vshll.u32 %v6260, %v6267
        %v6270 = vshrl.u32 %v6252, %v6268
        %v6271 = vor.u32 %v6269, %v6270
        %v6272 = vsub.s32 4294967266, %v6267
        %v6273 = vadd.s32 %v6272, 127
        %v6274 = vshll.u32 %v6273, 23
        %v6275 = vor.u32 4788187, %v6274
        %v6276 = vand.u32 2147483647, %v6275
        %v6278 = vcvt.s32.f32 %v6271
        %v6279 = vmul.f32 %v6278, %v6276
        %v6280 = vxor.u32 %v6279, 2147483648
        %v6281 = vsel %vm6198, %v6280, %v6279
        %v6282 = vsub.s32 4, %v6258
        %v6283 = vsel %vm6198, %v6282, %v6258
        %v6284 = vsel %vm6197, %v3102, %v6281
        %v6285 = vsel %vm6197, 0, %v6283
        %v6286 = vcosq.f32.pop %v6284
        %v6287 = vsinq.f32.pop %v6284
        %vm6288 = vweird.f32 %v3102
        %v6289 = vand.u32 %v6285, 3
        %vm6290 = vcmp.lt.s32.totalorder %v6289, 2
        %vm6291 = vcmp.eq.s32.totalorder %v6289, 0
        %v6292 = vxor.u32 %v6287, 2147483648
        %v6293 = vsel %vm6291, %v6286, %v6292
        %vm6294 = vcmp.eq.s32.totalorder %v6289, 2
        %v6295 = vxor.u32 %v6286, 2147483648
        %v6296 = vsel %vm6294, %v6295, %v6287
        %v6297 = vsel %vm6290, %v6293, %v6296
        %v6298 = vsel %vm6288, nan, %v6297
        %v6299 = vand.u32 2147483647, %v3104
        %vm6300 = vcmp.le.f32.partialorder %v6299, 0.7853982
        %vm6301 = vcmp.lt.s32.totalorder %v3104, 0
        %v6302 = vand.u32 %v3104, 2139095040
        %v6303 = vshrl.u32 %v6302, 23
        %v6304 = vsub.s32 %v6303, 127
        %v6305 = vand.u32 2147483647, %v3104
        %v6306 = vand.u32 %v6305, 8388607
        %v6307 = vor.u32 %v6306, 8388608
        %v6308 = vsub.s32 0, %v6307
        %v6309 = vadd.s32 %v6304, 1
        %vm6310 = vcmp.gt.s32.totalorder %v6309, 0
        %v6311 = vsel %vm6310, %v6309, 0
        %v6312 = vshrl.u32 %v6311, 5
        %v6313 = vand.u32 %v6311, 31
        %v6314 = vsub.s32 32, %v6313
        %v6315 = vshrl.u32 683565275, %v6314
        %v6316 = vshll.u32 683565275, %v6313
        %v6317 = vshrl.u32 2475754826, %v6314
        %v6318 = vor.u32 %v6316, %v6317
        %v6319 = vshll.u32 2475754826, %v6313
        %v6320 = vshrl.u32 2131351028, %v6314
        %v6321 = vor.u32 %v6319, %v6320
        %v6322 = vshll.u32 2131351028, %v6313
        %v6323 = vshrl.u32 2102212464, %v6314
        %v6324 = vor.u32 %v6322, %v6323
        %v6325 = vshll.u32 2102212464, %v6313
        %v6326 = vshrl.u32 920167782, %v6314
        %v6327 = vor.u32 %v6325, %v6326
        %v6328 = vshll.u32 920167782, %v6313
        %v6329 = vshrl.u32 1326507024, %v6314
        %v6330 = vor.u32 %v6328, %v6329
        %vm6331 = vcmp.lt.s32.totalorder %v6312, 1
        %vm6332 = vcmp.lt.s32.totalorder %v6312, 2
        %vm6333 = vcmp.lt.s32.totalorder %v6312, 3
        %vm6334 = vcmp.lt.s32.totalorder %v6312, 4
        %v6335 = vsel %vm6331, %v6315, %v6318
        %v6336 = vsel %vm6334, %v6324, 2102212464
        %v6337 = vsel %vm6333, %v6321, %v6336
        %v6338 = vsel %vm6332, %v6335, %v6337
        %v6339 = vsel %vm6331, %v6318, %v6321
        %v6340 = vsel %vm6334, %v6327, 920167782
        %v6341 = vsel %vm6333, %v6324, %v6340
        %v6342 = vsel %vm6332, %v6339, %v6341
        %v6343 = vsel %vm6331, %v6321, %v6324
        %v6344 = vsel %vm6334, %v6330, 1326507024
        %v6345 = vsel %vm6333, %v6327, %v6344
        %v6346 = vsel %vm6332, %v6343, %v6345
        %v6347 = vshll.u32 %v6307, 8
        %v6348 = vmul.u32.u64.compose %v6347, %v6346
        %v6349 = vextract.low.u32 %v6348
        %v6350 = vextract.high.u32 %v6348
        %v6351 = vmul.u32.u64.compose %v6347, %v6342
        %v6352 = vextract.low.u32 %v6351
        %v6353 = vextract.high.u32 %v6351
        %v6354 = vmul.u32 %v6347, %v6338
        %v6355 = vadd.s32 %v6350, %v6352
        %vm6356 = vc.u32 %v6350, %v6352
        %v6357 = vadd.s32 %v6353, 1
        %v6358 = vsel %vm6356, %v6357, %v6353
        %v6359 = vadd.s32 %v6354, %v6358
        %v6360 = vadd.s32 %v6359, 536870912
        %v6361 = vshrl.u32 %v6360, 30
        %v6362 = vshll.u32 %v6361, 30
        %v6363 = vsub.s32 %v6359, %v6362
        %vm6364 = vcmp.lt.s32.totalorder %v6363, 0
        %v6365 = vsub.s32 0, %v6363
        %v6366 = vsel %vm6364, %v6365, %v6363
        %v6367 = vclz %v6366
        %v6368 = vsub.s32 %v6367, 2
        %vm6369 = vcmp.gt.s32.totalorder 0, %v6368
        %v6370 = vsel %vm6369, 0, %v6368
        %v6371 = vsub.s32 32, %v6370
        %v6372 = vshll.u32 %v6363, %v6370
        %v6373 = vshrl.u32 %v6355, %v6371
        %v6374 = vor.u32 %v6372, %v6373
        %v6375 = vsub.s32 4294967266, %v6370
        %v6376 = vadd.s32 %v6375, 127
        %v6377 = vshll.u32 %v6376, 23
        %v6378 = vor.u32 4788187, %v6377
        %v6379 = vand.u32 2147483647, %v6378
        %v6381 = vcvt.s32.f32 %v6374
        %v6382 = vmul.f32 %v6381, %v6379
        %v6383 = vxor.u32 %v6382, 2147483648
        %v6384 = vsel %vm6301, %v6383, %v6382
        %v6385 = vsub.s32 4, %v6361
        %v6386 = vsel %vm6301, %v6385, %v6361
        %v6387 = vsel %vm6300, %v3104, %v6384
        %v6388 = vsel %vm6300, 0, %v6386
        %v6389 = vcosq.f32.pop %v6387
        %v6390 = vsinq.f32.pop %v6387
        %vm6391 = vweird.f32 %v3104
        %v6392 = vand.u32 %v6388, 3
        %vm6393 = vcmp.lt.s32.totalorder %v6392, 2
        %vm6394 = vcmp.eq.s32.totalorder %v6392, 0
        %v6395 = vxor.u32 %v6390, 2147483648
        %v6396 = vsel %vm6394, %v6389, %v6395
        %vm6397 = vcmp.eq.s32.totalorder %v6392, 2
        %v6398 = vxor.u32 %v6389, 2147483648
        %v6399 = vsel %vm6397, %v6398, %v6390
        %v6400 = vsel %vm6393, %v6396, %v6399
        %v6401 = vsel %vm6391, nan, %v6400
        %6402 = vst [vmem:[%s152] sm:$0xff] %v3208
        %6403 = vst [vmem:[%s152 + $0x8] sm:$0xff] %v3311
        %6404 = vst [vmem:[%s152 + $0x10] sm:$0xff] %v3414
        %6405 = vst [vmem:[%s152 + $0x18] sm:$0xff] %v3517
        %6406 = vst [vmem:[%s152 + $0x20] sm:$0xff] %v3620
        %6407 = vst [vmem:[%s152 + $0x28] sm:$0xff] %v3723
        %6408 = vst [vmem:[%s152 + $0x30] sm:$0xff] %v3826
        %6409 = vst [vmem:[%s152 + $0x38] sm:$0xff] %v3929
        %6410 = vst [vmem:[%s152 + $0x40] sm:$0xff] %v4032
        %6411 = vst [vmem:[%s152 + $0x48] sm:$0xff] %v4135
        %6412 = vst [vmem:[%s152 + $0x50] sm:$0xff] %v4238
        %6413 = vst [vmem:[%s152 + $0x58] sm:$0xff] %v4341
        %6414 = vst [vmem:[%s152 + $0x60] sm:$0xff] %v4444
        %6415 = vst [vmem:[%s152 + $0x68] sm:$0xff] %v4547
        %6416 = vst [vmem:[%s152 + $0x70] sm:$0xff] %v4650
        %6417 = vst [vmem:[%s152 + $0x78] sm:$0xff] %v4753
        %6418 = vst [vmem:[%s152 + $0x80] sm:$0xff] %v4856
        %6419 = vst [vmem:[%s152 + $0x88] sm:$0xff] %v4959
        %6420 = vst [vmem:[%s152 + $0x90] sm:$0xff] %v5062
        %6421 = vst [vmem:[%s152 + $0x98] sm:$0xff] %v5165
        %6422 = vst [vmem:[%s152 + $0xa0] sm:$0xff] %v5268
        %6423 = vst [vmem:[%s152 + $0xa8] sm:$0xff] %v5371
        %6424 = vst [vmem:[%s152 + $0xb0] sm:$0xff] %v5474
        %6425 = vst [vmem:[%s152 + $0xb8] sm:$0xff] %v5577
        %6426 = vst [vmem:[%s152 + $0xc0] sm:$0xff] %v5680
        %6427 = vst [vmem:[%s152 + $0xc8] sm:$0xff] %v5783
        %6428 = vst [vmem:[%s152 + $0xd0] sm:$0xff] %v5886
        %6429 = vst [vmem:[%s152 + $0xd8] sm:$0xff] %v5989
        %6430 = vst [vmem:[%s152 + $0xe0] sm:$0xff] %v6092
        %6431 = vst [vmem:[%s152 + $0xe8] sm:$0xff] %v6195
        %6432 = vst [vmem:[%s152 + $0xf0] sm:$0xff] %v6298
        %6433 = vst [vmem:[%s152 + $0xf8] sm:$0xff] %v6401
        %s6434 = sand.u32 %s72, 1
        %s6435 = scalar_lea.sflag [#allocation4], %s6434
        %s6436 = sand.u32 %s72, 1
        %s6437 = smul.addr %s6436, 256
        %s6438 = scalar_lea.vmem [#allocation5], %s6437
        // Predicated region
        $region33: #{tpu_custom_call.1} parent=27 // pred_check
          %p6439 = pneg %p82
        $region34: #{tpu_custom_call.1} parent=27 // pred_check_branch
          %6441 = sbr.rel (%p6439) target = $region36
        $region35: #{tpu_custom_call.1} parent=27 // pred_region
          %s6442 = smul.u32 4, %s17
          %s6444 = ssub.s32 4096, 4096
          %6445 = vsyncadd %s6435, %s6444
          %s6446 = smul.addr %s6442, 8
          %s6447 = smul.addr %s6446, 128
          %s6448 = scalar_lea.hbm %s2, %s6447
          %s6449 = sshll.u32 %s6438, 4
          %s6450 = int_to_ptr.vmem [resolvable:$true] %s6449
          %6455 = dma.vmem_to_hbm [thread:$0]  %s6450, 4096, %s6448, %s6435, 1024, 1024, 64
        $region36: #{tpu_custom_call.1} parent=27 // pred_fallthru
          _
      $region28: #{tpu_custom_call.1} parent=5 // pred_fallthru
        _
      %p6456 = scmp.le.s32.totalorder 2, %s12
      // Predicated region
      $region37: #{tpu_custom_call.1} parent=5 // pred_check
        %p6457 = pneg %p6456
      $region38: #{tpu_custom_call.1} parent=5 // pred_check_branch
        %6459 = sbr.rel (%p6457) target = $region40
      $region39: #{tpu_custom_call.1} parent=5 // pred_region
        %s6460 = ssub.s32 %s12, 2
        // Predicated region
        $region41: #{tpu_custom_call.1} parent=39 // pred_check
          %p6461 = pneg %p88
        $region42: #{tpu_custom_call.1} parent=39 // pred_check_branch
          %6463 = sbr.rel (%p6461) target = $region44
        $region43: #{tpu_custom_call.1} parent=39 // pred_region
          %s6464 = sand.u32 %s73, 1
          %s6465 = scalar_lea.sflag [#allocation4], %s6464
          %s6466 = sand.u32 %s73, 1
          %s6467 = smul.addr %s6466, 256
          %s6468 = scalar_lea.vmem [#allocation5], %s6467
          %6469 = dma.done %s6465, 4096
        $region44: #{tpu_custom_call.1} parent=39 // pred_fallthru
          _
      $region40: #{tpu_custom_call.1} parent=5 // pred_fallthru
        _
    $region6: #{tpu_custom_call.1} parent=1 // loop_footer
      %s16 = sadd.s32 1, %s12
    $region7: #{tpu_custom_call.1} parent=1 // loop_footer_branch
      %11 = sbr.rel target = $region3
    $region8: #{tpu_custom_call.1} parent=1 // loop_exit
      _
    %6470 = vsyncpa [#allocation3], 1
    %s6471 = scalar_lea.sflag [#allocation3], 1
    %6472 = vsyncpa %s6471, 1
    %6473 = vsyncpa [#allocation4], 1
    %s6474 = scalar_lea.sflag [#allocation4], 1
    %6475 = vsyncpa %s6474, 1

</llo_original>
